<compile_context>
chip_gen: v5e
topology: v5e:2x2
jax: 0.10.0
libtpu: 0.0.40
codegen_flags: <defaults>
</compile_context>

<pallas_src>
import math

import jax
import jax.numpy as jnp
from jax.experimental import pallas as pl
from jax.experimental.pallas import tpu as pltpu

_LANE = 128
_SUB = 8
_WORKSET_BYTES = 28 * 1024 * 1024   # double-buffered I/O + in-kernel temporaries
_LIVE_FACTOR = 5                    # ~2x (double buffer) + ~3x (live temporaries)

_PI = math.pi
_TAN_PI_8 = 0.4142135623730951
_PIO2_HI = 1.57079601287841796875
_PIO2_MID = 3.139164786504813e-07
_PIO2_LO = 5.390302529957765e-15
_TWO_OVER_PI = 0.6366197723675814


def _round_up(x, m):
    return ((x + m - 1) // m) * m


# ---------------------------------------------------------------------------
# In-kernel math helpers (only ops with guaranteed Mosaic lowerings).
# ---------------------------------------------------------------------------
def _leaky(x):
    return jnp.where(x >= 0.0, x, 0.1 * x)            # LeakyReLU(0.1)


def _signbit(x):
    return pltpu.bitcast(x, jnp.int32) < 0             # catches -0.0 as well


def _atan_01(t):
    """arctan(t) for t in [0, 1] (Cephes-style secondary reduction, ~1 ulp)."""
    hi = t > _TAN_PI_8
    tr = jnp.where(hi, (t - 1.0) / (t + 1.0), t)
    z = tr * tr
    p = (((8.05374449538e-2 * z - 1.38776856032e-1) * z
          + 1.99777106478e-1) * z - 3.33329491539e-1) * z * tr + tr
    return jnp.where(hi, 0.25 * _PI + p, p)


def _atan2(y, x):
    """Branch-free atan2 with torch.angle sign conventions."""
    ax = jnp.abs(x)
    ay = jnp.abs(y)
    hi = jnp.maximum(ax, ay)
    lo = jnp.minimum(ax, ay)
    r = _atan_01(lo / jnp.where(hi == 0.0, 1.0, hi))
    r = jnp.where(ay > ax, 0.5 * _PI - r, r)
    r = jnp.where(_signbit(x), _PI - r, r)
    return jnp.where(_signbit(y), -r, r)


def _sincos(x):
    """(sin x, cos x) sharing a single Cody-Waite range reduction."""
    t = x * _TWO_OVER_PI
    q = jnp.where(t >= 0.0, t + 0.5, t - 0.5).astype(jnp.int32)
    qf = q.astype(jnp.float32)
    r = x - qf * _PIO2_HI
    r = r - qf * _PIO2_MID
    r = r - qf * _PIO2_LO
    z = r * r
    sin_r = ((-1.9515295891e-4 * z + 8.3321608736e-3) * z
             - 1.6666654611e-1) * z * r + r
    cos_r = ((2.443315711809948e-5 * z - 1.388731625493765e-3) * z
             + 4.166664568298827e-2) * z * z - 0.5 * z + 1.0
    swap = (q & 1) == 1
    s = jnp.where(swap, cos_r, sin_r)
    c = jnp.where(swap, sin_r, cos_r)
    s = jnp.where((q & 2) == 2, -s, s)
    c = jnp.where(((q + 1) & 2) == 2, -c, c)
    return s, c


def _mix(w_ref, xs, cout, b_ref=None):
    """out[co] = sum_ci w[co*cin + ci] * xs[ci] (+ b[co]).

    w_ref / b_ref are flat f32 SMEM refs: every MAC is a scalar-splat
    multiply-add over a full (TS, 128) slab on the VPU."""
    cin = len(xs)
    out = []
    for co in range(cout):
        acc = xs[0] * w_ref[co * cin]
        for ci in range(1, cin):
            acc = acc + xs[ci] * w_ref[co * cin + ci]
        if b_ref is not None:
            acc = acc + b_ref[co]
        out.append(acc)
    return out


# ---------------------------------------------------------------------------
# Kernels
# ---------------------------------------------------------------------------
def _make_fuse_kernel(C):
    def kernel(ir_ref, ii_ref, vr_ref, vi_ref,
               w1_ref, dc1_ref, w2_ref, dc2_ref,
               wa1_ref, ba1_ref, wa2_ref, ba2_ref,
               wp1_ref, bp1_ref, wp2_ref, bp2_ref,
               real_ref, imag_ref):
        ir = [ir_ref[0, c] for c in range(C)]
        ii = [ii_ref[0, c] for c in range(C)]
        vr = [vr_ref[0, c] for c in range(C)]
        vi = [vi_ref[0, c] for c in range(C)]

        # pre1 / pre2 1x1 convs applied in the frequency domain.
        pir = _mix(w1_ref, ir, C)
        pii = _mix(w1_ref, ii, C)
        pvr = _mix(w2_ref, vr, C)
        pvi = _mix(w2_ref, vi, C)

        # (bias + 1e-8) * H*W lands on the real part of the DC bin only,
        # i.e. row 0 / lane 0 of pixel-tile 0.
        ts = pir[0].shape[0]
        row = jax.lax.broadcasted_iota(jnp.int32, (ts, _LANE), 0)
        lane = jax.lax.broadcasted_iota(jnp.int32, (ts, _LANE), 1)
        dc_pos = jnp.where(jnp.logical_and(row == 0, lane == 0), 1.0, 0.0)
        dc_gate = jnp.where(pl.program_id(1) == 0, 1.0, 0.0)
        dc_mask = dc_pos * dc_gate
        pir = [pir[c] + dc_mask * dc1_ref[c] for c in range(C)]
        pvr = [pvr[c] + dc_mask * dc2_ref[c] for c in range(C)]

        # amplitude / phase (torch.abs / torch.angle), concat order [inf, vis].
        amp = ([jnp.sqrt(pir[c] * pir[c] + pii[c] * pii[c]) for c in range(C)]
               + [jnp.sqrt(pvr[c] * pvr[c] + pvi[c] * pvi[c]) for c in range(C)])
        pha = ([_atan2(pii[c], pir[c]) for c in range(C)]
               + [_atan2(pvi[c], pvr[c]) for c in range(C)])

        # amp_fuse / pha_fuse MLPs (1x1 conv -> LeakyReLU(0.1) -> 1x1 conv).
        h = [_leaky(x) for x in _mix(wa1_ref, amp, C, ba1_ref)]
        amp_f = _mix(wa2_ref, h, C, ba2_ref)
        h = [_leaky(x) for x in _mix(wp1_ref, pha, C, bp1_ref)]
        pha_f = _mix(wp2_ref, h, C, bp2_ref)

        for c in range(C):
            s, co = _sincos(pha_f[c])
            # torch: real = amp*cos + 1e-8, imag = amp*sin + 1e-8, and the
            # later `complex(real, imag) + 1e-8` adds to the real part only.
            real_ref[0, c] = amp_f[c] * co + 2e-8
            imag_ref[0, c] = amp_f[c] * s + 1e-8

    return kernel


def _make_post_kernel(C):
    def kernel(x_ref, w_ref, b_ref, o_ref):
        xs = [jnp.abs(x_ref[0, c]) for c in range(C)]   # |irfft2| fused in
        out = _mix(w_ref, xs, C, b_ref)
        for c in range(C):
            o_ref[0, c] = out[c]

    return kernel


# ---------------------------------------------------------------------------
# Tiling plan + generic pixel-tiled pallas_call wrapper
# ---------------------------------------------------------------------------
def _plan_tiles(n_batch, c, pixels, n_io_slabs):
    """Returns (padded_rows, row_tile): lane axis always dense (128), row tile
    a multiple of 8 sized against the VMEM working-set budget, and >= 2 pixel
    tiles when the batch axis alone cannot feed both v7x TensorCores."""
    rows = _round_up(_round_up(pixels, _LANE) // _LANE, _SUB)
    row_bytes = max(c, 1) * _LANE * 4
    ts = _WORKSET_BYTES // (_LIVE_FACTOR * n_io_slabs * row_bytes)
    ts = max(_SUB, (ts // _SUB) * _SUB)
    if n_batch < 2:                                   # megacore (v7x) split
        ts = min(ts, _round_up((rows + 1) // 2, _SUB))
    ts = min(ts, rows)
    rows = _round_up(rows, ts)                        # grid divides exactly
    return rows, ts


def _as_rows(x, rows):
    n, c, p = x.shape
    pad = rows * _LANE - p
    if pad:
        x = jnp.pad(x, ((0, 0), (0, 0), (0, pad)))
    return x.reshape(n, c, rows, _LANE)


def _pixel_call(kernel, data, scalars, num_out, out_c, row_tile):
    """data: (N, C, rows, 128) slabs tiled over (batch, pixel-rows);
    scalars: small flat f32 arrays resident in SMEM."""
    n, _, rows, _ = data[0].shape
    grid = (n, rows // row_tile)

    in_specs = [pl.BlockSpec((1, x.shape[1], row_tile, _LANE),
                             lambda b, p: (b, 0, p, 0)) for x in data]
    in_specs += [pl.BlockSpec(memory_space=pltpu.MemorySpace.SMEM)
                 for _ in scalars]
    out_specs = tuple(pl.BlockSpec((1, out_c, row_tile, _LANE),
                                   lambda b, p: (b, 0, p, 0))
                      for _ in range(num_out))
    out_shape = tuple(jax.ShapeDtypeStruct((n, out_c, rows, _LANE), jnp.float32)
                      for _ in range(num_out))

    res = pl.pallas_call(
        kernel,
        grid=grid,
        in_specs=in_specs,
        out_specs=out_specs,
        out_shape=out_shape,
        compiler_params=pltpu.CompilerParams(
            dimension_semantics=("parallel", "parallel"),
            vmem_limit_bytes=40 * 1024 * 1024,
        ),
    )(*data, *scalars)
    return res if isinstance(res, (list, tuple)) else (res,)


# ---------------------------------------------------------------------------
# Full FDB forward
# ---------------------------------------------------------------------------
def fdb_forward(vis, inf, params):
    N, C, H, W = inf.shape
    Wf = W // 2 + 1
    HWf = H * Wf
    HW = H * W

    # TODO(synk): rfft2 / irfft2 have no Pallas TPU primitive; plain JAX here.
    inf_f = jnp.fft.rfft2(inf)
    vis_f = jnp.fft.rfft2(vis)

    rows_f, ts_f = _plan_tiles(N, C, HWf, n_io_slabs=6)

    def split(z):
        return (_as_rows(jnp.real(z).reshape(N, C, HWf), rows_f),
                _as_rows(jnp.imag(z).reshape(N, C, HWf), rows_f))

    ir, ii = split(inf_f)
    vr, vi = split(vis_f)

    scale = float(H * W)
    scalars = [
        params["pre1_w"][:, :, 0, 0].reshape(-1),
        (params["pre1_b"] + 1e-8) * scale,      # real DC-bin correction
        params["pre2_w"][:, :, 0, 0].reshape(-1),
        (params["pre2_b"] + 1e-8) * scale,
        params["amp_w1"][:, :, 0, 0].reshape(-1),
        params["amp_b1"],
        params["amp_w2"][:, :, 0, 0].reshape(-1),
        params["amp_b2"],
        params["pha_w1"][:, :, 0, 0].reshape(-1),
        params["pha_b1"],
        params["pha_w2"][:, :, 0, 0].reshape(-1),
        params["pha_b2"],
    ]
    real, imag = _pixel_call(_make_fuse_kernel(C), [ir, ii, vr, vi],
                             scalars, 2, C, ts_f)
    real = real.reshape(N, C, -1)[:, :, :HWf].reshape(N, C, H, Wf)
    imag = imag.reshape(N, C, -1)[:, :, :HWf].reshape(N, C, H, Wf)

    spat = jnp.fft.irfft2(jax.lax.complex(real, imag), s=(H, W))

    rows_s, ts_s = _plan_tiles(N, C, HW, n_io_slabs=2)
    x = _as_rows(spat.reshape(N, C, HW), rows_s)
    (out,) = _pixel_call(_make_post_kernel(C), [x],
                         [params["post_w"][:, :, 0, 0].reshape(-1),
                          params["post_b"]], 1, C, ts_s)
    return out.reshape(N, C, -1)[:, :, :HW].reshape(N, C, H, W)


# ---------------------------------------------------------------------------
# Deterministic parameter init (matches the nn.Conv2d shapes from __init__)
# ---------------------------------------------------------------------------
def init_params(key, C):
    keys = iter(jax.random.split(key, 16))

    def conv(cout, cin):
        kw = next(keys)
        kb = next(keys)
        scale = 1.0 / math.sqrt(cin)
        w = jax.random.uniform(kw, (cout, cin, 1, 1), jnp.float32, -scale, scale)
        b = jax.random.uniform(kb, (cout,), jnp.float32, -scale, scale)
        return w, b

    p = {}
    p["pre1_w"], p["pre1_b"] = conv(C, C)
    p["pre2_w"], p["pre2_b"] = conv(C, C)
    p["amp_w1"], p["amp_b1"] = conv(C, 2 * C)
    p["amp_w2"], p["amp_b2"] = conv(C, C)
    p["pha_w1"], p["pha_b1"] = conv(C, 2 * C)
    p["pha_w2"], p["pha_b2"] = conv(C, C)
    # NOTE: `combined_amp` is defined in __init__ but never used in forward -> omitted.
    p["post_w"], p["post_b"] = conv(C, C)
    return p


if __name__ == "__main__":
    N, C, H, W = 2, 4, 16, 16
    key = jax.random.PRNGKey(0)
    kp, kv, ki = jax.random.split(key, 3)
    params = init_params(kp, C)
    vis = jax.random.normal(kv, (N, C, H, W), jnp.float32)
    inf = jax.random.normal(ki, (N, C, H, W), jnp.float32)

    out = jax.jit(fdb_forward)(vis, inf, params)
    out = jax.block_until_ready(out)
    assert out.shape == (N, C, H, W), out.shape
    assert out.dtype == jnp.float32
    print("KERNEL_OK")
</pallas_src>

<mosaic_0001>
module attributes {stable_mosaic.version = 11 : i64} {
  func.func @kernel(%arg0: i32, %arg1: i32, %arg2: memref<1x4x8x128xf32, #tpu.memory_space<vmem>>, %arg3: memref<1x4x8x128xf32, #tpu.memory_space<vmem>>, %arg4: memref<1x4x8x128xf32, #tpu.memory_space<vmem>>, %arg5: memref<1x4x8x128xf32, #tpu.memory_space<vmem>>, %arg6: memref<16xf32, #tpu.memory_space<smem>>, %arg7: memref<4xf32, #tpu.memory_space<smem>>, %arg8: memref<16xf32, #tpu.memory_space<smem>>, %arg9: memref<4xf32, #tpu.memory_space<smem>>, %arg10: memref<32xf32, #tpu.memory_space<smem>>, %arg11: memref<4xf32, #tpu.memory_space<smem>>, %arg12: memref<16xf32, #tpu.memory_space<smem>>, %arg13: memref<4xf32, #tpu.memory_space<smem>>, %arg14: memref<32xf32, #tpu.memory_space<smem>>, %arg15: memref<4xf32, #tpu.memory_space<smem>>, %arg16: memref<16xf32, #tpu.memory_space<smem>>, %arg17: memref<4xf32, #tpu.memory_space<smem>>, %arg18: memref<1x4x8x128xf32, #tpu.memory_space<vmem>>, %arg19: memref<1x4x8x128xf32, #tpu.memory_space<vmem>>) attributes {dimension_semantics = [#tpu.dimension_semantics<parallel>, #tpu.dimension_semantics<parallel>], iteration_bounds = array<i64: 2, 1>, scalar_prefetch = 0 : i64, scratch_operands = 0 : i64, tpu.core_type = #tpu.core_type<tc>, window_params = [{transform_indices = @transform_0, window_bounds = array<i64: 1, 4, 8, 128>}, {transform_indices = @transform_1, window_bounds = array<i64: 1, 4, 8, 128>}, {transform_indices = @transform_2, window_bounds = array<i64: 1, 4, 8, 128>}, {transform_indices = @transform_3, window_bounds = array<i64: 1, 4, 8, 128>}, {transform_indices = @transform_4, window_bounds = array<i64: 16>}, {transform_indices = @transform_5, window_bounds = array<i64: 4>}, {transform_indices = @transform_6, window_bounds = array<i64: 16>}, {transform_indices = @transform_7, window_bounds = array<i64: 4>}, {transform_indices = @transform_8, window_bounds = array<i64: 32>}, {transform_indices = @transform_9, window_bounds = array<i64: 4>}, {transform_indices = @transform_10, window_bounds = array<i64: 16>}, {transform_indices = @transform_11, window_bounds = array<i64: 4>}, {transform_indices = @transform_12, window_bounds = array<i64: 32>}, {transform_indices = @transform_13, window_bounds = array<i64: 4>}, {transform_indices = @transform_14, window_bounds = array<i64: 16>}, {transform_indices = @transform_15, window_bounds = array<i64: 4>}, {transform_indices = @transform_16, window_bounds = array<i64: 1, 4, 8, 128>}, {transform_indices = @transform_17, window_bounds = array<i64: 1, 4, 8, 128>}]} {
    %c0 = arith.constant 0 : index
    %c0_0 = arith.constant 0 : index
    %c0_1 = arith.constant 0 : index
    %c0_2 = arith.constant 0 : index
    %0 = vector.load %arg2[%c0, %c0_0, %c0_1, %c0_2] : memref<1x4x8x128xf32, #tpu.memory_space<vmem>>, vector<1x1x8x128xf32>
    %1 = vector.shape_cast %0 : vector<1x1x8x128xf32> to vector<8x128xf32>
    %c0_3 = arith.constant 0 : index
    %c1 = arith.constant 1 : index
    %c0_4 = arith.constant 0 : index
    %c0_5 = arith.constant 0 : index
    %2 = vector.load %arg2[%c0_3, %c1, %c0_4, %c0_5] : memref<1x4x8x128xf32, #tpu.memory_space<vmem>>, vector<1x1x8x128xf32>
    %3 = vector.shape_cast %2 : vector<1x1x8x128xf32> to vector<8x128xf32>
    %c0_6 = arith.constant 0 : index
    %c2 = arith.constant 2 : index
    %c0_7 = arith.constant 0 : index
    %c0_8 = arith.constant 0 : index
    %4 = vector.load %arg2[%c0_6, %c2, %c0_7, %c0_8] : memref<1x4x8x128xf32, #tpu.memory_space<vmem>>, vector<1x1x8x128xf32>
    %5 = vector.shape_cast %4 : vector<1x1x8x128xf32> to vector<8x128xf32>
    %c0_9 = arith.constant 0 : index
    %c3 = arith.constant 3 : index
    %c0_10 = arith.constant 0 : index
    %c0_11 = arith.constant 0 : index
    %6 = vector.load %arg2[%c0_9, %c3, %c0_10, %c0_11] : memref<1x4x8x128xf32, #tpu.memory_space<vmem>>, vector<1x1x8x128xf32>
    %7 = vector.shape_cast %6 : vector<1x1x8x128xf32> to vector<8x128xf32>
    %c0_12 = arith.constant 0 : index
    %c0_13 = arith.constant 0 : index
    %c0_14 = arith.constant 0 : index
    %c0_15 = arith.constant 0 : index
    %8 = vector.load %arg3[%c0_12, %c0_13, %c0_14, %c0_15] : memref<1x4x8x128xf32, #tpu.memory_space<vmem>>, vector<1x1x8x128xf32>
    %9 = vector.shape_cast %8 : vector<1x1x8x128xf32> to vector<8x128xf32>
    %c0_16 = arith.constant 0 : index
    %c1_17 = arith.constant 1 : index
    %c0_18 = arith.constant 0 : index
    %c0_19 = arith.constant 0 : index
    %10 = vector.load %arg3[%c0_16, %c1_17, %c0_18, %c0_19] : memref<1x4x8x128xf32, #tpu.memory_space<vmem>>, vector<1x1x8x128xf32>
    %11 = vector.shape_cast %10 : vector<1x1x8x128xf32> to vector<8x128xf32>
    %c0_20 = arith.constant 0 : index
    %c2_21 = arith.constant 2 : index
    %c0_22 = arith.constant 0 : index
    %c0_23 = arith.constant 0 : index
    %12 = vector.load %arg3[%c0_20, %c2_21, %c0_22, %c0_23] : memref<1x4x8x128xf32, #tpu.memory_space<vmem>>, vector<1x1x8x128xf32>
    %13 = vector.shape_cast %12 : vector<1x1x8x128xf32> to vector<8x128xf32>
    %c0_24 = arith.constant 0 : index
    %c3_25 = arith.constant 3 : index
    %c0_26 = arith.constant 0 : index
    %c0_27 = arith.constant 0 : index
    %14 = vector.load %arg3[%c0_24, %c3_25, %c0_26, %c0_27] : memref<1x4x8x128xf32, #tpu.memory_space<vmem>>, vector<1x1x8x128xf32>
    %15 = vector.shape_cast %14 : vector<1x1x8x128xf32> to vector<8x128xf32>
    %c0_28 = arith.constant 0 : index
    %c0_29 = arith.constant 0 : index
    %c0_30 = arith.constant 0 : index
    %c0_31 = arith.constant 0 : index
    %16 = vector.load %arg4[%c0_28, %c0_29, %c0_30, %c0_31] : memref<1x4x8x128xf32, #tpu.memory_space<vmem>>, vector<1x1x8x128xf32>
    %17 = vector.shape_cast %16 : vector<1x1x8x128xf32> to vector<8x128xf32>
    %c0_32 = arith.constant 0 : index
    %c1_33 = arith.constant 1 : index
    %c0_34 = arith.constant 0 : index
    %c0_35 = arith.constant 0 : index
    %18 = vector.load %arg4[%c0_32, %c1_33, %c0_34, %c0_35] : memref<1x4x8x128xf32, #tpu.memory_space<vmem>>, vector<1x1x8x128xf32>
    %19 = vector.shape_cast %18 : vector<1x1x8x128xf32> to vector<8x128xf32>
    %c0_36 = arith.constant 0 : index
    %c2_37 = arith.constant 2 : index
    %c0_38 = arith.constant 0 : index
    %c0_39 = arith.constant 0 : index
    %20 = vector.load %arg4[%c0_36, %c2_37, %c0_38, %c0_39] : memref<1x4x8x128xf32, #tpu.memory_space<vmem>>, vector<1x1x8x128xf32>
    %21 = vector.shape_cast %20 : vector<1x1x8x128xf32> to vector<8x128xf32>
    %c0_40 = arith.constant 0 : index
    %c3_41 = arith.constant 3 : index
    %c0_42 = arith.constant 0 : index
    %c0_43 = arith.constant 0 : index
    %22 = vector.load %arg4[%c0_40, %c3_41, %c0_42, %c0_43] : memref<1x4x8x128xf32, #tpu.memory_space<vmem>>, vector<1x1x8x128xf32>
    %23 = vector.shape_cast %22 : vector<1x1x8x128xf32> to vector<8x128xf32>
    %c0_44 = arith.constant 0 : index
    %c0_45 = arith.constant 0 : index
    %c0_46 = arith.constant 0 : index
    %c0_47 = arith.constant 0 : index
    %24 = vector.load %arg5[%c0_44, %c0_45, %c0_46, %c0_47] : memref<1x4x8x128xf32, #tpu.memory_space<vmem>>, vector<1x1x8x128xf32>
    %25 = vector.shape_cast %24 : vector<1x1x8x128xf32> to vector<8x128xf32>
    %c0_48 = arith.constant 0 : index
    %c1_49 = arith.constant 1 : index
    %c0_50 = arith.constant 0 : index
    %c0_51 = arith.constant 0 : index
    %26 = vector.load %arg5[%c0_48, %c1_49, %c0_50, %c0_51] : memref<1x4x8x128xf32, #tpu.memory_space<vmem>>, vector<1x1x8x128xf32>
    %27 = vector.shape_cast %26 : vector<1x1x8x128xf32> to vector<8x128xf32>
    %c0_52 = arith.constant 0 : index
    %c2_53 = arith.constant 2 : index
    %c0_54 = arith.constant 0 : index
    %c0_55 = arith.constant 0 : index
    %28 = vector.load %arg5[%c0_52, %c2_53, %c0_54, %c0_55] : memref<1x4x8x128xf32, #tpu.memory_space<vmem>>, vector<1x1x8x128xf32>
    %29 = vector.shape_cast %28 : vector<1x1x8x128xf32> to vector<8x128xf32>
    %c0_56 = arith.constant 0 : index
    %c3_57 = arith.constant 3 : index
    %c0_58 = arith.constant 0 : index
    %c0_59 = arith.constant 0 : index
    %30 = vector.load %arg5[%c0_56, %c3_57, %c0_58, %c0_59] : memref<1x4x8x128xf32, #tpu.memory_space<vmem>>, vector<1x1x8x128xf32>
    %31 = vector.shape_cast %30 : vector<1x1x8x128xf32> to vector<8x128xf32>
    %c0_60 = arith.constant 0 : index
    %32 = memref.load %arg6[%c0_60] : memref<16xf32, #tpu.memory_space<smem>>
    %33 = vector.broadcast %32 : f32 to vector<8x128xf32>
    %34 = arith.mulf %1, %33 : vector<8x128xf32>
    %c1_61 = arith.constant 1 : index
    %35 = memref.load %arg6[%c1_61] : memref<16xf32, #tpu.memory_space<smem>>
    %36 = vector.broadcast %35 : f32 to vector<8x128xf32>
    %37 = arith.mulf %3, %36 : vector<8x128xf32>
    %38 = arith.addf %34, %37 : vector<8x128xf32>
    %c2_62 = arith.constant 2 : index
    %39 = memref.load %arg6[%c2_62] : memref<16xf32, #tpu.memory_space<smem>>
    %40 = vector.broadcast %39 : f32 to vector<8x128xf32>
    %41 = arith.mulf %5, %40 : vector<8x128xf32>
    %42 = arith.addf %38, %41 : vector<8x128xf32>
    %c3_63 = arith.constant 3 : index
    %43 = memref.load %arg6[%c3_63] : memref<16xf32, #tpu.memory_space<smem>>
    %44 = vector.broadcast %43 : f32 to vector<8x128xf32>
    %45 = arith.mulf %7, %44 : vector<8x128xf32>
    %46 = arith.addf %42, %45 : vector<8x128xf32>
    %c4 = arith.constant 4 : index
    %47 = memref.load %arg6[%c4] : memref<16xf32, #tpu.memory_space<smem>>
    %48 = vector.broadcast %47 : f32 to vector<8x128xf32>
    %49 = arith.mulf %1, %48 : vector<8x128xf32>
    %c5 = arith.constant 5 : index
    %50 = memref.load %arg6[%c5] : memref<16xf32, #tpu.memory_space<smem>>
    %51 = vector.broadcast %50 : f32 to vector<8x128xf32>
    %52 = arith.mulf %3, %51 : vector<8x128xf32>
    %53 = arith.addf %49, %52 : vector<8x128xf32>
    %c6 = arith.constant 6 : index
    %54 = memref.load %arg6[%c6] : memref<16xf32, #tpu.memory_space<smem>>
    %55 = vector.broadcast %54 : f32 to vector<8x128xf32>
    %56 = arith.mulf %5, %55 : vector<8x128xf32>
    %57 = arith.addf %53, %56 : vector<8x128xf32>
    %c7 = arith.constant 7 : index
    %58 = memref.load %arg6[%c7] : memref<16xf32, #tpu.memory_space<smem>>
    %59 = vector.broadcast %58 : f32 to vector<8x128xf32>
    %60 = arith.mulf %7, %59 : vector<8x128xf32>
    %61 = arith.addf %57, %60 : vector<8x128xf32>
    %c8 = arith.constant 8 : index
    %62 = memref.load %arg6[%c8] : memref<16xf32, #tpu.memory_space<smem>>
    %63 = vector.broadcast %62 : f32 to vector<8x128xf32>
    %64 = arith.mulf %1, %63 : vector<8x128xf32>
    %c9 = arith.constant 9 : index
    %65 = memref.load %arg6[%c9] : memref<16xf32, #tpu.memory_space<smem>>
    %66 = vector.broadcast %65 : f32 to vector<8x128xf32>
    %67 = arith.mulf %3, %66 : vector<8x128xf32>
    %68 = arith.addf %64, %67 : vector<8x128xf32>
    %c10 = arith.constant 10 : index
    %69 = memref.load %arg6[%c10] : memref<16xf32, #tpu.memory_space<smem>>
    %70 = vector.broadcast %69 : f32 to vector<8x128xf32>
    %71 = arith.mulf %5, %70 : vector<8x128xf32>
    %72 = arith.addf %68, %71 : vector<8x128xf32>
    %c11 = arith.constant 11 : index
    %73 = memref.load %arg6[%c11] : memref<16xf32, #tpu.memory_space<smem>>
    %74 = vector.broadcast %73 : f32 to vector<8x128xf32>
    %75 = arith.mulf %7, %74 : vector<8x128xf32>
    %76 = arith.addf %72, %75 : vector<8x128xf32>
    %c12 = arith.constant 12 : index
    %77 = memref.load %arg6[%c12] : memref<16xf32, #tpu.memory_space<smem>>
    %78 = vector.broadcast %77 : f32 to vector<8x128xf32>
    %79 = arith.mulf %1, %78 : vector<8x128xf32>
    %c13 = arith.constant 13 : index
    %80 = memref.load %arg6[%c13] : memref<16xf32, #tpu.memory_space<smem>>
    %81 = vector.broadcast %80 : f32 to vector<8x128xf32>
    %82 = arith.mulf %3, %81 : vector<8x128xf32>
    %83 = arith.addf %79, %82 : vector<8x128xf32>
    %c14 = arith.constant 14 : index
    %84 = memref.load %arg6[%c14] : memref<16xf32, #tpu.memory_space<smem>>
    %85 = vector.broadcast %84 : f32 to vector<8x128xf32>
    %86 = arith.mulf %5, %85 : vector<8x128xf32>
    %87 = arith.addf %83, %86 : vector<8x128xf32>
    %c15 = arith.constant 15 : index
    %88 = memref.load %arg6[%c15] : memref<16xf32, #tpu.memory_space<smem>>
    %89 = vector.broadcast %88 : f32 to vector<8x128xf32>
    %90 = arith.mulf %7, %89 : vector<8x128xf32>
    %91 = arith.addf %87, %90 : vector<8x128xf32>
    %c0_64 = arith.constant 0 : index
    %92 = memref.load %arg6[%c0_64] : memref<16xf32, #tpu.memory_space<smem>>
    %93 = vector.broadcast %92 : f32 to vector<8x128xf32>
    %94 = arith.mulf %9, %93 : vector<8x128xf32>
    %c1_65 = arith.constant 1 : index
    %95 = memref.load %arg6[%c1_65] : memref<16xf32, #tpu.memory_space<smem>>
    %96 = vector.broadcast %95 : f32 to vector<8x128xf32>
    %97 = arith.mulf %11, %96 : vector<8x128xf32>
    %98 = arith.addf %94, %97 : vector<8x128xf32>
    %c2_66 = arith.constant 2 : index
    %99 = memref.load %arg6[%c2_66] : memref<16xf32, #tpu.memory_space<smem>>
    %100 = vector.broadcast %99 : f32 to vector<8x128xf32>
    %101 = arith.mulf %13, %100 : vector<8x128xf32>
    %102 = arith.addf %98, %101 : vector<8x128xf32>
    %c3_67 = arith.constant 3 : index
    %103 = memref.load %arg6[%c3_67] : memref<16xf32, #tpu.memory_space<smem>>
    %104 = vector.broadcast %103 : f32 to vector<8x128xf32>
    %105 = arith.mulf %15, %104 : vector<8x128xf32>
    %106 = arith.addf %102, %105 : vector<8x128xf32>
    %c4_68 = arith.constant 4 : index
    %107 = memref.load %arg6[%c4_68] : memref<16xf32, #tpu.memory_space<smem>>
    %108 = vector.broadcast %107 : f32 to vector<8x128xf32>
    %109 = arith.mulf %9, %108 : vector<8x128xf32>
    %c5_69 = arith.constant 5 : index
    %110 = memref.load %arg6[%c5_69] : memref<16xf32, #tpu.memory_space<smem>>
    %111 = vector.broadcast %110 : f32 to vector<8x128xf32>
    %112 = arith.mulf %11, %111 : vector<8x128xf32>
    %113 = arith.addf %109, %112 : vector<8x128xf32>
    %c6_70 = arith.constant 6 : index
    %114 = memref.load %arg6[%c6_70] : memref<16xf32, #tpu.memory_space<smem>>
    %115 = vector.broadcast %114 : f32 to vector<8x128xf32>
    %116 = arith.mulf %13, %115 : vector<8x128xf32>
    %117 = arith.addf %113, %116 : vector<8x128xf32>
    %c7_71 = arith.constant 7 : index
    %118 = memref.load %arg6[%c7_71] : memref<16xf32, #tpu.memory_space<smem>>
    %119 = vector.broadcast %118 : f32 to vector<8x128xf32>
    %120 = arith.mulf %15, %119 : vector<8x128xf32>
    %121 = arith.addf %117, %120 : vector<8x128xf32>
    %c8_72 = arith.constant 8 : index
    %122 = memref.load %arg6[%c8_72] : memref<16xf32, #tpu.memory_space<smem>>
    %123 = vector.broadcast %122 : f32 to vector<8x128xf32>
    %124 = arith.mulf %9, %123 : vector<8x128xf32>
    %c9_73 = arith.constant 9 : index
    %125 = memref.load %arg6[%c9_73] : memref<16xf32, #tpu.memory_space<smem>>
    %126 = vector.broadcast %125 : f32 to vector<8x128xf32>
    %127 = arith.mulf %11, %126 : vector<8x128xf32>
    %128 = arith.addf %124, %127 : vector<8x128xf32>
    %c10_74 = arith.constant 10 : index
    %129 = memref.load %arg6[%c10_74] : memref<16xf32, #tpu.memory_space<smem>>
    %130 = vector.broadcast %129 : f32 to vector<8x128xf32>
    %131 = arith.mulf %13, %130 : vector<8x128xf32>
    %132 = arith.addf %128, %131 : vector<8x128xf32>
    %c11_75 = arith.constant 11 : index
    %133 = memref.load %arg6[%c11_75] : memref<16xf32, #tpu.memory_space<smem>>
    %134 = vector.broadcast %133 : f32 to vector<8x128xf32>
    %135 = arith.mulf %15, %134 : vector<8x128xf32>
    %136 = arith.addf %132, %135 : vector<8x128xf32>
    %c12_76 = arith.constant 12 : index
    %137 = memref.load %arg6[%c12_76] : memref<16xf32, #tpu.memory_space<smem>>
    %138 = vector.broadcast %137 : f32 to vector<8x128xf32>
    %139 = arith.mulf %9, %138 : vector<8x128xf32>
    %c13_77 = arith.constant 13 : index
    %140 = memref.load %arg6[%c13_77] : memref<16xf32, #tpu.memory_space<smem>>
    %141 = vector.broadcast %140 : f32 to vector<8x128xf32>
    %142 = arith.mulf %11, %141 : vector<8x128xf32>
    %143 = arith.addf %139, %142 : vector<8x128xf32>
    %c14_78 = arith.constant 14 : index
    %144 = memref.load %arg6[%c14_78] : memref<16xf32, #tpu.memory_space<smem>>
    %145 = vector.broadcast %144 : f32 to vector<8x128xf32>
    %146 = arith.mulf %13, %145 : vector<8x128xf32>
    %147 = arith.addf %143, %146 : vector<8x128xf32>
    %c15_79 = arith.constant 15 : index
    %148 = memref.load %arg6[%c15_79] : memref<16xf32, #tpu.memory_space<smem>>
    %149 = vector.broadcast %148 : f32 to vector<8x128xf32>
    %150 = arith.mulf %15, %149 : vector<8x128xf32>
    %151 = arith.addf %147, %150 : vector<8x128xf32>
    %c0_80 = arith.constant 0 : index
    %152 = memref.load %arg8[%c0_80] : memref<16xf32, #tpu.memory_space<smem>>
    %153 = vector.broadcast %152 : f32 to vector<8x128xf32>
    %154 = arith.mulf %17, %153 : vector<8x128xf32>
    %c1_81 = arith.constant 1 : index
    %155 = memref.load %arg8[%c1_81] : memref<16xf32, #tpu.memory_space<smem>>
    %156 = vector.broadcast %155 : f32 to vector<8x128xf32>
    %157 = arith.mulf %19, %156 : vector<8x128xf32>
    %158 = arith.addf %154, %157 : vector<8x128xf32>
    %c2_82 = arith.constant 2 : index
    %159 = memref.load %arg8[%c2_82] : memref<16xf32, #tpu.memory_space<smem>>
    %160 = vector.broadcast %159 : f32 to vector<8x128xf32>
    %161 = arith.mulf %21, %160 : vector<8x128xf32>
    %162 = arith.addf %158, %161 : vector<8x128xf32>
    %c3_83 = arith.constant 3 : index
    %163 = memref.load %arg8[%c3_83] : memref<16xf32, #tpu.memory_space<smem>>
    %164 = vector.broadcast %163 : f32 to vector<8x128xf32>
    %165 = arith.mulf %23, %164 : vector<8x128xf32>
    %166 = arith.addf %162, %165 : vector<8x128xf32>
    %c4_84 = arith.constant 4 : index
    %167 = memref.load %arg8[%c4_84] : memref<16xf32, #tpu.memory_space<smem>>
    %168 = vector.broadcast %167 : f32 to vector<8x128xf32>
    %169 = arith.mulf %17, %168 : vector<8x128xf32>
    %c5_85 = arith.constant 5 : index
    %170 = memref.load %arg8[%c5_85] : memref<16xf32, #tpu.memory_space<smem>>
    %171 = vector.broadcast %170 : f32 to vector<8x128xf32>
    %172 = arith.mulf %19, %171 : vector<8x128xf32>
    %173 = arith.addf %169, %172 : vector<8x128xf32>
    %c6_86 = arith.constant 6 : index
    %174 = memref.load %arg8[%c6_86] : memref<16xf32, #tpu.memory_space<smem>>
    %175 = vector.broadcast %174 : f32 to vector<8x128xf32>
    %176 = arith.mulf %21, %175 : vector<8x128xf32>
    %177 = arith.addf %173, %176 : vector<8x128xf32>
    %c7_87 = arith.constant 7 : index
    %178 = memref.load %arg8[%c7_87] : memref<16xf32, #tpu.memory_space<smem>>
    %179 = vector.broadcast %178 : f32 to vector<8x128xf32>
    %180 = arith.mulf %23, %179 : vector<8x128xf32>
    %181 = arith.addf %177, %180 : vector<8x128xf32>
    %c8_88 = arith.constant 8 : index
    %182 = memref.load %arg8[%c8_88] : memref<16xf32, #tpu.memory_space<smem>>
    %183 = vector.broadcast %182 : f32 to vector<8x128xf32>
    %184 = arith.mulf %17, %183 : vector<8x128xf32>
    %c9_89 = arith.constant 9 : index
    %185 = memref.load %arg8[%c9_89] : memref<16xf32, #tpu.memory_space<smem>>
    %186 = vector.broadcast %185 : f32 to vector<8x128xf32>
    %187 = arith.mulf %19, %186 : vector<8x128xf32>
    %188 = arith.addf %184, %187 : vector<8x128xf32>
    %c10_90 = arith.constant 10 : index
    %189 = memref.load %arg8[%c10_90] : memref<16xf32, #tpu.memory_space<smem>>
    %190 = vector.broadcast %189 : f32 to vector<8x128xf32>
    %191 = arith.mulf %21, %190 : vector<8x128xf32>
    %192 = arith.addf %188, %191 : vector<8x128xf32>
    %c11_91 = arith.constant 11 : index
    %193 = memref.load %arg8[%c11_91] : memref<16xf32, #tpu.memory_space<smem>>
    %194 = vector.broadcast %193 : f32 to vector<8x128xf32>
    %195 = arith.mulf %23, %194 : vector<8x128xf32>
    %196 = arith.addf %192, %195 : vector<8x128xf32>
    %c12_92 = arith.constant 12 : index
    %197 = memref.load %arg8[%c12_92] : memref<16xf32, #tpu.memory_space<smem>>
    %198 = vector.broadcast %197 : f32 to vector<8x128xf32>
    %199 = arith.mulf %17, %198 : vector<8x128xf32>
    %c13_93 = arith.constant 13 : index
    %200 = memref.load %arg8[%c13_93] : memref<16xf32, #tpu.memory_space<smem>>
    %201 = vector.broadcast %200 : f32 to vector<8x128xf32>
    %202 = arith.mulf %19, %201 : vector<8x128xf32>
    %203 = arith.addf %199, %202 : vector<8x128xf32>
    %c14_94 = arith.constant 14 : index
    %204 = memref.load %arg8[%c14_94] : memref<16xf32, #tpu.memory_space<smem>>
    %205 = vector.broadcast %204 : f32 to vector<8x128xf32>
    %206 = arith.mulf %21, %205 : vector<8x128xf32>
    %207 = arith.addf %203, %206 : vector<8x128xf32>
    %c15_95 = arith.constant 15 : index
    %208 = memref.load %arg8[%c15_95] : memref<16xf32, #tpu.memory_space<smem>>
    %209 = vector.broadcast %208 : f32 to vector<8x128xf32>
    %210 = arith.mulf %23, %209 : vector<8x128xf32>
    %211 = arith.addf %207, %210 : vector<8x128xf32>
    %c0_96 = arith.constant 0 : index
    %212 = memref.load %arg8[%c0_96] : memref<16xf32, #tpu.memory_space<smem>>
    %213 = vector.broadcast %212 : f32 to vector<8x128xf32>
    %214 = arith.mulf %25, %213 : vector<8x128xf32>
    %c1_97 = arith.constant 1 : index
    %215 = memref.load %arg8[%c1_97] : memref<16xf32, #tpu.memory_space<smem>>
    %216 = vector.broadcast %215 : f32 to vector<8x128xf32>
    %217 = arith.mulf %27, %216 : vector<8x128xf32>
    %218 = arith.addf %214, %217 : vector<8x128xf32>
    %c2_98 = arith.constant 2 : index
    %219 = memref.load %arg8[%c2_98] : memref<16xf32, #tpu.memory_space<smem>>
    %220 = vector.broadcast %219 : f32 to vector<8x128xf32>
    %221 = arith.mulf %29, %220 : vector<8x128xf32>
    %222 = arith.addf %218, %221 : vector<8x128xf32>
    %c3_99 = arith.constant 3 : index
    %223 = memref.load %arg8[%c3_99] : memref<16xf32, #tpu.memory_space<smem>>
    %224 = vector.broadcast %223 : f32 to vector<8x128xf32>
    %225 = arith.mulf %31, %224 : vector<8x128xf32>
    %226 = arith.addf %222, %225 : vector<8x128xf32>
    %c4_100 = arith.constant 4 : index
    %227 = memref.load %arg8[%c4_100] : memref<16xf32, #tpu.memory_space<smem>>
    %228 = vector.broadcast %227 : f32 to vector<8x128xf32>
    %229 = arith.mulf %25, %228 : vector<8x128xf32>
    %c5_101 = arith.constant 5 : index
    %230 = memref.load %arg8[%c5_101] : memref<16xf32, #tpu.memory_space<smem>>
    %231 = vector.broadcast %230 : f32 to vector<8x128xf32>
    %232 = arith.mulf %27, %231 : vector<8x128xf32>
    %233 = arith.addf %229, %232 : vector<8x128xf32>
    %c6_102 = arith.constant 6 : index
    %234 = memref.load %arg8[%c6_102] : memref<16xf32, #tpu.memory_space<smem>>
    %235 = vector.broadcast %234 : f32 to vector<8x128xf32>
    %236 = arith.mulf %29, %235 : vector<8x128xf32>
    %237 = arith.addf %233, %236 : vector<8x128xf32>
    %c7_103 = arith.constant 7 : index
    %238 = memref.load %arg8[%c7_103] : memref<16xf32, #tpu.memory_space<smem>>
    %239 = vector.broadcast %238 : f32 to vector<8x128xf32>
    %240 = arith.mulf %31, %239 : vector<8x128xf32>
    %241 = arith.addf %237, %240 : vector<8x128xf32>
    %c8_104 = arith.constant 8 : index
    %242 = memref.load %arg8[%c8_104] : memref<16xf32, #tpu.memory_space<smem>>
    %243 = vector.broadcast %242 : f32 to vector<8x128xf32>
    %244 = arith.mulf %25, %243 : vector<8x128xf32>
    %c9_105 = arith.constant 9 : index
    %245 = memref.load %arg8[%c9_105] : memref<16xf32, #tpu.memory_space<smem>>
    %246 = vector.broadcast %245 : f32 to vector<8x128xf32>
    %247 = arith.mulf %27, %246 : vector<8x128xf32>
    %248 = arith.addf %244, %247 : vector<8x128xf32>
    %c10_106 = arith.constant 10 : index
    %249 = memref.load %arg8[%c10_106] : memref<16xf32, #tpu.memory_space<smem>>
    %250 = vector.broadcast %249 : f32 to vector<8x128xf32>
    %251 = arith.mulf %29, %250 : vector<8x128xf32>
    %252 = arith.addf %248, %251 : vector<8x128xf32>
    %c11_107 = arith.constant 11 : index
    %253 = memref.load %arg8[%c11_107] : memref<16xf32, #tpu.memory_space<smem>>
    %254 = vector.broadcast %253 : f32 to vector<8x128xf32>
    %255 = arith.mulf %31, %254 : vector<8x128xf32>
    %256 = arith.addf %252, %255 : vector<8x128xf32>
    %c12_108 = arith.constant 12 : index
    %257 = memref.load %arg8[%c12_108] : memref<16xf32, #tpu.memory_space<smem>>
    %258 = vector.broadcast %257 : f32 to vector<8x128xf32>
    %259 = arith.mulf %25, %258 : vector<8x128xf32>
    %c13_109 = arith.constant 13 : index
    %260 = memref.load %arg8[%c13_109] : memref<16xf32, #tpu.memory_space<smem>>
    %261 = vector.broadcast %260 : f32 to vector<8x128xf32>
    %262 = arith.mulf %27, %261 : vector<8x128xf32>
    %263 = arith.addf %259, %262 : vector<8x128xf32>
    %c14_110 = arith.constant 14 : index
    %264 = memref.load %arg8[%c14_110] : memref<16xf32, #tpu.memory_space<smem>>
    %265 = vector.broadcast %264 : f32 to vector<8x128xf32>
    %266 = arith.mulf %29, %265 : vector<8x128xf32>
    %267 = arith.addf %263, %266 : vector<8x128xf32>
    %c15_111 = arith.constant 15 : index
    %268 = memref.load %arg8[%c15_111] : memref<16xf32, #tpu.memory_space<smem>>
    %269 = vector.broadcast %268 : f32 to vector<8x128xf32>
    %270 = arith.mulf %31, %269 : vector<8x128xf32>
    %271 = arith.addf %267, %270 : vector<8x128xf32>
    %272 = tpu.iota {dimensions = array<i32: 0>} : vector<8x128xi32>
    %273 = tpu.iota {dimensions = array<i32: 1>} : vector<8x128xi32>
    %c0_i32 = arith.constant 0 : i32
    %274 = vector.broadcast %c0_i32 : i32 to vector<8x128xi32>
    %275 = arith.cmpi eq, %272, %274 : vector<8x128xi32>
    %c0_i32_112 = arith.constant 0 : i32
    %276 = vector.broadcast %c0_i32_112 : i32 to vector<8x128xi32>
    %277 = arith.cmpi eq, %273, %276 : vector<8x128xi32>
    %278 = arith.andi %275, %277 : vector<8x128xi1>
    %cst = arith.constant 1.000000e+00 : f32
    %cst_113 = arith.constant 0.000000e+00 : f32
    %279 = vector.broadcast %cst : f32 to vector<8x128xf32>
    %280 = vector.broadcast %cst_113 : f32 to vector<8x128xf32>
    %281 = arith.select %278, %279, %280 : vector<8x128xi1>, vector<8x128xf32>
    %c0_i32_114 = arith.constant 0 : i32
    %282 = arith.cmpi eq, %arg1, %c0_i32_114 : i32
    %cst_115 = arith.constant 1.000000e+00 : f32
    %cst_116 = arith.constant 0.000000e+00 : f32
    %283 = arith.select %282, %cst_115, %cst_116 : f32
    %284 = vector.broadcast %283 : f32 to vector<8x128xf32>
    %285 = arith.mulf %281, %284 : vector<8x128xf32>
    %c0_117 = arith.constant 0 : index
    %286 = memref.load %arg7[%c0_117] : memref<4xf32, #tpu.memory_space<smem>>
    %287 = vector.broadcast %286 : f32 to vector<8x128xf32>
    %288 = arith.mulf %285, %287 : vector<8x128xf32>
    %289 = arith.addf %46, %288 : vector<8x128xf32>
    %c1_118 = arith.constant 1 : index
    %290 = memref.load %arg7[%c1_118] : memref<4xf32, #tpu.memory_space<smem>>
    %291 = vector.broadcast %290 : f32 to vector<8x128xf32>
    %292 = arith.mulf %285, %291 : vector<8x128xf32>
    %293 = arith.addf %61, %292 : vector<8x128xf32>
    %c2_119 = arith.constant 2 : index
    %294 = memref.load %arg7[%c2_119] : memref<4xf32, #tpu.memory_space<smem>>
    %295 = vector.broadcast %294 : f32 to vector<8x128xf32>
    %296 = arith.mulf %285, %295 : vector<8x128xf32>
    %297 = arith.addf %76, %296 : vector<8x128xf32>
    %c3_120 = arith.constant 3 : index
    %298 = memref.load %arg7[%c3_120] : memref<4xf32, #tpu.memory_space<smem>>
    %299 = vector.broadcast %298 : f32 to vector<8x128xf32>
    %300 = arith.mulf %285, %299 : vector<8x128xf32>
    %301 = arith.addf %91, %300 : vector<8x128xf32>
    %c0_121 = arith.constant 0 : index
    %302 = memref.load %arg9[%c0_121] : memref<4xf32, #tpu.memory_space<smem>>
    %303 = vector.broadcast %302 : f32 to vector<8x128xf32>
    %304 = arith.mulf %285, %303 : vector<8x128xf32>
    %305 = arith.addf %166, %304 : vector<8x128xf32>
    %c1_122 = arith.constant 1 : index
    %306 = memref.load %arg9[%c1_122] : memref<4xf32, #tpu.memory_space<smem>>
    %307 = vector.broadcast %306 : f32 to vector<8x128xf32>
    %308 = arith.mulf %285, %307 : vector<8x128xf32>
    %309 = arith.addf %181, %308 : vector<8x128xf32>
    %c2_123 = arith.constant 2 : index
    %310 = memref.load %arg9[%c2_123] : memref<4xf32, #tpu.memory_space<smem>>
    %311 = vector.broadcast %310 : f32 to vector<8x128xf32>
    %312 = arith.mulf %285, %311 : vector<8x128xf32>
    %313 = arith.addf %196, %312 : vector<8x128xf32>
    %c3_124 = arith.constant 3 : index
    %314 = memref.load %arg9[%c3_124] : memref<4xf32, #tpu.memory_space<smem>>
    %315 = vector.broadcast %314 : f32 to vector<8x128xf32>
    %316 = arith.mulf %285, %315 : vector<8x128xf32>
    %317 = arith.addf %211, %316 : vector<8x128xf32>
    %318 = arith.mulf %289, %289 : vector<8x128xf32>
    %319 = arith.mulf %106, %106 : vector<8x128xf32>
    %320 = arith.addf %318, %319 : vector<8x128xf32>
    %321 = math.sqrt %320 : vector<8x128xf32>
    %322 = arith.mulf %293, %293 : vector<8x128xf32>
    %323 = arith.mulf %121, %121 : vector<8x128xf32>
    %324 = arith.addf %322, %323 : vector<8x128xf32>
    %325 = math.sqrt %324 : vector<8x128xf32>
    %326 = arith.mulf %297, %297 : vector<8x128xf32>
    %327 = arith.mulf %136, %136 : vector<8x128xf32>
    %328 = arith.addf %326, %327 : vector<8x128xf32>
    %329 = math.sqrt %328 : vector<8x128xf32>
    %330 = arith.mulf %301, %301 : vector<8x128xf32>
    %331 = arith.mulf %151, %151 : vector<8x128xf32>
    %332 = arith.addf %330, %331 : vector<8x128xf32>
    %333 = math.sqrt %332 : vector<8x128xf32>
    %334 = arith.mulf %305, %305 : vector<8x128xf32>
    %335 = arith.mulf %226, %226 : vector<8x128xf32>
    %336 = arith.addf %334, %335 : vector<8x128xf32>
    %337 = math.sqrt %336 : vector<8x128xf32>
    %338 = arith.mulf %309, %309 : vector<8x128xf32>
    %339 = arith.mulf %241, %241 : vector<8x128xf32>
    %340 = arith.addf %338, %339 : vector<8x128xf32>
    %341 = math.sqrt %340 : vector<8x128xf32>
    %342 = arith.mulf %313, %313 : vector<8x128xf32>
    %343 = arith.mulf %256, %256 : vector<8x128xf32>
    %344 = arith.addf %342, %343 : vector<8x128xf32>
    %345 = math.sqrt %344 : vector<8x128xf32>
    %346 = arith.mulf %317, %317 : vector<8x128xf32>
    %347 = arith.mulf %271, %271 : vector<8x128xf32>
    %348 = arith.addf %346, %347 : vector<8x128xf32>
    %349 = math.sqrt %348 : vector<8x128xf32>
    %350 = math.absf %289 : vector<8x128xf32>
    %351 = math.absf %106 : vector<8x128xf32>
    %352 = arith.maximumf %350, %351 : vector<8x128xf32>
    %353 = arith.minimumf %350, %351 : vector<8x128xf32>
    %cst_125 = arith.constant 0.000000e+00 : f32
    %354 = vector.broadcast %cst_125 : f32 to vector<8x128xf32>
    %355 = arith.cmpf oeq, %352, %354 : vector<8x128xf32>
    %cst_126 = arith.constant 1.000000e+00 : f32
    %356 = vector.broadcast %cst_126 : f32 to vector<8x128xf32>
    %357 = arith.select %355, %356, %352 : vector<8x128xi1>, vector<8x128xf32>
    %358 = arith.divf %353, %357 : vector<8x128xf32>
    %cst_127 = arith.constant 0.414213568 : f32
    %359 = vector.broadcast %cst_127 : f32 to vector<8x128xf32>
    %360 = arith.cmpf ogt, %358, %359 : vector<8x128xf32>
    %cst_128 = arith.constant 1.000000e+00 : f32
    %361 = vector.broadcast %cst_128 : f32 to vector<8x128xf32>
    %362 = arith.subf %358, %361 : vector<8x128xf32>
    %cst_129 = arith.constant 1.000000e+00 : f32
    %363 = vector.broadcast %cst_129 : f32 to vector<8x128xf32>
    %364 = arith.addf %358, %363 : vector<8x128xf32>
    %365 = arith.divf %362, %364 : vector<8x128xf32>
    %366 = arith.select %360, %365, %358 : vector<8x128xi1>, vector<8x128xf32>
    %367 = arith.mulf %366, %366 : vector<8x128xf32>
    %cst_130 = arith.constant 0.0805374458 : f32
    %368 = vector.broadcast %cst_130 : f32 to vector<8x128xf32>
    %369 = arith.mulf %368, %367 : vector<8x128xf32>
    %cst_131 = arith.constant 0.138776854 : f32
    %370 = vector.broadcast %cst_131 : f32 to vector<8x128xf32>
    %371 = arith.subf %369, %370 : vector<8x128xf32>
    %372 = arith.mulf %371, %367 : vector<8x128xf32>
    %cst_132 = arith.constant 0.199777111 : f32
    %373 = vector.broadcast %cst_132 : f32 to vector<8x128xf32>
    %374 = arith.addf %372, %373 : vector<8x128xf32>
    %375 = arith.mulf %374, %367 : vector<8x128xf32>
    %cst_133 = arith.constant 0.333329499 : f32
    %376 = vector.broadcast %cst_133 : f32 to vector<8x128xf32>
    %377 = arith.subf %375, %376 : vector<8x128xf32>
    %378 = arith.mulf %377, %367 : vector<8x128xf32>
    %379 = arith.mulf %378, %366 : vector<8x128xf32>
    %380 = arith.addf %379, %366 : vector<8x128xf32>
    %cst_134 = arith.constant 0.785398185 : f32
    %381 = vector.broadcast %cst_134 : f32 to vector<8x128xf32>
    %382 = arith.addf %381, %380 : vector<8x128xf32>
    %383 = arith.select %360, %382, %380 : vector<8x128xi1>, vector<8x128xf32>
    %384 = arith.cmpf ogt, %351, %350 : vector<8x128xf32>
    %cst_135 = arith.constant 1.57079637 : f32
    %385 = vector.broadcast %cst_135 : f32 to vector<8x128xf32>
    %386 = arith.subf %385, %383 : vector<8x128xf32>
    %387 = arith.select %384, %386, %383 : vector<8x128xi1>, vector<8x128xf32>
    %388 = tpu.bitcast %289 : vector<8x128xf32> -> vector<8x128xi32>
    %c0_i32_136 = arith.constant 0 : i32
    %389 = vector.broadcast %c0_i32_136 : i32 to vector<8x128xi32>
    %390 = arith.cmpi slt, %388, %389 : vector<8x128xi32>
    %cst_137 = arith.constant 3.14159274 : f32
    %391 = vector.broadcast %cst_137 : f32 to vector<8x128xf32>
    %392 = arith.subf %391, %387 : vector<8x128xf32>
    %393 = arith.select %390, %392, %387 : vector<8x128xi1>, vector<8x128xf32>
    %394 = tpu.bitcast %106 : vector<8x128xf32> -> vector<8x128xi32>
    %c0_i32_138 = arith.constant 0 : i32
    %395 = vector.broadcast %c0_i32_138 : i32 to vector<8x128xi32>
    %396 = arith.cmpi slt, %394, %395 : vector<8x128xi32>
    %cst_139 = arith.constant 0.000000e+00 : f32
    %397 = vector.broadcast %cst_139 : f32 to vector<8x128xf32>
    %398 = arith.subf %397, %393 : vector<8x128xf32>
    %399 = arith.select %396, %398, %393 : vector<8x128xi1>, vector<8x128xf32>
    %400 = math.absf %293 : vector<8x128xf32>
    %401 = math.absf %121 : vector<8x128xf32>
    %402 = arith.maximumf %400, %401 : vector<8x128xf32>
    %403 = arith.minimumf %400, %401 : vector<8x128xf32>
    %cst_140 = arith.constant 0.000000e+00 : f32
    %404 = vector.broadcast %cst_140 : f32 to vector<8x128xf32>
    %405 = arith.cmpf oeq, %402, %404 : vector<8x128xf32>
    %cst_141 = arith.constant 1.000000e+00 : f32
    %406 = vector.broadcast %cst_141 : f32 to vector<8x128xf32>
    %407 = arith.select %405, %406, %402 : vector<8x128xi1>, vector<8x128xf32>
    %408 = arith.divf %403, %407 : vector<8x128xf32>
    %cst_142 = arith.constant 0.414213568 : f32
    %409 = vector.broadcast %cst_142 : f32 to vector<8x128xf32>
    %410 = arith.cmpf ogt, %408, %409 : vector<8x128xf32>
    %cst_143 = arith.constant 1.000000e+00 : f32
    %411 = vector.broadcast %cst_143 : f32 to vector<8x128xf32>
    %412 = arith.subf %408, %411 : vector<8x128xf32>
    %cst_144 = arith.constant 1.000000e+00 : f32
    %413 = vector.broadcast %cst_144 : f32 to vector<8x128xf32>
    %414 = arith.addf %408, %413 : vector<8x128xf32>
    %415 = arith.divf %412, %414 : vector<8x128xf32>
    %416 = arith.select %410, %415, %408 : vector<8x128xi1>, vector<8x128xf32>
    %417 = arith.mulf %416, %416 : vector<8x128xf32>
    %cst_145 = arith.constant 0.0805374458 : f32
    %418 = vector.broadcast %cst_145 : f32 to vector<8x128xf32>
    %419 = arith.mulf %418, %417 : vector<8x128xf32>
    %cst_146 = arith.constant 0.138776854 : f32
    %420 = vector.broadcast %cst_146 : f32 to vector<8x128xf32>
    %421 = arith.subf %419, %420 : vector<8x128xf32>
    %422 = arith.mulf %421, %417 : vector<8x128xf32>
    %cst_147 = arith.constant 0.199777111 : f32
    %423 = vector.broadcast %cst_147 : f32 to vector<8x128xf32>
    %424 = arith.addf %422, %423 : vector<8x128xf32>
    %425 = arith.mulf %424, %417 : vector<8x128xf32>
    %cst_148 = arith.constant 0.333329499 : f32
    %426 = vector.broadcast %cst_148 : f32 to vector<8x128xf32>
    %427 = arith.subf %425, %426 : vector<8x128xf32>
    %428 = arith.mulf %427, %417 : vector<8x128xf32>
    %429 = arith.mulf %428, %416 : vector<8x128xf32>
    %430 = arith.addf %429, %416 : vector<8x128xf32>
    %cst_149 = arith.constant 0.785398185 : f32
    %431 = vector.broadcast %cst_149 : f32 to vector<8x128xf32>
    %432 = arith.addf %431, %430 : vector<8x128xf32>
    %433 = arith.select %410, %432, %430 : vector<8x128xi1>, vector<8x128xf32>
    %434 = arith.cmpf ogt, %401, %400 : vector<8x128xf32>
    %cst_150 = arith.constant 1.57079637 : f32
    %435 = vector.broadcast %cst_150 : f32 to vector<8x128xf32>
    %436 = arith.subf %435, %433 : vector<8x128xf32>
    %437 = arith.select %434, %436, %433 : vector<8x128xi1>, vector<8x128xf32>
    %438 = tpu.bitcast %293 : vector<8x128xf32> -> vector<8x128xi32>
    %c0_i32_151 = arith.constant 0 : i32
    %439 = vector.broadcast %c0_i32_151 : i32 to vector<8x128xi32>
    %440 = arith.cmpi slt, %438, %439 : vector<8x128xi32>
    %cst_152 = arith.constant 3.14159274 : f32
    %441 = vector.broadcast %cst_152 : f32 to vector<8x128xf32>
    %442 = arith.subf %441, %437 : vector<8x128xf32>
    %443 = arith.select %440, %442, %437 : vector<8x128xi1>, vector<8x128xf32>
    %444 = tpu.bitcast %121 : vector<8x128xf32> -> vector<8x128xi32>
    %c0_i32_153 = arith.constant 0 : i32
    %445 = vector.broadcast %c0_i32_153 : i32 to vector<8x128xi32>
    %446 = arith.cmpi slt, %444, %445 : vector<8x128xi32>
    %cst_154 = arith.constant 0.000000e+00 : f32
    %447 = vector.broadcast %cst_154 : f32 to vector<8x128xf32>
    %448 = arith.subf %447, %443 : vector<8x128xf32>
    %449 = arith.select %446, %448, %443 : vector<8x128xi1>, vector<8x128xf32>
    %450 = math.absf %297 : vector<8x128xf32>
    %451 = math.absf %136 : vector<8x128xf32>
    %452 = arith.maximumf %450, %451 : vector<8x128xf32>
    %453 = arith.minimumf %450, %451 : vector<8x128xf32>
    %cst_155 = arith.constant 0.000000e+00 : f32
    %454 = vector.broadcast %cst_155 : f32 to vector<8x128xf32>
    %455 = arith.cmpf oeq, %452, %454 : vector<8x128xf32>
    %cst_156 = arith.constant 1.000000e+00 : f32
    %456 = vector.broadcast %cst_156 : f32 to vector<8x128xf32>
    %457 = arith.select %455, %456, %452 : vector<8x128xi1>, vector<8x128xf32>
    %458 = arith.divf %453, %457 : vector<8x128xf32>
    %cst_157 = arith.constant 0.414213568 : f32
    %459 = vector.broadcast %cst_157 : f32 to vector<8x128xf32>
    %460 = arith.cmpf ogt, %458, %459 : vector<8x128xf32>
    %cst_158 = arith.constant 1.000000e+00 : f32
    %461 = vector.broadcast %cst_158 : f32 to vector<8x128xf32>
    %462 = arith.subf %458, %461 : vector<8x128xf32>
    %cst_159 = arith.constant 1.000000e+00 : f32
    %463 = vector.broadcast %cst_159 : f32 to vector<8x128xf32>
    %464 = arith.addf %458, %463 : vector<8x128xf32>
    %465 = arith.divf %462, %464 : vector<8x128xf32>
    %466 = arith.select %460, %465, %458 : vector<8x128xi1>, vector<8x128xf32>
    %467 = arith.mulf %466, %466 : vector<8x128xf32>
    %cst_160 = arith.constant 0.0805374458 : f32
    %468 = vector.broadcast %cst_160 : f32 to vector<8x128xf32>
    %469 = arith.mulf %468, %467 : vector<8x128xf32>
    %cst_161 = arith.constant 0.138776854 : f32
    %470 = vector.broadcast %cst_161 : f32 to vector<8x128xf32>
    %471 = arith.subf %469, %470 : vector<8x128xf32>
    %472 = arith.mulf %471, %467 : vector<8x128xf32>
    %cst_162 = arith.constant 0.199777111 : f32
    %473 = vector.broadcast %cst_162 : f32 to vector<8x128xf32>
    %474 = arith.addf %472, %473 : vector<8x128xf32>
    %475 = arith.mulf %474, %467 : vector<8x128xf32>
    %cst_163 = arith.constant 0.333329499 : f32
    %476 = vector.broadcast %cst_163 : f32 to vector<8x128xf32>
    %477 = arith.subf %475, %476 : vector<8x128xf32>
    %478 = arith.mulf %477, %467 : vector<8x128xf32>
    %479 = arith.mulf %478, %466 : vector<8x128xf32>
    %480 = arith.addf %479, %466 : vector<8x128xf32>
    %cst_164 = arith.constant 0.785398185 : f32
    %481 = vector.broadcast %cst_164 : f32 to vector<8x128xf32>
    %482 = arith.addf %481, %480 : vector<8x128xf32>
    %483 = arith.select %460, %482, %480 : vector<8x128xi1>, vector<8x128xf32>
    %484 = arith.cmpf ogt, %451, %450 : vector<8x128xf32>
    %cst_165 = arith.constant 1.57079637 : f32
    %485 = vector.broadcast %cst_165 : f32 to vector<8x128xf32>
    %486 = arith.subf %485, %483 : vector<8x128xf32>
    %487 = arith.select %484, %486, %483 : vector<8x128xi1>, vector<8x128xf32>
    %488 = tpu.bitcast %297 : vector<8x128xf32> -> vector<8x128xi32>
    %c0_i32_166 = arith.constant 0 : i32
    %489 = vector.broadcast %c0_i32_166 : i32 to vector<8x128xi32>
    %490 = arith.cmpi slt, %488, %489 : vector<8x128xi32>
    %cst_167 = arith.constant 3.14159274 : f32
    %491 = vector.broadcast %cst_167 : f32 to vector<8x128xf32>
    %492 = arith.subf %491, %487 : vector<8x128xf32>
    %493 = arith.select %490, %492, %487 : vector<8x128xi1>, vector<8x128xf32>
    %494 = tpu.bitcast %136 : vector<8x128xf32> -> vector<8x128xi32>
    %c0_i32_168 = arith.constant 0 : i32
    %495 = vector.broadcast %c0_i32_168 : i32 to vector<8x128xi32>
    %496 = arith.cmpi slt, %494, %495 : vector<8x128xi32>
    %cst_169 = arith.constant 0.000000e+00 : f32
    %497 = vector.broadcast %cst_169 : f32 to vector<8x128xf32>
    %498 = arith.subf %497, %493 : vector<8x128xf32>
    %499 = arith.select %496, %498, %493 : vector<8x128xi1>, vector<8x128xf32>
    %500 = math.absf %301 : vector<8x128xf32>
    %501 = math.absf %151 : vector<8x128xf32>
    %502 = arith.maximumf %500, %501 : vector<8x128xf32>
    %503 = arith.minimumf %500, %501 : vector<8x128xf32>
    %cst_170 = arith.constant 0.000000e+00 : f32
    %504 = vector.broadcast %cst_170 : f32 to vector<8x128xf32>
    %505 = arith.cmpf oeq, %502, %504 : vector<8x128xf32>
    %cst_171 = arith.constant 1.000000e+00 : f32
    %506 = vector.broadcast %cst_171 : f32 to vector<8x128xf32>
    %507 = arith.select %505, %506, %502 : vector<8x128xi1>, vector<8x128xf32>
    %508 = arith.divf %503, %507 : vector<8x128xf32>
    %cst_172 = arith.constant 0.414213568 : f32
    %509 = vector.broadcast %cst_172 : f32 to vector<8x128xf32>
    %510 = arith.cmpf ogt, %508, %509 : vector<8x128xf32>
    %cst_173 = arith.constant 1.000000e+00 : f32
    %511 = vector.broadcast %cst_173 : f32 to vector<8x128xf32>
    %512 = arith.subf %508, %511 : vector<8x128xf32>
    %cst_174 = arith.constant 1.000000e+00 : f32
    %513 = vector.broadcast %cst_174 : f32 to vector<8x128xf32>
    %514 = arith.addf %508, %513 : vector<8x128xf32>
    %515 = arith.divf %512, %514 : vector<8x128xf32>
    %516 = arith.select %510, %515, %508 : vector<8x128xi1>, vector<8x128xf32>
    %517 = arith.mulf %516, %516 : vector<8x128xf32>
    %cst_175 = arith.constant 0.0805374458 : f32
    %518 = vector.broadcast %cst_175 : f32 to vector<8x128xf32>
    %519 = arith.mulf %518, %517 : vector<8x128xf32>
    %cst_176 = arith.constant 0.138776854 : f32
    %520 = vector.broadcast %cst_176 : f32 to vector<8x128xf32>
    %521 = arith.subf %519, %520 : vector<8x128xf32>
    %522 = arith.mulf %521, %517 : vector<8x128xf32>
    %cst_177 = arith.constant 0.199777111 : f32
    %523 = vector.broadcast %cst_177 : f32 to vector<8x128xf32>
    %524 = arith.addf %522, %523 : vector<8x128xf32>
    %525 = arith.mulf %524, %517 : vector<8x128xf32>
    %cst_178 = arith.constant 0.333329499 : f32
    %526 = vector.broadcast %cst_178 : f32 to vector<8x128xf32>
    %527 = arith.subf %525, %526 : vector<8x128xf32>
    %528 = arith.mulf %527, %517 : vector<8x128xf32>
    %529 = arith.mulf %528, %516 : vector<8x128xf32>
    %530 = arith.addf %529, %516 : vector<8x128xf32>
    %cst_179 = arith.constant 0.785398185 : f32
    %531 = vector.broadcast %cst_179 : f32 to vector<8x128xf32>
    %532 = arith.addf %531, %530 : vector<8x128xf32>
    %533 = arith.select %510, %532, %530 : vector<8x128xi1>, vector<8x128xf32>
    %534 = arith.cmpf ogt, %501, %500 : vector<8x128xf32>
    %cst_180 = arith.constant 1.57079637 : f32
    %535 = vector.broadcast %cst_180 : f32 to vector<8x128xf32>
    %536 = arith.subf %535, %533 : vector<8x128xf32>
    %537 = arith.select %534, %536, %533 : vector<8x128xi1>, vector<8x128xf32>
    %538 = tpu.bitcast %301 : vector<8x128xf32> -> vector<8x128xi32>
    %c0_i32_181 = arith.constant 0 : i32
    %539 = vector.broadcast %c0_i32_181 : i32 to vector<8x128xi32>
    %540 = arith.cmpi slt, %538, %539 : vector<8x128xi32>
    %cst_182 = arith.constant 3.14159274 : f32
    %541 = vector.broadcast %cst_182 : f32 to vector<8x128xf32>
    %542 = arith.subf %541, %537 : vector<8x128xf32>
    %543 = arith.select %540, %542, %537 : vector<8x128xi1>, vector<8x128xf32>
    %544 = tpu.bitcast %151 : vector<8x128xf32> -> vector<8x128xi32>
    %c0_i32_183 = arith.constant 0 : i32
    %545 = vector.broadcast %c0_i32_183 : i32 to vector<8x128xi32>
    %546 = arith.cmpi slt, %544, %545 : vector<8x128xi32>
    %cst_184 = arith.constant 0.000000e+00 : f32
    %547 = vector.broadcast %cst_184 : f32 to vector<8x128xf32>
    %548 = arith.subf %547, %543 : vector<8x128xf32>
    %549 = arith.select %546, %548, %543 : vector<8x128xi1>, vector<8x128xf32>
    %550 = math.absf %305 : vector<8x128xf32>
    %551 = math.absf %226 : vector<8x128xf32>
    %552 = arith.maximumf %550, %551 : vector<8x128xf32>
    %553 = arith.minimumf %550, %551 : vector<8x128xf32>
    %cst_185 = arith.constant 0.000000e+00 : f32
    %554 = vector.broadcast %cst_185 : f32 to vector<8x128xf32>
    %555 = arith.cmpf oeq, %552, %554 : vector<8x128xf32>
    %cst_186 = arith.constant 1.000000e+00 : f32
    %556 = vector.broadcast %cst_186 : f32 to vector<8x128xf32>
    %557 = arith.select %555, %556, %552 : vector<8x128xi1>, vector<8x128xf32>
    %558 = arith.divf %553, %557 : vector<8x128xf32>
    %cst_187 = arith.constant 0.414213568 : f32
    %559 = vector.broadcast %cst_187 : f32 to vector<8x128xf32>
    %560 = arith.cmpf ogt, %558, %559 : vector<8x128xf32>
    %cst_188 = arith.constant 1.000000e+00 : f32
    %561 = vector.broadcast %cst_188 : f32 to vector<8x128xf32>
    %562 = arith.subf %558, %561 : vector<8x128xf32>
    %cst_189 = arith.constant 1.000000e+00 : f32
    %563 = vector.broadcast %cst_189 : f32 to vector<8x128xf32>
    %564 = arith.addf %558, %563 : vector<8x128xf32>
    %565 = arith.divf %562, %564 : vector<8x128xf32>
    %566 = arith.select %560, %565, %558 : vector<8x128xi1>, vector<8x128xf32>
    %567 = arith.mulf %566, %566 : vector<8x128xf32>
    %cst_190 = arith.constant 0.0805374458 : f32
    %568 = vector.broadcast %cst_190 : f32 to vector<8x128xf32>
    %569 = arith.mulf %568, %567 : vector<8x128xf32>
    %cst_191 = arith.constant 0.138776854 : f32
    %570 = vector.broadcast %cst_191 : f32 to vector<8x128xf32>
    %571 = arith.subf %569, %570 : vector<8x128xf32>
    %572 = arith.mulf %571, %567 : vector<8x128xf32>
    %cst_192 = arith.constant 0.199777111 : f32
    %573 = vector.broadcast %cst_192 : f32 to vector<8x128xf32>
    %574 = arith.addf %572, %573 : vector<8x128xf32>
    %575 = arith.mulf %574, %567 : vector<8x128xf32>
    %cst_193 = arith.constant 0.333329499 : f32
    %576 = vector.broadcast %cst_193 : f32 to vector<8x128xf32>
    %577 = arith.subf %575, %576 : vector<8x128xf32>
    %578 = arith.mulf %577, %567 : vector<8x128xf32>
    %579 = arith.mulf %578, %566 : vector<8x128xf32>
    %580 = arith.addf %579, %566 : vector<8x128xf32>
    %cst_194 = arith.constant 0.785398185 : f32
    %581 = vector.broadcast %cst_194 : f32 to vector<8x128xf32>
    %582 = arith.addf %581, %580 : vector<8x128xf32>
    %583 = arith.select %560, %582, %580 : vector<8x128xi1>, vector<8x128xf32>
    %584 = arith.cmpf ogt, %551, %550 : vector<8x128xf32>
    %cst_195 = arith.constant 1.57079637 : f32
    %585 = vector.broadcast %cst_195 : f32 to vector<8x128xf32>
    %586 = arith.subf %585, %583 : vector<8x128xf32>
    %587 = arith.select %584, %586, %583 : vector<8x128xi1>, vector<8x128xf32>
    %588 = tpu.bitcast %305 : vector<8x128xf32> -> vector<8x128xi32>
    %c0_i32_196 = arith.constant 0 : i32
    %589 = vector.broadcast %c0_i32_196 : i32 to vector<8x128xi32>
    %590 = arith.cmpi slt, %588, %589 : vector<8x128xi32>
    %cst_197 = arith.constant 3.14159274 : f32
    %591 = vector.broadcast %cst_197 : f32 to vector<8x128xf32>
    %592 = arith.subf %591, %587 : vector<8x128xf32>
    %593 = arith.select %590, %592, %587 : vector<8x128xi1>, vector<8x128xf32>
    %594 = tpu.bitcast %226 : vector<8x128xf32> -> vector<8x128xi32>
    %c0_i32_198 = arith.constant 0 : i32
    %595 = vector.broadcast %c0_i32_198 : i32 to vector<8x128xi32>
    %596 = arith.cmpi slt, %594, %595 : vector<8x128xi32>
    %cst_199 = arith.constant 0.000000e+00 : f32
    %597 = vector.broadcast %cst_199 : f32 to vector<8x128xf32>
    %598 = arith.subf %597, %593 : vector<8x128xf32>
    %599 = arith.select %596, %598, %593 : vector<8x128xi1>, vector<8x128xf32>
    %600 = math.absf %309 : vector<8x128xf32>
    %601 = math.absf %241 : vector<8x128xf32>
    %602 = arith.maximumf %600, %601 : vector<8x128xf32>
    %603 = arith.minimumf %600, %601 : vector<8x128xf32>
    %cst_200 = arith.constant 0.000000e+00 : f32
    %604 = vector.broadcast %cst_200 : f32 to vector<8x128xf32>
    %605 = arith.cmpf oeq, %602, %604 : vector<8x128xf32>
    %cst_201 = arith.constant 1.000000e+00 : f32
    %606 = vector.broadcast %cst_201 : f32 to vector<8x128xf32>
    %607 = arith.select %605, %606, %602 : vector<8x128xi1>, vector<8x128xf32>
    %608 = arith.divf %603, %607 : vector<8x128xf32>
    %cst_202 = arith.constant 0.414213568 : f32
    %609 = vector.broadcast %cst_202 : f32 to vector<8x128xf32>
    %610 = arith.cmpf ogt, %608, %609 : vector<8x128xf32>
    %cst_203 = arith.constant 1.000000e+00 : f32
    %611 = vector.broadcast %cst_203 : f32 to vector<8x128xf32>
    %612 = arith.subf %608, %611 : vector<8x128xf32>
    %cst_204 = arith.constant 1.000000e+00 : f32
    %613 = vector.broadcast %cst_204 : f32 to vector<8x128xf32>
    %614 = arith.addf %608, %613 : vector<8x128xf32>
    %615 = arith.divf %612, %614 : vector<8x128xf32>
    %616 = arith.select %610, %615, %608 : vector<8x128xi1>, vector<8x128xf32>
    %617 = arith.mulf %616, %616 : vector<8x128xf32>
    %cst_205 = arith.constant 0.0805374458 : f32
    %618 = vector.broadcast %cst_205 : f32 to vector<8x128xf32>
    %619 = arith.mulf %618, %617 : vector<8x128xf32>
    %cst_206 = arith.constant 0.138776854 : f32
    %620 = vector.broadcast %cst_206 : f32 to vector<8x128xf32>
    %621 = arith.subf %619, %620 : vector<8x128xf32>
    %622 = arith.mulf %621, %617 : vector<8x128xf32>
    %cst_207 = arith.constant 0.199777111 : f32
    %623 = vector.broadcast %cst_207 : f32 to vector<8x128xf32>
    %624 = arith.addf %622, %623 : vector<8x128xf32>
    %625 = arith.mulf %624, %617 : vector<8x128xf32>
    %cst_208 = arith.constant 0.333329499 : f32
    %626 = vector.broadcast %cst_208 : f32 to vector<8x128xf32>
    %627 = arith.subf %625, %626 : vector<8x128xf32>
    %628 = arith.mulf %627, %617 : vector<8x128xf32>
    %629 = arith.mulf %628, %616 : vector<8x128xf32>
    %630 = arith.addf %629, %616 : vector<8x128xf32>
    %cst_209 = arith.constant 0.785398185 : f32
    %631 = vector.broadcast %cst_209 : f32 to vector<8x128xf32>
    %632 = arith.addf %631, %630 : vector<8x128xf32>
    %633 = arith.select %610, %632, %630 : vector<8x128xi1>, vector<8x128xf32>
    %634 = arith.cmpf ogt, %601, %600 : vector<8x128xf32>
    %cst_210 = arith.constant 1.57079637 : f32
    %635 = vector.broadcast %cst_210 : f32 to vector<8x128xf32>
    %636 = arith.subf %635, %633 : vector<8x128xf32>
    %637 = arith.select %634, %636, %633 : vector<8x128xi1>, vector<8x128xf32>
    %638 = tpu.bitcast %309 : vector<8x128xf32> -> vector<8x128xi32>
    %c0_i32_211 = arith.constant 0 : i32
    %639 = vector.broadcast %c0_i32_211 : i32 to vector<8x128xi32>
    %640 = arith.cmpi slt, %638, %639 : vector<8x128xi32>
    %cst_212 = arith.constant 3.14159274 : f32
    %641 = vector.broadcast %cst_212 : f32 to vector<8x128xf32>
    %642 = arith.subf %641, %637 : vector<8x128xf32>
    %643 = arith.select %640, %642, %637 : vector<8x128xi1>, vector<8x128xf32>
    %644 = tpu.bitcast %241 : vector<8x128xf32> -> vector<8x128xi32>
    %c0_i32_213 = arith.constant 0 : i32
    %645 = vector.broadcast %c0_i32_213 : i32 to vector<8x128xi32>
    %646 = arith.cmpi slt, %644, %645 : vector<8x128xi32>
    %cst_214 = arith.constant 0.000000e+00 : f32
    %647 = vector.broadcast %cst_214 : f32 to vector<8x128xf32>
    %648 = arith.subf %647, %643 : vector<8x128xf32>
    %649 = arith.select %646, %648, %643 : vector<8x128xi1>, vector<8x128xf32>
    %650 = math.absf %313 : vector<8x128xf32>
    %651 = math.absf %256 : vector<8x128xf32>
    %652 = arith.maximumf %650, %651 : vector<8x128xf32>
    %653 = arith.minimumf %650, %651 : vector<8x128xf32>
    %cst_215 = arith.constant 0.000000e+00 : f32
    %654 = vector.broadcast %cst_215 : f32 to vector<8x128xf32>
    %655 = arith.cmpf oeq, %652, %654 : vector<8x128xf32>
    %cst_216 = arith.constant 1.000000e+00 : f32
    %656 = vector.broadcast %cst_216 : f32 to vector<8x128xf32>
    %657 = arith.select %655, %656, %652 : vector<8x128xi1>, vector<8x128xf32>
    %658 = arith.divf %653, %657 : vector<8x128xf32>
    %cst_217 = arith.constant 0.414213568 : f32
    %659 = vector.broadcast %cst_217 : f32 to vector<8x128xf32>
    %660 = arith.cmpf ogt, %658, %659 : vector<8x128xf32>
    %cst_218 = arith.constant 1.000000e+00 : f32
    %661 = vector.broadcast %cst_218 : f32 to vector<8x128xf32>
    %662 = arith.subf %658, %661 : vector<8x128xf32>
    %cst_219 = arith.constant 1.000000e+00 : f32
    %663 = vector.broadcast %cst_219 : f32 to vector<8x128xf32>
    %664 = arith.addf %658, %663 : vector<8x128xf32>
    %665 = arith.divf %662, %664 : vector<8x128xf32>
    %666 = arith.select %660, %665, %658 : vector<8x128xi1>, vector<8x128xf32>
    %667 = arith.mulf %666, %666 : vector<8x128xf32>
    %cst_220 = arith.constant 0.0805374458 : f32
    %668 = vector.broadcast %cst_220 : f32 to vector<8x128xf32>
    %669 = arith.mulf %668, %667 : vector<8x128xf32>
    %cst_221 = arith.constant 0.138776854 : f32
    %670 = vector.broadcast %cst_221 : f32 to vector<8x128xf32>
    %671 = arith.subf %669, %670 : vector<8x128xf32>
    %672 = arith.mulf %671, %667 : vector<8x128xf32>
    %cst_222 = arith.constant 0.199777111 : f32
    %673 = vector.broadcast %cst_222 : f32 to vector<8x128xf32>
    %674 = arith.addf %672, %673 : vector<8x128xf32>
    %675 = arith.mulf %674, %667 : vector<8x128xf32>
    %cst_223 = arith.constant 0.333329499 : f32
    %676 = vector.broadcast %cst_223 : f32 to vector<8x128xf32>
    %677 = arith.subf %675, %676 : vector<8x128xf32>
    %678 = arith.mulf %677, %667 : vector<8x128xf32>
    %679 = arith.mulf %678, %666 : vector<8x128xf32>
    %680 = arith.addf %679, %666 : vector<8x128xf32>
    %cst_224 = arith.constant 0.785398185 : f32
    %681 = vector.broadcast %cst_224 : f32 to vector<8x128xf32>
    %682 = arith.addf %681, %680 : vector<8x128xf32>
    %683 = arith.select %660, %682, %680 : vector<8x128xi1>, vector<8x128xf32>
    %684 = arith.cmpf ogt, %651, %650 : vector<8x128xf32>
    %cst_225 = arith.constant 1.57079637 : f32
    %685 = vector.broadcast %cst_225 : f32 to vector<8x128xf32>
    %686 = arith.subf %685, %683 : vector<8x128xf32>
    %687 = arith.select %684, %686, %683 : vector<8x128xi1>, vector<8x128xf32>
    %688 = tpu.bitcast %313 : vector<8x128xf32> -> vector<8x128xi32>
    %c0_i32_226 = arith.constant 0 : i32
    %689 = vector.broadcast %c0_i32_226 : i32 to vector<8x128xi32>
    %690 = arith.cmpi slt, %688, %689 : vector<8x128xi32>
    %cst_227 = arith.constant 3.14159274 : f32
    %691 = vector.broadcast %cst_227 : f32 to vector<8x128xf32>
    %692 = arith.subf %691, %687 : vector<8x128xf32>
    %693 = arith.select %690, %692, %687 : vector<8x128xi1>, vector<8x128xf32>
    %694 = tpu.bitcast %256 : vector<8x128xf32> -> vector<8x128xi32>
    %c0_i32_228 = arith.constant 0 : i32
    %695 = vector.broadcast %c0_i32_228 : i32 to vector<8x128xi32>
    %696 = arith.cmpi slt, %694, %695 : vector<8x128xi32>
    %cst_229 = arith.constant 0.000000e+00 : f32
    %697 = vector.broadcast %cst_229 : f32 to vector<8x128xf32>
    %698 = arith.subf %697, %693 : vector<8x128xf32>
    %699 = arith.select %696, %698, %693 : vector<8x128xi1>, vector<8x128xf32>
    %700 = math.absf %317 : vector<8x128xf32>
    %701 = math.absf %271 : vector<8x128xf32>
    %702 = arith.maximumf %700, %701 : vector<8x128xf32>
    %703 = arith.minimumf %700, %701 : vector<8x128xf32>
    %cst_230 = arith.constant 0.000000e+00 : f32
    %704 = vector.broadcast %cst_230 : f32 to vector<8x128xf32>
    %705 = arith.cmpf oeq, %702, %704 : vector<8x128xf32>
    %cst_231 = arith.constant 1.000000e+00 : f32
    %706 = vector.broadcast %cst_231 : f32 to vector<8x128xf32>
    %707 = arith.select %705, %706, %702 : vector<8x128xi1>, vector<8x128xf32>
    %708 = arith.divf %703, %707 : vector<8x128xf32>
    %cst_232 = arith.constant 0.414213568 : f32
    %709 = vector.broadcast %cst_232 : f32 to vector<8x128xf32>
    %710 = arith.cmpf ogt, %708, %709 : vector<8x128xf32>
    %cst_233 = arith.constant 1.000000e+00 : f32
    %711 = vector.broadcast %cst_233 : f32 to vector<8x128xf32>
    %712 = arith.subf %708, %711 : vector<8x128xf32>
    %cst_234 = arith.constant 1.000000e+00 : f32
    %713 = vector.broadcast %cst_234 : f32 to vector<8x128xf32>
    %714 = arith.addf %708, %713 : vector<8x128xf32>
    %715 = arith.divf %712, %714 : vector<8x128xf32>
    %716 = arith.select %710, %715, %708 : vector<8x128xi1>, vector<8x128xf32>
    %717 = arith.mulf %716, %716 : vector<8x128xf32>
    %cst_235 = arith.constant 0.0805374458 : f32
    %718 = vector.broadcast %cst_235 : f32 to vector<8x128xf32>
    %719 = arith.mulf %718, %717 : vector<8x128xf32>
    %cst_236 = arith.constant 0.138776854 : f32
    %720 = vector.broadcast %cst_236 : f32 to vector<8x128xf32>
    %721 = arith.subf %719, %720 : vector<8x128xf32>
    %722 = arith.mulf %721, %717 : vector<8x128xf32>
    %cst_237 = arith.constant 0.199777111 : f32
    %723 = vector.broadcast %cst_237 : f32 to vector<8x128xf32>
    %724 = arith.addf %722, %723 : vector<8x128xf32>
    %725 = arith.mulf %724, %717 : vector<8x128xf32>
    %cst_238 = arith.constant 0.333329499 : f32
    %726 = vector.broadcast %cst_238 : f32 to vector<8x128xf32>
    %727 = arith.subf %725, %726 : vector<8x128xf32>
    %728 = arith.mulf %727, %717 : vector<8x128xf32>
    %729 = arith.mulf %728, %716 : vector<8x128xf32>
    %730 = arith.addf %729, %716 : vector<8x128xf32>
    %cst_239 = arith.constant 0.785398185 : f32
    %731 = vector.broadcast %cst_239 : f32 to vector<8x128xf32>
    %732 = arith.addf %731, %730 : vector<8x128xf32>
    %733 = arith.select %710, %732, %730 : vector<8x128xi1>, vector<8x128xf32>
    %734 = arith.cmpf ogt, %701, %700 : vector<8x128xf32>
    %cst_240 = arith.constant 1.57079637 : f32
    %735 = vector.broadcast %cst_240 : f32 to vector<8x128xf32>
    %736 = arith.subf %735, %733 : vector<8x128xf32>
    %737 = arith.select %734, %736, %733 : vector<8x128xi1>, vector<8x128xf32>
    %738 = tpu.bitcast %317 : vector<8x128xf32> -> vector<8x128xi32>
    %c0_i32_241 = arith.constant 0 : i32
    %739 = vector.broadcast %c0_i32_241 : i32 to vector<8x128xi32>
    %740 = arith.cmpi slt, %738, %739 : vector<8x128xi32>
    %cst_242 = arith.constant 3.14159274 : f32
    %741 = vector.broadcast %cst_242 : f32 to vector<8x128xf32>
    %742 = arith.subf %741, %737 : vector<8x128xf32>
    %743 = arith.select %740, %742, %737 : vector<8x128xi1>, vector<8x128xf32>
    %744 = tpu.bitcast %271 : vector<8x128xf32> -> vector<8x128xi32>
    %c0_i32_243 = arith.constant 0 : i32
    %745 = vector.broadcast %c0_i32_243 : i32 to vector<8x128xi32>
    %746 = arith.cmpi slt, %744, %745 : vector<8x128xi32>
    %cst_244 = arith.constant 0.000000e+00 : f32
    %747 = vector.broadcast %cst_244 : f32 to vector<8x128xf32>
    %748 = arith.subf %747, %743 : vector<8x128xf32>
    %749 = arith.select %746, %748, %743 : vector<8x128xi1>, vector<8x128xf32>
    %c0_245 = arith.constant 0 : index
    %750 = memref.load %arg10[%c0_245] : memref<32xf32, #tpu.memory_space<smem>>
    %751 = vector.broadcast %750 : f32 to vector<8x128xf32>
    %752 = arith.mulf %321, %751 : vector<8x128xf32>
    %c1_246 = arith.constant 1 : index
    %753 = memref.load %arg10[%c1_246] : memref<32xf32, #tpu.memory_space<smem>>
    %754 = vector.broadcast %753 : f32 to vector<8x128xf32>
    %755 = arith.mulf %325, %754 : vector<8x128xf32>
    %756 = arith.addf %752, %755 : vector<8x128xf32>
    %c2_247 = arith.constant 2 : index
    %757 = memref.load %arg10[%c2_247] : memref<32xf32, #tpu.memory_space<smem>>
    %758 = vector.broadcast %757 : f32 to vector<8x128xf32>
    %759 = arith.mulf %329, %758 : vector<8x128xf32>
    %760 = arith.addf %756, %759 : vector<8x128xf32>
    %c3_248 = arith.constant 3 : index
    %761 = memref.load %arg10[%c3_248] : memref<32xf32, #tpu.memory_space<smem>>
    %762 = vector.broadcast %761 : f32 to vector<8x128xf32>
    %763 = arith.mulf %333, %762 : vector<8x128xf32>
    %764 = arith.addf %760, %763 : vector<8x128xf32>
    %c4_249 = arith.constant 4 : index
    %765 = memref.load %arg10[%c4_249] : memref<32xf32, #tpu.memory_space<smem>>
    %766 = vector.broadcast %765 : f32 to vector<8x128xf32>
    %767 = arith.mulf %337, %766 : vector<8x128xf32>
    %768 = arith.addf %764, %767 : vector<8x128xf32>
    %c5_250 = arith.constant 5 : index
    %769 = memref.load %arg10[%c5_250] : memref<32xf32, #tpu.memory_space<smem>>
    %770 = vector.broadcast %769 : f32 to vector<8x128xf32>
    %771 = arith.mulf %341, %770 : vector<8x128xf32>
    %772 = arith.addf %768, %771 : vector<8x128xf32>
    %c6_251 = arith.constant 6 : index
    %773 = memref.load %arg10[%c6_251] : memref<32xf32, #tpu.memory_space<smem>>
    %774 = vector.broadcast %773 : f32 to vector<8x128xf32>
    %775 = arith.mulf %345, %774 : vector<8x128xf32>
    %776 = arith.addf %772, %775 : vector<8x128xf32>
    %c7_252 = arith.constant 7 : index
    %777 = memref.load %arg10[%c7_252] : memref<32xf32, #tpu.memory_space<smem>>
    %778 = vector.broadcast %777 : f32 to vector<8x128xf32>
    %779 = arith.mulf %349, %778 : vector<8x128xf32>
    %780 = arith.addf %776, %779 : vector<8x128xf32>
    %c0_253 = arith.constant 0 : index
    %781 = memref.load %arg11[%c0_253] : memref<4xf32, #tpu.memory_space<smem>>
    %782 = vector.broadcast %781 : f32 to vector<8x128xf32>
    %783 = arith.addf %780, %782 : vector<8x128xf32>
    %c8_254 = arith.constant 8 : index
    %784 = memref.load %arg10[%c8_254] : memref<32xf32, #tpu.memory_space<smem>>
    %785 = vector.broadcast %784 : f32 to vector<8x128xf32>
    %786 = arith.mulf %321, %785 : vector<8x128xf32>
    %c9_255 = arith.constant 9 : index
    %787 = memref.load %arg10[%c9_255] : memref<32xf32, #tpu.memory_space<smem>>
    %788 = vector.broadcast %787 : f32 to vector<8x128xf32>
    %789 = arith.mulf %325, %788 : vector<8x128xf32>
    %790 = arith.addf %786, %789 : vector<8x128xf32>
    %c10_256 = arith.constant 10 : index
    %791 = memref.load %arg10[%c10_256] : memref<32xf32, #tpu.memory_space<smem>>
    %792 = vector.broadcast %791 : f32 to vector<8x128xf32>
    %793 = arith.mulf %329, %792 : vector<8x128xf32>
    %794 = arith.addf %790, %793 : vector<8x128xf32>
    %c11_257 = arith.constant 11 : index
    %795 = memref.load %arg10[%c11_257] : memref<32xf32, #tpu.memory_space<smem>>
    %796 = vector.broadcast %795 : f32 to vector<8x128xf32>
    %797 = arith.mulf %333, %796 : vector<8x128xf32>
    %798 = arith.addf %794, %797 : vector<8x128xf32>
    %c12_258 = arith.constant 12 : index
    %799 = memref.load %arg10[%c12_258] : memref<32xf32, #tpu.memory_space<smem>>
    %800 = vector.broadcast %799 : f32 to vector<8x128xf32>
    %801 = arith.mulf %337, %800 : vector<8x128xf32>
    %802 = arith.addf %798, %801 : vector<8x128xf32>
    %c13_259 = arith.constant 13 : index
    %803 = memref.load %arg10[%c13_259] : memref<32xf32, #tpu.memory_space<smem>>
    %804 = vector.broadcast %803 : f32 to vector<8x128xf32>
    %805 = arith.mulf %341, %804 : vector<8x128xf32>
    %806 = arith.addf %802, %805 : vector<8x128xf32>
    %c14_260 = arith.constant 14 : index
    %807 = memref.load %arg10[%c14_260] : memref<32xf32, #tpu.memory_space<smem>>
    %808 = vector.broadcast %807 : f32 to vector<8x128xf32>
    %809 = arith.mulf %345, %808 : vector<8x128xf32>
    %810 = arith.addf %806, %809 : vector<8x128xf32>
    %c15_261 = arith.constant 15 : index
    %811 = memref.load %arg10[%c15_261] : memref<32xf32, #tpu.memory_space<smem>>
    %812 = vector.broadcast %811 : f32 to vector<8x128xf32>
    %813 = arith.mulf %349, %812 : vector<8x128xf32>
    %814 = arith.addf %810, %813 : vector<8x128xf32>
    %c1_262 = arith.constant 1 : index
    %815 = memref.load %arg11[%c1_262] : memref<4xf32, #tpu.memory_space<smem>>
    %816 = vector.broadcast %815 : f32 to vector<8x128xf32>
    %817 = arith.addf %814, %816 : vector<8x128xf32>
    %c16 = arith.constant 16 : index
    %818 = memref.load %arg10[%c16] : memref<32xf32, #tpu.memory_space<smem>>
    %819 = vector.broadcast %818 : f32 to vector<8x128xf32>
    %820 = arith.mulf %321, %819 : vector<8x128xf32>
    %c17 = arith.constant 17 : index
    %821 = memref.load %arg10[%c17] : memref<32xf32, #tpu.memory_space<smem>>
    %822 = vector.broadcast %821 : f32 to vector<8x128xf32>
    %823 = arith.mulf %325, %822 : vector<8x128xf32>
    %824 = arith.addf %820, %823 : vector<8x128xf32>
    %c18 = arith.constant 18 : index
    %825 = memref.load %arg10[%c18] : memref<32xf32, #tpu.memory_space<smem>>
    %826 = vector.broadcast %825 : f32 to vector<8x128xf32>
    %827 = arith.mulf %329, %826 : vector<8x128xf32>
    %828 = arith.addf %824, %827 : vector<8x128xf32>
    %c19 = arith.constant 19 : index
    %829 = memref.load %arg10[%c19] : memref<32xf32, #tpu.memory_space<smem>>
    %830 = vector.broadcast %829 : f32 to vector<8x128xf32>
    %831 = arith.mulf %333, %830 : vector<8x128xf32>
    %832 = arith.addf %828, %831 : vector<8x128xf32>
    %c20 = arith.constant 20 : index
    %833 = memref.load %arg10[%c20] : memref<32xf32, #tpu.memory_space<smem>>
    %834 = vector.broadcast %833 : f32 to vector<8x128xf32>
    %835 = arith.mulf %337, %834 : vector<8x128xf32>
    %836 = arith.addf %832, %835 : vector<8x128xf32>
    %c21 = arith.constant 21 : index
    %837 = memref.load %arg10[%c21] : memref<32xf32, #tpu.memory_space<smem>>
    %838 = vector.broadcast %837 : f32 to vector<8x128xf32>
    %839 = arith.mulf %341, %838 : vector<8x128xf32>
    %840 = arith.addf %836, %839 : vector<8x128xf32>
    %c22 = arith.constant 22 : index
    %841 = memref.load %arg10[%c22] : memref<32xf32, #tpu.memory_space<smem>>
    %842 = vector.broadcast %841 : f32 to vector<8x128xf32>
    %843 = arith.mulf %345, %842 : vector<8x128xf32>
    %844 = arith.addf %840, %843 : vector<8x128xf32>
    %c23 = arith.constant 23 : index
    %845 = memref.load %arg10[%c23] : memref<32xf32, #tpu.memory_space<smem>>
    %846 = vector.broadcast %845 : f32 to vector<8x128xf32>
    %847 = arith.mulf %349, %846 : vector<8x128xf32>
    %848 = arith.addf %844, %847 : vector<8x128xf32>
    %c2_263 = arith.constant 2 : index
    %849 = memref.load %arg11[%c2_263] : memref<4xf32, #tpu.memory_space<smem>>
    %850 = vector.broadcast %849 : f32 to vector<8x128xf32>
    %851 = arith.addf %848, %850 : vector<8x128xf32>
    %c24 = arith.constant 24 : index
    %852 = memref.load %arg10[%c24] : memref<32xf32, #tpu.memory_space<smem>>
    %853 = vector.broadcast %852 : f32 to vector<8x128xf32>
    %854 = arith.mulf %321, %853 : vector<8x128xf32>
    %c25 = arith.constant 25 : index
    %855 = memref.load %arg10[%c25] : memref<32xf32, #tpu.memory_space<smem>>
    %856 = vector.broadcast %855 : f32 to vector<8x128xf32>
    %857 = arith.mulf %325, %856 : vector<8x128xf32>
    %858 = arith.addf %854, %857 : vector<8x128xf32>
    %c26 = arith.constant 26 : index
    %859 = memref.load %arg10[%c26] : memref<32xf32, #tpu.memory_space<smem>>
    %860 = vector.broadcast %859 : f32 to vector<8x128xf32>
    %861 = arith.mulf %329, %860 : vector<8x128xf32>
    %862 = arith.addf %858, %861 : vector<8x128xf32>
    %c27 = arith.constant 27 : index
    %863 = memref.load %arg10[%c27] : memref<32xf32, #tpu.memory_space<smem>>
    %864 = vector.broadcast %863 : f32 to vector<8x128xf32>
    %865 = arith.mulf %333, %864 : vector<8x128xf32>
    %866 = arith.addf %862, %865 : vector<8x128xf32>
    %c28 = arith.constant 28 : index
    %867 = memref.load %arg10[%c28] : memref<32xf32, #tpu.memory_space<smem>>
    %868 = vector.broadcast %867 : f32 to vector<8x128xf32>
    %869 = arith.mulf %337, %868 : vector<8x128xf32>
    %870 = arith.addf %866, %869 : vector<8x128xf32>
    %c29 = arith.constant 29 : index
    %871 = memref.load %arg10[%c29] : memref<32xf32, #tpu.memory_space<smem>>
    %872 = vector.broadcast %871 : f32 to vector<8x128xf32>
    %873 = arith.mulf %341, %872 : vector<8x128xf32>
    %874 = arith.addf %870, %873 : vector<8x128xf32>
    %c30 = arith.constant 30 : index
    %875 = memref.load %arg10[%c30] : memref<32xf32, #tpu.memory_space<smem>>
    %876 = vector.broadcast %875 : f32 to vector<8x128xf32>
    %877 = arith.mulf %345, %876 : vector<8x128xf32>
    %878 = arith.addf %874, %877 : vector<8x128xf32>
    %c31 = arith.constant 31 : index
    %879 = memref.load %arg10[%c31] : memref<32xf32, #tpu.memory_space<smem>>
    %880 = vector.broadcast %879 : f32 to vector<8x128xf32>
    %881 = arith.mulf %349, %880 : vector<8x128xf32>
    %882 = arith.addf %878, %881 : vector<8x128xf32>
    %c3_264 = arith.constant 3 : index
    %883 = memref.load %arg11[%c3_264] : memref<4xf32, #tpu.memory_space<smem>>
    %884 = vector.broadcast %883 : f32 to vector<8x128xf32>
    %885 = arith.addf %882, %884 : vector<8x128xf32>
    %cst_265 = arith.constant 0.000000e+00 : f32
    %886 = vector.broadcast %cst_265 : f32 to vector<8x128xf32>
    %887 = arith.cmpf oge, %783, %886 : vector<8x128xf32>
    %cst_266 = arith.constant 1.000000e-01 : f32
    %888 = vector.broadcast %cst_266 : f32 to vector<8x128xf32>
    %889 = arith.mulf %888, %783 : vector<8x128xf32>
    %890 = arith.select %887, %783, %889 : vector<8x128xi1>, vector<8x128xf32>
    %cst_267 = arith.constant 0.000000e+00 : f32
    %891 = vector.broadcast %cst_267 : f32 to vector<8x128xf32>
    %892 = arith.cmpf oge, %817, %891 : vector<8x128xf32>
    %cst_268 = arith.constant 1.000000e-01 : f32
    %893 = vector.broadcast %cst_268 : f32 to vector<8x128xf32>
    %894 = arith.mulf %893, %817 : vector<8x128xf32>
    %895 = arith.select %892, %817, %894 : vector<8x128xi1>, vector<8x128xf32>
    %cst_269 = arith.constant 0.000000e+00 : f32
    %896 = vector.broadcast %cst_269 : f32 to vector<8x128xf32>
    %897 = arith.cmpf oge, %851, %896 : vector<8x128xf32>
    %cst_270 = arith.constant 1.000000e-01 : f32
    %898 = vector.broadcast %cst_270 : f32 to vector<8x128xf32>
    %899 = arith.mulf %898, %851 : vector<8x128xf32>
    %900 = arith.select %897, %851, %899 : vector<8x128xi1>, vector<8x128xf32>
    %cst_271 = arith.constant 0.000000e+00 : f32
    %901 = vector.broadcast %cst_271 : f32 to vector<8x128xf32>
    %902 = arith.cmpf oge, %885, %901 : vector<8x128xf32>
    %cst_272 = arith.constant 1.000000e-01 : f32
    %903 = vector.broadcast %cst_272 : f32 to vector<8x128xf32>
    %904 = arith.mulf %903, %885 : vector<8x128xf32>
    %905 = arith.select %902, %885, %904 : vector<8x128xi1>, vector<8x128xf32>
    %c0_273 = arith.constant 0 : index
    %906 = memref.load %arg12[%c0_273] : memref<16xf32, #tpu.memory_space<smem>>
    %907 = vector.broadcast %906 : f32 to vector<8x128xf32>
    %908 = arith.mulf %890, %907 : vector<8x128xf32>
    %c1_274 = arith.constant 1 : index
    %909 = memref.load %arg12[%c1_274] : memref<16xf32, #tpu.memory_space<smem>>
    %910 = vector.broadcast %909 : f32 to vector<8x128xf32>
    %911 = arith.mulf %895, %910 : vector<8x128xf32>
    %912 = arith.addf %908, %911 : vector<8x128xf32>
    %c2_275 = arith.constant 2 : index
    %913 = memref.load %arg12[%c2_275] : memref<16xf32, #tpu.memory_space<smem>>
    %914 = vector.broadcast %913 : f32 to vector<8x128xf32>
    %915 = arith.mulf %900, %914 : vector<8x128xf32>
    %916 = arith.addf %912, %915 : vector<8x128xf32>
    %c3_276 = arith.constant 3 : index
    %917 = memref.load %arg12[%c3_276] : memref<16xf32, #tpu.memory_space<smem>>
    %918 = vector.broadcast %917 : f32 to vector<8x128xf32>
    %919 = arith.mulf %905, %918 : vector<8x128xf32>
    %920 = arith.addf %916, %919 : vector<8x128xf32>
    %c0_277 = arith.constant 0 : index
    %921 = memref.load %arg13[%c0_277] : memref<4xf32, #tpu.memory_space<smem>>
    %922 = vector.broadcast %921 : f32 to vector<8x128xf32>
    %923 = arith.addf %920, %922 : vector<8x128xf32>
    %c4_278 = arith.constant 4 : index
    %924 = memref.load %arg12[%c4_278] : memref<16xf32, #tpu.memory_space<smem>>
    %925 = vector.broadcast %924 : f32 to vector<8x128xf32>
    %926 = arith.mulf %890, %925 : vector<8x128xf32>
    %c5_279 = arith.constant 5 : index
    %927 = memref.load %arg12[%c5_279] : memref<16xf32, #tpu.memory_space<smem>>
    %928 = vector.broadcast %927 : f32 to vector<8x128xf32>
    %929 = arith.mulf %895, %928 : vector<8x128xf32>
    %930 = arith.addf %926, %929 : vector<8x128xf32>
    %c6_280 = arith.constant 6 : index
    %931 = memref.load %arg12[%c6_280] : memref<16xf32, #tpu.memory_space<smem>>
    %932 = vector.broadcast %931 : f32 to vector<8x128xf32>
    %933 = arith.mulf %900, %932 : vector<8x128xf32>
    %934 = arith.addf %930, %933 : vector<8x128xf32>
    %c7_281 = arith.constant 7 : index
    %935 = memref.load %arg12[%c7_281] : memref<16xf32, #tpu.memory_space<smem>>
    %936 = vector.broadcast %935 : f32 to vector<8x128xf32>
    %937 = arith.mulf %905, %936 : vector<8x128xf32>
    %938 = arith.addf %934, %937 : vector<8x128xf32>
    %c1_282 = arith.constant 1 : index
    %939 = memref.load %arg13[%c1_282] : memref<4xf32, #tpu.memory_space<smem>>
    %940 = vector.broadcast %939 : f32 to vector<8x128xf32>
    %941 = arith.addf %938, %940 : vector<8x128xf32>
    %c8_283 = arith.constant 8 : index
    %942 = memref.load %arg12[%c8_283] : memref<16xf32, #tpu.memory_space<smem>>
    %943 = vector.broadcast %942 : f32 to vector<8x128xf32>
    %944 = arith.mulf %890, %943 : vector<8x128xf32>
    %c9_284 = arith.constant 9 : index
    %945 = memref.load %arg12[%c9_284] : memref<16xf32, #tpu.memory_space<smem>>
    %946 = vector.broadcast %945 : f32 to vector<8x128xf32>
    %947 = arith.mulf %895, %946 : vector<8x128xf32>
    %948 = arith.addf %944, %947 : vector<8x128xf32>
    %c10_285 = arith.constant 10 : index
    %949 = memref.load %arg12[%c10_285] : memref<16xf32, #tpu.memory_space<smem>>
    %950 = vector.broadcast %949 : f32 to vector<8x128xf32>
    %951 = arith.mulf %900, %950 : vector<8x128xf32>
    %952 = arith.addf %948, %951 : vector<8x128xf32>
    %c11_286 = arith.constant 11 : index
    %953 = memref.load %arg12[%c11_286] : memref<16xf32, #tpu.memory_space<smem>>
    %954 = vector.broadcast %953 : f32 to vector<8x128xf32>
    %955 = arith.mulf %905, %954 : vector<8x128xf32>
    %956 = arith.addf %952, %955 : vector<8x128xf32>
    %c2_287 = arith.constant 2 : index
    %957 = memref.load %arg13[%c2_287] : memref<4xf32, #tpu.memory_space<smem>>
    %958 = vector.broadcast %957 : f32 to vector<8x128xf32>
    %959 = arith.addf %956, %958 : vector<8x128xf32>
    %c12_288 = arith.constant 12 : index
    %960 = memref.load %arg12[%c12_288] : memref<16xf32, #tpu.memory_space<smem>>
    %961 = vector.broadcast %960 : f32 to vector<8x128xf32>
    %962 = arith.mulf %890, %961 : vector<8x128xf32>
    %c13_289 = arith.constant 13 : index
    %963 = memref.load %arg12[%c13_289] : memref<16xf32, #tpu.memory_space<smem>>
    %964 = vector.broadcast %963 : f32 to vector<8x128xf32>
    %965 = arith.mulf %895, %964 : vector<8x128xf32>
    %966 = arith.addf %962, %965 : vector<8x128xf32>
    %c14_290 = arith.constant 14 : index
    %967 = memref.load %arg12[%c14_290] : memref<16xf32, #tpu.memory_space<smem>>
    %968 = vector.broadcast %967 : f32 to vector<8x128xf32>
    %969 = arith.mulf %900, %968 : vector<8x128xf32>
    %970 = arith.addf %966, %969 : vector<8x128xf32>
    %c15_291 = arith.constant 15 : index
    %971 = memref.load %arg12[%c15_291] : memref<16xf32, #tpu.memory_space<smem>>
    %972 = vector.broadcast %971 : f32 to vector<8x128xf32>
    %973 = arith.mulf %905, %972 : vector<8x128xf32>
    %974 = arith.addf %970, %973 : vector<8x128xf32>
    %c3_292 = arith.constant 3 : index
    %975 = memref.load %arg13[%c3_292] : memref<4xf32, #tpu.memory_space<smem>>
    %976 = vector.broadcast %975 : f32 to vector<8x128xf32>
    %977 = arith.addf %974, %976 : vector<8x128xf32>
    %c0_293 = arith.constant 0 : index
    %978 = memref.load %arg14[%c0_293] : memref<32xf32, #tpu.memory_space<smem>>
    %979 = vector.broadcast %978 : f32 to vector<8x128xf32>
    %980 = arith.mulf %399, %979 : vector<8x128xf32>
    %c1_294 = arith.constant 1 : index
    %981 = memref.load %arg14[%c1_294] : memref<32xf32, #tpu.memory_space<smem>>
    %982 = vector.broadcast %981 : f32 to vector<8x128xf32>
    %983 = arith.mulf %449, %982 : vector<8x128xf32>
    %984 = arith.addf %980, %983 : vector<8x128xf32>
    %c2_295 = arith.constant 2 : index
    %985 = memref.load %arg14[%c2_295] : memref<32xf32, #tpu.memory_space<smem>>
    %986 = vector.broadcast %985 : f32 to vector<8x128xf32>
    %987 = arith.mulf %499, %986 : vector<8x128xf32>
    %988 = arith.addf %984, %987 : vector<8x128xf32>
    %c3_296 = arith.constant 3 : index
    %989 = memref.load %arg14[%c3_296] : memref<32xf32, #tpu.memory_space<smem>>
    %990 = vector.broadcast %989 : f32 to vector<8x128xf32>
    %991 = arith.mulf %549, %990 : vector<8x128xf32>
    %992 = arith.addf %988, %991 : vector<8x128xf32>
    %c4_297 = arith.constant 4 : index
    %993 = memref.load %arg14[%c4_297] : memref<32xf32, #tpu.memory_space<smem>>
    %994 = vector.broadcast %993 : f32 to vector<8x128xf32>
    %995 = arith.mulf %599, %994 : vector<8x128xf32>
    %996 = arith.addf %992, %995 : vector<8x128xf32>
    %c5_298 = arith.constant 5 : index
    %997 = memref.load %arg14[%c5_298] : memref<32xf32, #tpu.memory_space<smem>>
    %998 = vector.broadcast %997 : f32 to vector<8x128xf32>
    %999 = arith.mulf %649, %998 : vector<8x128xf32>
    %1000 = arith.addf %996, %999 : vector<8x128xf32>
    %c6_299 = arith.constant 6 : index
    %1001 = memref.load %arg14[%c6_299] : memref<32xf32, #tpu.memory_space<smem>>
    %1002 = vector.broadcast %1001 : f32 to vector<8x128xf32>
    %1003 = arith.mulf %699, %1002 : vector<8x128xf32>
    %1004 = arith.addf %1000, %1003 : vector<8x128xf32>
    %c7_300 = arith.constant 7 : index
    %1005 = memref.load %arg14[%c7_300] : memref<32xf32, #tpu.memory_space<smem>>
    %1006 = vector.broadcast %1005 : f32 to vector<8x128xf32>
    %1007 = arith.mulf %749, %1006 : vector<8x128xf32>
    %1008 = arith.addf %1004, %1007 : vector<8x128xf32>
    %c0_301 = arith.constant 0 : index
    %1009 = memref.load %arg15[%c0_301] : memref<4xf32, #tpu.memory_space<smem>>
    %1010 = vector.broadcast %1009 : f32 to vector<8x128xf32>
    %1011 = arith.addf %1008, %1010 : vector<8x128xf32>
    %c8_302 = arith.constant 8 : index
    %1012 = memref.load %arg14[%c8_302] : memref<32xf32, #tpu.memory_space<smem>>
    %1013 = vector.broadcast %1012 : f32 to vector<8x128xf32>
    %1014 = arith.mulf %399, %1013 : vector<8x128xf32>
    %c9_303 = arith.constant 9 : index
    %1015 = memref.load %arg14[%c9_303] : memref<32xf32, #tpu.memory_space<smem>>
    %1016 = vector.broadcast %1015 : f32 to vector<8x128xf32>
    %1017 = arith.mulf %449, %1016 : vector<8x128xf32>
    %1018 = arith.addf %1014, %1017 : vector<8x128xf32>
    %c10_304 = arith.constant 10 : index
    %1019 = memref.load %arg14[%c10_304] : memref<32xf32, #tpu.memory_space<smem>>
    %1020 = vector.broadcast %1019 : f32 to vector<8x128xf32>
    %1021 = arith.mulf %499, %1020 : vector<8x128xf32>
    %1022 = arith.addf %1018, %1021 : vector<8x128xf32>
    %c11_305 = arith.constant 11 : index
    %1023 = memref.load %arg14[%c11_305] : memref<32xf32, #tpu.memory_space<smem>>
    %1024 = vector.broadcast %1023 : f32 to vector<8x128xf32>
    %1025 = arith.mulf %549, %1024 : vector<8x128xf32>
    %1026 = arith.addf %1022, %1025 : vector<8x128xf32>
    %c12_306 = arith.constant 12 : index
    %1027 = memref.load %arg14[%c12_306] : memref<32xf32, #tpu.memory_space<smem>>
    %1028 = vector.broadcast %1027 : f32 to vector<8x128xf32>
    %1029 = arith.mulf %599, %1028 : vector<8x128xf32>
    %1030 = arith.addf %1026, %1029 : vector<8x128xf32>
    %c13_307 = arith.constant 13 : index
    %1031 = memref.load %arg14[%c13_307] : memref<32xf32, #tpu.memory_space<smem>>
    %1032 = vector.broadcast %1031 : f32 to vector<8x128xf32>
    %1033 = arith.mulf %649, %1032 : vector<8x128xf32>
    %1034 = arith.addf %1030, %1033 : vector<8x128xf32>
    %c14_308 = arith.constant 14 : index
    %1035 = memref.load %arg14[%c14_308] : memref<32xf32, #tpu.memory_space<smem>>
    %1036 = vector.broadcast %1035 : f32 to vector<8x128xf32>
    %1037 = arith.mulf %699, %1036 : vector<8x128xf32>
    %1038 = arith.addf %1034, %1037 : vector<8x128xf32>
    %c15_309 = arith.constant 15 : index
    %1039 = memref.load %arg14[%c15_309] : memref<32xf32, #tpu.memory_space<smem>>
    %1040 = vector.broadcast %1039 : f32 to vector<8x128xf32>
    %1041 = arith.mulf %749, %1040 : vector<8x128xf32>
    %1042 = arith.addf %1038, %1041 : vector<8x128xf32>
    %c1_310 = arith.constant 1 : index
    %1043 = memref.load %arg15[%c1_310] : memref<4xf32, #tpu.memory_space<smem>>
    %1044 = vector.broadcast %1043 : f32 to vector<8x128xf32>
    %1045 = arith.addf %1042, %1044 : vector<8x128xf32>
    %c16_311 = arith.constant 16 : index
    %1046 = memref.load %arg14[%c16_311] : memref<32xf32, #tpu.memory_space<smem>>
    %1047 = vector.broadcast %1046 : f32 to vector<8x128xf32>
    %1048 = arith.mulf %399, %1047 : vector<8x128xf32>
    %c17_312 = arith.constant 17 : index
    %1049 = memref.load %arg14[%c17_312] : memref<32xf32, #tpu.memory_space<smem>>
    %1050 = vector.broadcast %1049 : f32 to vector<8x128xf32>
    %1051 = arith.mulf %449, %1050 : vector<8x128xf32>
    %1052 = arith.addf %1048, %1051 : vector<8x128xf32>
    %c18_313 = arith.constant 18 : index
    %1053 = memref.load %arg14[%c18_313] : memref<32xf32, #tpu.memory_space<smem>>
    %1054 = vector.broadcast %1053 : f32 to vector<8x128xf32>
    %1055 = arith.mulf %499, %1054 : vector<8x128xf32>
    %1056 = arith.addf %1052, %1055 : vector<8x128xf32>
    %c19_314 = arith.constant 19 : index
    %1057 = memref.load %arg14[%c19_314] : memref<32xf32, #tpu.memory_space<smem>>
    %1058 = vector.broadcast %1057 : f32 to vector<8x128xf32>
    %1059 = arith.mulf %549, %1058 : vector<8x128xf32>
    %1060 = arith.addf %1056, %1059 : vector<8x128xf32>
    %c20_315 = arith.constant 20 : index
    %1061 = memref.load %arg14[%c20_315] : memref<32xf32, #tpu.memory_space<smem>>
    %1062 = vector.broadcast %1061 : f32 to vector<8x128xf32>
    %1063 = arith.mulf %599, %1062 : vector<8x128xf32>
    %1064 = arith.addf %1060, %1063 : vector<8x128xf32>
    %c21_316 = arith.constant 21 : index
    %1065 = memref.load %arg14[%c21_316] : memref<32xf32, #tpu.memory_space<smem>>
    %1066 = vector.broadcast %1065 : f32 to vector<8x128xf32>
    %1067 = arith.mulf %649, %1066 : vector<8x128xf32>
    %1068 = arith.addf %1064, %1067 : vector<8x128xf32>
    %c22_317 = arith.constant 22 : index
    %1069 = memref.load %arg14[%c22_317] : memref<32xf32, #tpu.memory_space<smem>>
    %1070 = vector.broadcast %1069 : f32 to vector<8x128xf32>
    %1071 = arith.mulf %699, %1070 : vector<8x128xf32>
    %1072 = arith.addf %1068, %1071 : vector<8x128xf32>
    %c23_318 = arith.constant 23 : index
    %1073 = memref.load %arg14[%c23_318] : memref<32xf32, #tpu.memory_space<smem>>
    %1074 = vector.broadcast %1073 : f32 to vector<8x128xf32>
    %1075 = arith.mulf %749, %1074 : vector<8x128xf32>
    %1076 = arith.addf %1072, %1075 : vector<8x128xf32>
    %c2_319 = arith.constant 2 : index
    %1077 = memref.load %arg15[%c2_319] : memref<4xf32, #tpu.memory_space<smem>>
    %1078 = vector.broadcast %1077 : f32 to vector<8x128xf32>
    %1079 = arith.addf %1076, %1078 : vector<8x128xf32>
    %c24_320 = arith.constant 24 : index
    %1080 = memref.load %arg14[%c24_320] : memref<32xf32, #tpu.memory_space<smem>>
    %1081 = vector.broadcast %1080 : f32 to vector<8x128xf32>
    %1082 = arith.mulf %399, %1081 : vector<8x128xf32>
    %c25_321 = arith.constant 25 : index
    %1083 = memref.load %arg14[%c25_321] : memref<32xf32, #tpu.memory_space<smem>>
    %1084 = vector.broadcast %1083 : f32 to vector<8x128xf32>
    %1085 = arith.mulf %449, %1084 : vector<8x128xf32>
    %1086 = arith.addf %1082, %1085 : vector<8x128xf32>
    %c26_322 = arith.constant 26 : index
    %1087 = memref.load %arg14[%c26_322] : memref<32xf32, #tpu.memory_space<smem>>
    %1088 = vector.broadcast %1087 : f32 to vector<8x128xf32>
    %1089 = arith.mulf %499, %1088 : vector<8x128xf32>
    %1090 = arith.addf %1086, %1089 : vector<8x128xf32>
    %c27_323 = arith.constant 27 : index
    %1091 = memref.load %arg14[%c27_323] : memref<32xf32, #tpu.memory_space<smem>>
    %1092 = vector.broadcast %1091 : f32 to vector<8x128xf32>
    %1093 = arith.mulf %549, %1092 : vector<8x128xf32>
    %1094 = arith.addf %1090, %1093 : vector<8x128xf32>
    %c28_324 = arith.constant 28 : index
    %1095 = memref.load %arg14[%c28_324] : memref<32xf32, #tpu.memory_space<smem>>
    %1096 = vector.broadcast %1095 : f32 to vector<8x128xf32>
    %1097 = arith.mulf %599, %1096 : vector<8x128xf32>
    %1098 = arith.addf %1094, %1097 : vector<8x128xf32>
    %c29_325 = arith.constant 29 : index
    %1099 = memref.load %arg14[%c29_325] : memref<32xf32, #tpu.memory_space<smem>>
    %1100 = vector.broadcast %1099 : f32 to vector<8x128xf32>
    %1101 = arith.mulf %649, %1100 : vector<8x128xf32>
    %1102 = arith.addf %1098, %1101 : vector<8x128xf32>
    %c30_326 = arith.constant 30 : index
    %1103 = memref.load %arg14[%c30_326] : memref<32xf32, #tpu.memory_space<smem>>
    %1104 = vector.broadcast %1103 : f32 to vector<8x128xf32>
    %1105 = arith.mulf %699, %1104 : vector<8x128xf32>
    %1106 = arith.addf %1102, %1105 : vector<8x128xf32>
    %c31_327 = arith.constant 31 : index
    %1107 = memref.load %arg14[%c31_327] : memref<32xf32, #tpu.memory_space<smem>>
    %1108 = vector.broadcast %1107 : f32 to vector<8x128xf32>
    %1109 = arith.mulf %749, %1108 : vector<8x128xf32>
    %1110 = arith.addf %1106, %1109 : vector<8x128xf32>
    %c3_328 = arith.constant 3 : index
    %1111 = memref.load %arg15[%c3_328] : memref<4xf32, #tpu.memory_space<smem>>
    %1112 = vector.broadcast %1111 : f32 to vector<8x128xf32>
    %1113 = arith.addf %1110, %1112 : vector<8x128xf32>
    %cst_329 = arith.constant 0.000000e+00 : f32
    %1114 = vector.broadcast %cst_329 : f32 to vector<8x128xf32>
    %1115 = arith.cmpf oge, %1011, %1114 : vector<8x128xf32>
    %cst_330 = arith.constant 1.000000e-01 : f32
    %1116 = vector.broadcast %cst_330 : f32 to vector<8x128xf32>
    %1117 = arith.mulf %1116, %1011 : vector<8x128xf32>
    %1118 = arith.select %1115, %1011, %1117 : vector<8x128xi1>, vector<8x128xf32>
    %cst_331 = arith.constant 0.000000e+00 : f32
    %1119 = vector.broadcast %cst_331 : f32 to vector<8x128xf32>
    %1120 = arith.cmpf oge, %1045, %1119 : vector<8x128xf32>
    %cst_332 = arith.constant 1.000000e-01 : f32
    %1121 = vector.broadcast %cst_332 : f32 to vector<8x128xf32>
    %1122 = arith.mulf %1121, %1045 : vector<8x128xf32>
    %1123 = arith.select %1120, %1045, %1122 : vector<8x128xi1>, vector<8x128xf32>
    %cst_333 = arith.constant 0.000000e+00 : f32
    %1124 = vector.broadcast %cst_333 : f32 to vector<8x128xf32>
    %1125 = arith.cmpf oge, %1079, %1124 : vector<8x128xf32>
    %cst_334 = arith.constant 1.000000e-01 : f32
    %1126 = vector.broadcast %cst_334 : f32 to vector<8x128xf32>
    %1127 = arith.mulf %1126, %1079 : vector<8x128xf32>
    %1128 = arith.select %1125, %1079, %1127 : vector<8x128xi1>, vector<8x128xf32>
    %cst_335 = arith.constant 0.000000e+00 : f32
    %1129 = vector.broadcast %cst_335 : f32 to vector<8x128xf32>
    %1130 = arith.cmpf oge, %1113, %1129 : vector<8x128xf32>
    %cst_336 = arith.constant 1.000000e-01 : f32
    %1131 = vector.broadcast %cst_336 : f32 to vector<8x128xf32>
    %1132 = arith.mulf %1131, %1113 : vector<8x128xf32>
    %1133 = arith.select %1130, %1113, %1132 : vector<8x128xi1>, vector<8x128xf32>
    %c0_337 = arith.constant 0 : index
    %1134 = memref.load %arg16[%c0_337] : memref<16xf32, #tpu.memory_space<smem>>
    %1135 = vector.broadcast %1134 : f32 to vector<8x128xf32>
    %1136 = arith.mulf %1118, %1135 : vector<8x128xf32>
    %c1_338 = arith.constant 1 : index
    %1137 = memref.load %arg16[%c1_338] : memref<16xf32, #tpu.memory_space<smem>>
    %1138 = vector.broadcast %1137 : f32 to vector<8x128xf32>
    %1139 = arith.mulf %1123, %1138 : vector<8x128xf32>
    %1140 = arith.addf %1136, %1139 : vector<8x128xf32>
    %c2_339 = arith.constant 2 : index
    %1141 = memref.load %arg16[%c2_339] : memref<16xf32, #tpu.memory_space<smem>>
    %1142 = vector.broadcast %1141 : f32 to vector<8x128xf32>
    %1143 = arith.mulf %1128, %1142 : vector<8x128xf32>
    %1144 = arith.addf %1140, %1143 : vector<8x128xf32>
    %c3_340 = arith.constant 3 : index
    %1145 = memref.load %arg16[%c3_340] : memref<16xf32, #tpu.memory_space<smem>>
    %1146 = vector.broadcast %1145 : f32 to vector<8x128xf32>
    %1147 = arith.mulf %1133, %1146 : vector<8x128xf32>
    %1148 = arith.addf %1144, %1147 : vector<8x128xf32>
    %c0_341 = arith.constant 0 : index
    %1149 = memref.load %arg17[%c0_341] : memref<4xf32, #tpu.memory_space<smem>>
    %1150 = vector.broadcast %1149 : f32 to vector<8x128xf32>
    %1151 = arith.addf %1148, %1150 : vector<8x128xf32>
    %c4_342 = arith.constant 4 : index
    %1152 = memref.load %arg16[%c4_342] : memref<16xf32, #tpu.memory_space<smem>>
    %1153 = vector.broadcast %1152 : f32 to vector<8x128xf32>
    %1154 = arith.mulf %1118, %1153 : vector<8x128xf32>
    %c5_343 = arith.constant 5 : index
    %1155 = memref.load %arg16[%c5_343] : memref<16xf32, #tpu.memory_space<smem>>
    %1156 = vector.broadcast %1155 : f32 to vector<8x128xf32>
    %1157 = arith.mulf %1123, %1156 : vector<8x128xf32>
    %1158 = arith.addf %1154, %1157 : vector<8x128xf32>
    %c6_344 = arith.constant 6 : index
    %1159 = memref.load %arg16[%c6_344] : memref<16xf32, #tpu.memory_space<smem>>
    %1160 = vector.broadcast %1159 : f32 to vector<8x128xf32>
    %1161 = arith.mulf %1128, %1160 : vector<8x128xf32>
    %1162 = arith.addf %1158, %1161 : vector<8x128xf32>
    %c7_345 = arith.constant 7 : index
    %1163 = memref.load %arg16[%c7_345] : memref<16xf32, #tpu.memory_space<smem>>
    %1164 = vector.broadcast %1163 : f32 to vector<8x128xf32>
    %1165 = arith.mulf %1133, %1164 : vector<8x128xf32>
    %1166 = arith.addf %1162, %1165 : vector<8x128xf32>
    %c1_346 = arith.constant 1 : index
    %1167 = memref.load %arg17[%c1_346] : memref<4xf32, #tpu.memory_space<smem>>
    %1168 = vector.broadcast %1167 : f32 to vector<8x128xf32>
    %1169 = arith.addf %1166, %1168 : vector<8x128xf32>
    %c8_347 = arith.constant 8 : index
    %1170 = memref.load %arg16[%c8_347] : memref<16xf32, #tpu.memory_space<smem>>
    %1171 = vector.broadcast %1170 : f32 to vector<8x128xf32>
    %1172 = arith.mulf %1118, %1171 : vector<8x128xf32>
    %c9_348 = arith.constant 9 : index
    %1173 = memref.load %arg16[%c9_348] : memref<16xf32, #tpu.memory_space<smem>>
    %1174 = vector.broadcast %1173 : f32 to vector<8x128xf32>
    %1175 = arith.mulf %1123, %1174 : vector<8x128xf32>
    %1176 = arith.addf %1172, %1175 : vector<8x128xf32>
    %c10_349 = arith.constant 10 : index
    %1177 = memref.load %arg16[%c10_349] : memref<16xf32, #tpu.memory_space<smem>>
    %1178 = vector.broadcast %1177 : f32 to vector<8x128xf32>
    %1179 = arith.mulf %1128, %1178 : vector<8x128xf32>
    %1180 = arith.addf %1176, %1179 : vector<8x128xf32>
    %c11_350 = arith.constant 11 : index
    %1181 = memref.load %arg16[%c11_350] : memref<16xf32, #tpu.memory_space<smem>>
    %1182 = vector.broadcast %1181 : f32 to vector<8x128xf32>
    %1183 = arith.mulf %1133, %1182 : vector<8x128xf32>
    %1184 = arith.addf %1180, %1183 : vector<8x128xf32>
    %c2_351 = arith.constant 2 : index
    %1185 = memref.load %arg17[%c2_351] : memref<4xf32, #tpu.memory_space<smem>>
    %1186 = vector.broadcast %1185 : f32 to vector<8x128xf32>
    %1187 = arith.addf %1184, %1186 : vector<8x128xf32>
    %c12_352 = arith.constant 12 : index
    %1188 = memref.load %arg16[%c12_352] : memref<16xf32, #tpu.memory_space<smem>>
    %1189 = vector.broadcast %1188 : f32 to vector<8x128xf32>
    %1190 = arith.mulf %1118, %1189 : vector<8x128xf32>
    %c13_353 = arith.constant 13 : index
    %1191 = memref.load %arg16[%c13_353] : memref<16xf32, #tpu.memory_space<smem>>
    %1192 = vector.broadcast %1191 : f32 to vector<8x128xf32>
    %1193 = arith.mulf %1123, %1192 : vector<8x128xf32>
    %1194 = arith.addf %1190, %1193 : vector<8x128xf32>
    %c14_354 = arith.constant 14 : index
    %1195 = memref.load %arg16[%c14_354] : memref<16xf32, #tpu.memory_space<smem>>
    %1196 = vector.broadcast %1195 : f32 to vector<8x128xf32>
    %1197 = arith.mulf %1128, %1196 : vector<8x128xf32>
    %1198 = arith.addf %1194, %1197 : vector<8x128xf32>
    %c15_355 = arith.constant 15 : index
    %1199 = memref.load %arg16[%c15_355] : memref<16xf32, #tpu.memory_space<smem>>
    %1200 = vector.broadcast %1199 : f32 to vector<8x128xf32>
    %1201 = arith.mulf %1133, %1200 : vector<8x128xf32>
    %1202 = arith.addf %1198, %1201 : vector<8x128xf32>
    %c3_356 = arith.constant 3 : index
    %1203 = memref.load %arg17[%c3_356] : memref<4xf32, #tpu.memory_space<smem>>
    %1204 = vector.broadcast %1203 : f32 to vector<8x128xf32>
    %1205 = arith.addf %1202, %1204 : vector<8x128xf32>
    %cst_357 = arith.constant 0.636619746 : f32
    %1206 = vector.broadcast %cst_357 : f32 to vector<8x128xf32>
    %1207 = arith.mulf %1151, %1206 : vector<8x128xf32>
    %cst_358 = arith.constant 0.000000e+00 : f32
    %1208 = vector.broadcast %cst_358 : f32 to vector<8x128xf32>
    %1209 = arith.cmpf oge, %1207, %1208 : vector<8x128xf32>
    %cst_359 = arith.constant 5.000000e-01 : f32
    %1210 = vector.broadcast %cst_359 : f32 to vector<8x128xf32>
    %1211 = arith.addf %1207, %1210 : vector<8x128xf32>
    %cst_360 = arith.constant 5.000000e-01 : f32
    %1212 = vector.broadcast %cst_360 : f32 to vector<8x128xf32>
    %1213 = arith.subf %1207, %1212 : vector<8x128xf32>
    %1214 = arith.select %1209, %1211, %1213 : vector<8x128xi1>, vector<8x128xf32>
    %1215 = arith.fptosi %1214 : vector<8x128xf32> to vector<8x128xi32>
    %1216 = arith.sitofp %1215 : vector<8x128xi32> to vector<8x128xf32>
    %cst_361 = arith.constant 1.57079601 : f32
    %1217 = vector.broadcast %cst_361 : f32 to vector<8x128xf32>
    %1218 = arith.mulf %1216, %1217 : vector<8x128xf32>
    %1219 = arith.subf %1151, %1218 : vector<8x128xf32>
    %cst_362 = arith.constant 3.13916473E-7 : f32
    %1220 = vector.broadcast %cst_362 : f32 to vector<8x128xf32>
    %1221 = arith.mulf %1216, %1220 : vector<8x128xf32>
    %1222 = arith.subf %1219, %1221 : vector<8x128xf32>
    %cst_363 = arith.constant 5.39030253E-15 : f32
    %1223 = vector.broadcast %cst_363 : f32 to vector<8x128xf32>
    %1224 = arith.mulf %1216, %1223 : vector<8x128xf32>
    %1225 = arith.subf %1222, %1224 : vector<8x128xf32>
    %1226 = arith.mulf %1225, %1225 : vector<8x128xf32>
    %cst_364 = arith.constant -1.95152956E-4 : f32
    %1227 = vector.broadcast %cst_364 : f32 to vector<8x128xf32>
    %1228 = arith.mulf %1227, %1226 : vector<8x128xf32>
    %cst_365 = arith.constant 0.00833216123 : f32
    %1229 = vector.broadcast %cst_365 : f32 to vector<8x128xf32>
    %1230 = arith.addf %1228, %1229 : vector<8x128xf32>
    %1231 = arith.mulf %1230, %1226 : vector<8x128xf32>
    %cst_366 = arith.constant 0.166666552 : f32
    %1232 = vector.broadcast %cst_366 : f32 to vector<8x128xf32>
    %1233 = arith.subf %1231, %1232 : vector<8x128xf32>
    %1234 = arith.mulf %1233, %1226 : vector<8x128xf32>
    %1235 = arith.mulf %1234, %1225 : vector<8x128xf32>
    %1236 = arith.addf %1235, %1225 : vector<8x128xf32>
    %cst_367 = arith.constant 2.44331568E-5 : f32
    %1237 = vector.broadcast %cst_367 : f32 to vector<8x128xf32>
    %1238 = arith.mulf %1237, %1226 : vector<8x128xf32>
    %cst_368 = arith.constant 0.00138873165 : f32
    %1239 = vector.broadcast %cst_368 : f32 to vector<8x128xf32>
    %1240 = arith.subf %1238, %1239 : vector<8x128xf32>
    %1241 = arith.mulf %1240, %1226 : vector<8x128xf32>
    %cst_369 = arith.constant 0.0416666456 : f32
    %1242 = vector.broadcast %cst_369 : f32 to vector<8x128xf32>
    %1243 = arith.addf %1241, %1242 : vector<8x128xf32>
    %1244 = arith.mulf %1243, %1226 : vector<8x128xf32>
    %1245 = arith.mulf %1244, %1226 : vector<8x128xf32>
    %cst_370 = arith.constant 5.000000e-01 : f32
    %1246 = vector.broadcast %cst_370 : f32 to vector<8x128xf32>
    %1247 = arith.mulf %1246, %1226 : vector<8x128xf32>
    %1248 = arith.subf %1245, %1247 : vector<8x128xf32>
    %cst_371 = arith.constant 1.000000e+00 : f32
    %1249 = vector.broadcast %cst_371 : f32 to vector<8x128xf32>
    %1250 = arith.addf %1248, %1249 : vector<8x128xf32>
    %c1_i32 = arith.constant 1 : i32
    %1251 = vector.broadcast %c1_i32 : i32 to vector<8x128xi32>
    %1252 = arith.andi %1215, %1251 : vector<8x128xi32>
    %c1_i32_372 = arith.constant 1 : i32
    %1253 = vector.broadcast %c1_i32_372 : i32 to vector<8x128xi32>
    %1254 = arith.cmpi eq, %1252, %1253 : vector<8x128xi32>
    %1255 = arith.select %1254, %1250, %1236 : vector<8x128xi1>, vector<8x128xf32>
    %1256 = arith.select %1254, %1236, %1250 : vector<8x128xi1>, vector<8x128xf32>
    %c2_i32 = arith.constant 2 : i32
    %1257 = vector.broadcast %c2_i32 : i32 to vector<8x128xi32>
    %1258 = arith.andi %1215, %1257 : vector<8x128xi32>
    %c2_i32_373 = arith.constant 2 : i32
    %1259 = vector.broadcast %c2_i32_373 : i32 to vector<8x128xi32>
    %1260 = arith.cmpi eq, %1258, %1259 : vector<8x128xi32>
    %cst_374 = arith.constant 0.000000e+00 : f32
    %1261 = vector.broadcast %cst_374 : f32 to vector<8x128xf32>
    %1262 = arith.subf %1261, %1255 : vector<8x128xf32>
    %1263 = arith.select %1260, %1262, %1255 : vector<8x128xi1>, vector<8x128xf32>
    %c1_i32_375 = arith.constant 1 : i32
    %1264 = vector.broadcast %c1_i32_375 : i32 to vector<8x128xi32>
    %1265 = arith.addi %1215, %1264 : vector<8x128xi32>
    %c2_i32_376 = arith.constant 2 : i32
    %1266 = vector.broadcast %c2_i32_376 : i32 to vector<8x128xi32>
    %1267 = arith.andi %1265, %1266 : vector<8x128xi32>
    %c2_i32_377 = arith.constant 2 : i32
    %1268 = vector.broadcast %c2_i32_377 : i32 to vector<8x128xi32>
    %1269 = arith.cmpi eq, %1267, %1268 : vector<8x128xi32>
    %cst_378 = arith.constant 0.000000e+00 : f32
    %1270 = vector.broadcast %cst_378 : f32 to vector<8x128xf32>
    %1271 = arith.subf %1270, %1256 : vector<8x128xf32>
    %1272 = arith.select %1269, %1271, %1256 : vector<8x128xi1>, vector<8x128xf32>
    %1273 = arith.mulf %923, %1272 : vector<8x128xf32>
    %cst_379 = arith.constant 2.000000e-08 : f32
    %1274 = vector.broadcast %cst_379 : f32 to vector<8x128xf32>
    %1275 = arith.addf %1273, %1274 : vector<8x128xf32>
    %c0_380 = arith.constant 0 : index
    %c0_381 = arith.constant 0 : index
    %c0_382 = arith.constant 0 : index
    %c0_383 = arith.constant 0 : index
    %1276 = vector.load %arg18[%c0_380, %c0_381, %c0_382, %c0_383] : memref<1x4x8x128xf32, #tpu.memory_space<vmem>>, vector<1x1x8x128xf32>
    %1277 = vector.shape_cast %1276 : vector<1x1x8x128xf32> to vector<8x128xf32>
    %1278 = vector.shape_cast %1275 : vector<8x128xf32> to vector<1x1x8x128xf32>
    tpu.vector_store %arg18[%c0_380, %c0_381, %c0_382, %c0_383], %1278 {strides = array<i32>} : memref<1x4x8x128xf32, #tpu.memory_space<vmem>>, vector<1x1x8x128xf32>,
    %1279 = arith.mulf %923, %1263 : vector<8x128xf32>
    %cst_384 = arith.constant 9.99999993E-9 : f32
    %1280 = vector.broadcast %cst_384 : f32 to vector<8x128xf32>
    %1281 = arith.addf %1279, %1280 : vector<8x128xf32>
    %c0_385 = arith.constant 0 : index
    %c0_386 = arith.constant 0 : index
    %c0_387 = arith.constant 0 : index
    %c0_388 = arith.constant 0 : index
    %1282 = vector.load %arg19[%c0_385, %c0_386, %c0_387, %c0_388] : memref<1x4x8x128xf32, #tpu.memory_space<vmem>>, vector<1x1x8x128xf32>
    %1283 = vector.shape_cast %1282 : vector<1x1x8x128xf32> to vector<8x128xf32>
    %1284 = vector.shape_cast %1281 : vector<8x128xf32> to vector<1x1x8x128xf32>
    tpu.vector_store %arg19[%c0_385, %c0_386, %c0_387, %c0_388], %1284 {strides = array<i32>} : memref<1x4x8x128xf32, #tpu.memory_space<vmem>>, vector<1x1x8x128xf32>,
    %cst_389 = arith.constant 0.636619746 : f32
    %1285 = vector.broadcast %cst_389 : f32 to vector<8x128xf32>
    %1286 = arith.mulf %1169, %1285 : vector<8x128xf32>
    %cst_390 = arith.constant 0.000000e+00 : f32
    %1287 = vector.broadcast %cst_390 : f32 to vector<8x128xf32>
    %1288 = arith.cmpf oge, %1286, %1287 : vector<8x128xf32>
    %cst_391 = arith.constant 5.000000e-01 : f32
    %1289 = vector.broadcast %cst_391 : f32 to vector<8x128xf32>
    %1290 = arith.addf %1286, %1289 : vector<8x128xf32>
    %cst_392 = arith.constant 5.000000e-01 : f32
    %1291 = vector.broadcast %cst_392 : f32 to vector<8x128xf32>
    %1292 = arith.subf %1286, %1291 : vector<8x128xf32>
    %1293 = arith.select %1288, %1290, %1292 : vector<8x128xi1>, vector<8x128xf32>
    %1294 = arith.fptosi %1293 : vector<8x128xf32> to vector<8x128xi32>
    %1295 = arith.sitofp %1294 : vector<8x128xi32> to vector<8x128xf32>
    %cst_393 = arith.constant 1.57079601 : f32
    %1296 = vector.broadcast %cst_393 : f32 to vector<8x128xf32>
    %1297 = arith.mulf %1295, %1296 : vector<8x128xf32>
    %1298 = arith.subf %1169, %1297 : vector<8x128xf32>
    %cst_394 = arith.constant 3.13916473E-7 : f32
    %1299 = vector.broadcast %cst_394 : f32 to vector<8x128xf32>
    %1300 = arith.mulf %1295, %1299 : vector<8x128xf32>
    %1301 = arith.subf %1298, %1300 : vector<8x128xf32>
    %cst_395 = arith.constant 5.39030253E-15 : f32
    %1302 = vector.broadcast %cst_395 : f32 to vector<8x128xf32>
    %1303 = arith.mulf %1295, %1302 : vector<8x128xf32>
    %1304 = arith.subf %1301, %1303 : vector<8x128xf32>
    %1305 = arith.mulf %1304, %1304 : vector<8x128xf32>
    %cst_396 = arith.constant -1.95152956E-4 : f32
    %1306 = vector.broadcast %cst_396 : f32 to vector<8x128xf32>
    %1307 = arith.mulf %1306, %1305 : vector<8x128xf32>
    %cst_397 = arith.constant 0.00833216123 : f32
    %1308 = vector.broadcast %cst_397 : f32 to vector<8x128xf32>
    %1309 = arith.addf %1307, %1308 : vector<8x128xf32>
    %1310 = arith.mulf %1309, %1305 : vector<8x128xf32>
    %cst_398 = arith.constant 0.166666552 : f32
    %1311 = vector.broadcast %cst_398 : f32 to vector<8x128xf32>
    %1312 = arith.subf %1310, %1311 : vector<8x128xf32>
    %1313 = arith.mulf %1312, %1305 : vector<8x128xf32>
    %1314 = arith.mulf %1313, %1304 : vector<8x128xf32>
    %1315 = arith.addf %1314, %1304 : vector<8x128xf32>
    %cst_399 = arith.constant 2.44331568E-5 : f32
    %1316 = vector.broadcast %cst_399 : f32 to vector<8x128xf32>
    %1317 = arith.mulf %1316, %1305 : vector<8x128xf32>
    %cst_400 = arith.constant 0.00138873165 : f32
    %1318 = vector.broadcast %cst_400 : f32 to vector<8x128xf32>
    %1319 = arith.subf %1317, %1318 : vector<8x128xf32>
    %1320 = arith.mulf %1319, %1305 : vector<8x128xf32>
    %cst_401 = arith.constant 0.0416666456 : f32
    %1321 = vector.broadcast %cst_401 : f32 to vector<8x128xf32>
    %1322 = arith.addf %1320, %1321 : vector<8x128xf32>
    %1323 = arith.mulf %1322, %1305 : vector<8x128xf32>
    %1324 = arith.mulf %1323, %1305 : vector<8x128xf32>
    %cst_402 = arith.constant 5.000000e-01 : f32
    %1325 = vector.broadcast %cst_402 : f32 to vector<8x128xf32>
    %1326 = arith.mulf %1325, %1305 : vector<8x128xf32>
    %1327 = arith.subf %1324, %1326 : vector<8x128xf32>
    %cst_403 = arith.constant 1.000000e+00 : f32
    %1328 = vector.broadcast %cst_403 : f32 to vector<8x128xf32>
    %1329 = arith.addf %1327, %1328 : vector<8x128xf32>
    %c1_i32_404 = arith.constant 1 : i32
    %1330 = vector.broadcast %c1_i32_404 : i32 to vector<8x128xi32>
    %1331 = arith.andi %1294, %1330 : vector<8x128xi32>
    %c1_i32_405 = arith.constant 1 : i32
    %1332 = vector.broadcast %c1_i32_405 : i32 to vector<8x128xi32>
    %1333 = arith.cmpi eq, %1331, %1332 : vector<8x128xi32>
    %1334 = arith.select %1333, %1329, %1315 : vector<8x128xi1>, vector<8x128xf32>
    %1335 = arith.select %1333, %1315, %1329 : vector<8x128xi1>, vector<8x128xf32>
    %c2_i32_406 = arith.constant 2 : i32
    %1336 = vector.broadcast %c2_i32_406 : i32 to vector<8x128xi32>
    %1337 = arith.andi %1294, %1336 : vector<8x128xi32>
    %c2_i32_407 = arith.constant 2 : i32
    %1338 = vector.broadcast %c2_i32_407 : i32 to vector<8x128xi32>
    %1339 = arith.cmpi eq, %1337, %1338 : vector<8x128xi32>
    %cst_408 = arith.constant 0.000000e+00 : f32
    %1340 = vector.broadcast %cst_408 : f32 to vector<8x128xf32>
    %1341 = arith.subf %1340, %1334 : vector<8x128xf32>
    %1342 = arith.select %1339, %1341, %1334 : vector<8x128xi1>, vector<8x128xf32>
    %c1_i32_409 = arith.constant 1 : i32
    %1343 = vector.broadcast %c1_i32_409 : i32 to vector<8x128xi32>
    %1344 = arith.addi %1294, %1343 : vector<8x128xi32>
    %c2_i32_410 = arith.constant 2 : i32
    %1345 = vector.broadcast %c2_i32_410 : i32 to vector<8x128xi32>
    %1346 = arith.andi %1344, %1345 : vector<8x128xi32>
    %c2_i32_411 = arith.constant 2 : i32
    %1347 = vector.broadcast %c2_i32_411 : i32 to vector<8x128xi32>
    %1348 = arith.cmpi eq, %1346, %1347 : vector<8x128xi32>
    %cst_412 = arith.constant 0.000000e+00 : f32
    %1349 = vector.broadcast %cst_412 : f32 to vector<8x128xf32>
    %1350 = arith.subf %1349, %1335 : vector<8x128xf32>
    %1351 = arith.select %1348, %1350, %1335 : vector<8x128xi1>, vector<8x128xf32>
    %1352 = arith.mulf %941, %1351 : vector<8x128xf32>
    %cst_413 = arith.constant 2.000000e-08 : f32
    %1353 = vector.broadcast %cst_413 : f32 to vector<8x128xf32>
    %1354 = arith.addf %1352, %1353 : vector<8x128xf32>
    %c0_414 = arith.constant 0 : index
    %c1_415 = arith.constant 1 : index
    %c0_416 = arith.constant 0 : index
    %c0_417 = arith.constant 0 : index
    %1355 = vector.load %arg18[%c0_414, %c1_415, %c0_416, %c0_417] : memref<1x4x8x128xf32, #tpu.memory_space<vmem>>, vector<1x1x8x128xf32>
    %1356 = vector.shape_cast %1355 : vector<1x1x8x128xf32> to vector<8x128xf32>
    %1357 = vector.shape_cast %1354 : vector<8x128xf32> to vector<1x1x8x128xf32>
    tpu.vector_store %arg18[%c0_414, %c1_415, %c0_416, %c0_417], %1357 {strides = array<i32>} : memref<1x4x8x128xf32, #tpu.memory_space<vmem>>, vector<1x1x8x128xf32>,
    %1358 = arith.mulf %941, %1342 : vector<8x128xf32>
    %cst_418 = arith.constant 9.99999993E-9 : f32
    %1359 = vector.broadcast %cst_418 : f32 to vector<8x128xf32>
    %1360 = arith.addf %1358, %1359 : vector<8x128xf32>
    %c0_419 = arith.constant 0 : index
    %c1_420 = arith.constant 1 : index
    %c0_421 = arith.constant 0 : index
    %c0_422 = arith.constant 0 : index
    %1361 = vector.load %arg19[%c0_419, %c1_420, %c0_421, %c0_422] : memref<1x4x8x128xf32, #tpu.memory_space<vmem>>, vector<1x1x8x128xf32>
    %1362 = vector.shape_cast %1361 : vector<1x1x8x128xf32> to vector<8x128xf32>
    %1363 = vector.shape_cast %1360 : vector<8x128xf32> to vector<1x1x8x128xf32>
    tpu.vector_store %arg19[%c0_419, %c1_420, %c0_421, %c0_422], %1363 {strides = array<i32>} : memref<1x4x8x128xf32, #tpu.memory_space<vmem>>, vector<1x1x8x128xf32>,
    %cst_423 = arith.constant 0.636619746 : f32
    %1364 = vector.broadcast %cst_423 : f32 to vector<8x128xf32>
    %1365 = arith.mulf %1187, %1364 : vector<8x128xf32>
    %cst_424 = arith.constant 0.000000e+00 : f32
    %1366 = vector.broadcast %cst_424 : f32 to vector<8x128xf32>
    %1367 = arith.cmpf oge, %1365, %1366 : vector<8x128xf32>
    %cst_425 = arith.constant 5.000000e-01 : f32
    %1368 = vector.broadcast %cst_425 : f32 to vector<8x128xf32>
    %1369 = arith.addf %1365, %1368 : vector<8x128xf32>
    %cst_426 = arith.constant 5.000000e-01 : f32
    %1370 = vector.broadcast %cst_426 : f32 to vector<8x128xf32>
    %1371 = arith.subf %1365, %1370 : vector<8x128xf32>
    %1372 = arith.select %1367, %1369, %1371 : vector<8x128xi1>, vector<8x128xf32>
    %1373 = arith.fptosi %1372 : vector<8x128xf32> to vector<8x128xi32>
    %1374 = arith.sitofp %1373 : vector<8x128xi32> to vector<8x128xf32>
    %cst_427 = arith.constant 1.57079601 : f32
    %1375 = vector.broadcast %cst_427 : f32 to vector<8x128xf32>
    %1376 = arith.mulf %1374, %1375 : vector<8x128xf32>
    %1377 = arith.subf %1187, %1376 : vector<8x128xf32>
    %cst_428 = arith.constant 3.13916473E-7 : f32
    %1378 = vector.broadcast %cst_428 : f32 to vector<8x128xf32>
    %1379 = arith.mulf %1374, %1378 : vector<8x128xf32>
    %1380 = arith.subf %1377, %1379 : vector<8x128xf32>
    %cst_429 = arith.constant 5.39030253E-15 : f32
    %1381 = vector.broadcast %cst_429 : f32 to vector<8x128xf32>
    %1382 = arith.mulf %1374, %1381 : vector<8x128xf32>
    %1383 = arith.subf %1380, %1382 : vector<8x128xf32>
    %1384 = arith.mulf %1383, %1383 : vector<8x128xf32>
    %cst_430 = arith.constant -1.95152956E-4 : f32
    %1385 = vector.broadcast %cst_430 : f32 to vector<8x128xf32>
    %1386 = arith.mulf %1385, %1384 : vector<8x128xf32>
    %cst_431 = arith.constant 0.00833216123 : f32
    %1387 = vector.broadcast %cst_431 : f32 to vector<8x128xf32>
    %1388 = arith.addf %1386, %1387 : vector<8x128xf32>
    %1389 = arith.mulf %1388, %1384 : vector<8x128xf32>
    %cst_432 = arith.constant 0.166666552 : f32
    %1390 = vector.broadcast %cst_432 : f32 to vector<8x128xf32>
    %1391 = arith.subf %1389, %1390 : vector<8x128xf32>
    %1392 = arith.mulf %1391, %1384 : vector<8x128xf32>
    %1393 = arith.mulf %1392, %1383 : vector<8x128xf32>
    %1394 = arith.addf %1393, %1383 : vector<8x128xf32>
    %cst_433 = arith.constant 2.44331568E-5 : f32
    %1395 = vector.broadcast %cst_433 : f32 to vector<8x128xf32>
    %1396 = arith.mulf %1395, %1384 : vector<8x128xf32>
    %cst_434 = arith.constant 0.00138873165 : f32
    %1397 = vector.broadcast %cst_434 : f32 to vector<8x128xf32>
    %1398 = arith.subf %1396, %1397 : vector<8x128xf32>
    %1399 = arith.mulf %1398, %1384 : vector<8x128xf32>
    %cst_435 = arith.constant 0.0416666456 : f32
    %1400 = vector.broadcast %cst_435 : f32 to vector<8x128xf32>
    %1401 = arith.addf %1399, %1400 : vector<8x128xf32>
    %1402 = arith.mulf %1401, %1384 : vector<8x128xf32>
    %1403 = arith.mulf %1402, %1384 : vector<8x128xf32>
    %cst_436 = arith.constant 5.000000e-01 : f32
    %1404 = vector.broadcast %cst_436 : f32 to vector<8x128xf32>
    %1405 = arith.mulf %1404, %1384 : vector<8x128xf32>
    %1406 = arith.subf %1403, %1405 : vector<8x128xf32>
    %cst_437 = arith.constant 1.000000e+00 : f32
    %1407 = vector.broadcast %cst_437 : f32 to vector<8x128xf32>
    %1408 = arith.addf %1406, %1407 : vector<8x128xf32>
    %c1_i32_438 = arith.constant 1 : i32
    %1409 = vector.broadcast %c1_i32_438 : i32 to vector<8x128xi32>
    %1410 = arith.andi %1373, %1409 : vector<8x128xi32>
    %c1_i32_439 = arith.constant 1 : i32
    %1411 = vector.broadcast %c1_i32_439 : i32 to vector<8x128xi32>
    %1412 = arith.cmpi eq, %1410, %1411 : vector<8x128xi32>
    %1413 = arith.select %1412, %1408, %1394 : vector<8x128xi1>, vector<8x128xf32>
    %1414 = arith.select %1412, %1394, %1408 : vector<8x128xi1>, vector<8x128xf32>
    %c2_i32_440 = arith.constant 2 : i32
    %1415 = vector.broadcast %c2_i32_440 : i32 to vector<8x128xi32>
    %1416 = arith.andi %1373, %1415 : vector<8x128xi32>
    %c2_i32_441 = arith.constant 2 : i32
    %1417 = vector.broadcast %c2_i32_441 : i32 to vector<8x128xi32>
    %1418 = arith.cmpi eq, %1416, %1417 : vector<8x128xi32>
    %cst_442 = arith.constant 0.000000e+00 : f32
    %1419 = vector.broadcast %cst_442 : f32 to vector<8x128xf32>
    %1420 = arith.subf %1419, %1413 : vector<8x128xf32>
    %1421 = arith.select %1418, %1420, %1413 : vector<8x128xi1>, vector<8x128xf32>
    %c1_i32_443 = arith.constant 1 : i32
    %1422 = vector.broadcast %c1_i32_443 : i32 to vector<8x128xi32>
    %1423 = arith.addi %1373, %1422 : vector<8x128xi32>
    %c2_i32_444 = arith.constant 2 : i32
    %1424 = vector.broadcast %c2_i32_444 : i32 to vector<8x128xi32>
    %1425 = arith.andi %1423, %1424 : vector<8x128xi32>
    %c2_i32_445 = arith.constant 2 : i32
    %1426 = vector.broadcast %c2_i32_445 : i32 to vector<8x128xi32>
    %1427 = arith.cmpi eq, %1425, %1426 : vector<8x128xi32>
    %cst_446 = arith.constant 0.000000e+00 : f32
    %1428 = vector.broadcast %cst_446 : f32 to vector<8x128xf32>
    %1429 = arith.subf %1428, %1414 : vector<8x128xf32>
    %1430 = arith.select %1427, %1429, %1414 : vector<8x128xi1>, vector<8x128xf32>
    %1431 = arith.mulf %959, %1430 : vector<8x128xf32>
    %cst_447 = arith.constant 2.000000e-08 : f32
    %1432 = vector.broadcast %cst_447 : f32 to vector<8x128xf32>
    %1433 = arith.addf %1431, %1432 : vector<8x128xf32>
    %c0_448 = arith.constant 0 : index
    %c2_449 = arith.constant 2 : index
    %c0_450 = arith.constant 0 : index
    %c0_451 = arith.constant 0 : index
    %1434 = vector.load %arg18[%c0_448, %c2_449, %c0_450, %c0_451] : memref<1x4x8x128xf32, #tpu.memory_space<vmem>>, vector<1x1x8x128xf32>
    %1435 = vector.shape_cast %1434 : vector<1x1x8x128xf32> to vector<8x128xf32>
    %1436 = vector.shape_cast %1433 : vector<8x128xf32> to vector<1x1x8x128xf32>
    tpu.vector_store %arg18[%c0_448, %c2_449, %c0_450, %c0_451], %1436 {strides = array<i32>} : memref<1x4x8x128xf32, #tpu.memory_space<vmem>>, vector<1x1x8x128xf32>,
    %1437 = arith.mulf %959, %1421 : vector<8x128xf32>
    %cst_452 = arith.constant 9.99999993E-9 : f32
    %1438 = vector.broadcast %cst_452 : f32 to vector<8x128xf32>
    %1439 = arith.addf %1437, %1438 : vector<8x128xf32>
    %c0_453 = arith.constant 0 : index
    %c2_454 = arith.constant 2 : index
    %c0_455 = arith.constant 0 : index
    %c0_456 = arith.constant 0 : index
    %1440 = vector.load %arg19[%c0_453, %c2_454, %c0_455, %c0_456] : memref<1x4x8x128xf32, #tpu.memory_space<vmem>>, vector<1x1x8x128xf32>
    %1441 = vector.shape_cast %1440 : vector<1x1x8x128xf32> to vector<8x128xf32>
    %1442 = vector.shape_cast %1439 : vector<8x128xf32> to vector<1x1x8x128xf32>
    tpu.vector_store %arg19[%c0_453, %c2_454, %c0_455, %c0_456], %1442 {strides = array<i32>} : memref<1x4x8x128xf32, #tpu.memory_space<vmem>>, vector<1x1x8x128xf32>,
    %cst_457 = arith.constant 0.636619746 : f32
    %1443 = vector.broadcast %cst_457 : f32 to vector<8x128xf32>
    %1444 = arith.mulf %1205, %1443 : vector<8x128xf32>
    %cst_458 = arith.constant 0.000000e+00 : f32
    %1445 = vector.broadcast %cst_458 : f32 to vector<8x128xf32>
    %1446 = arith.cmpf oge, %1444, %1445 : vector<8x128xf32>
    %cst_459 = arith.constant 5.000000e-01 : f32
    %1447 = vector.broadcast %cst_459 : f32 to vector<8x128xf32>
    %1448 = arith.addf %1444, %1447 : vector<8x128xf32>
    %cst_460 = arith.constant 5.000000e-01 : f32
    %1449 = vector.broadcast %cst_460 : f32 to vector<8x128xf32>
    %1450 = arith.subf %1444, %1449 : vector<8x128xf32>
    %1451 = arith.select %1446, %1448, %1450 : vector<8x128xi1>, vector<8x128xf32>
    %1452 = arith.fptosi %1451 : vector<8x128xf32> to vector<8x128xi32>
    %1453 = arith.sitofp %1452 : vector<8x128xi32> to vector<8x128xf32>
    %cst_461 = arith.constant 1.57079601 : f32
    %1454 = vector.broadcast %cst_461 : f32 to vector<8x128xf32>
    %1455 = arith.mulf %1453, %1454 : vector<8x128xf32>
    %1456 = arith.subf %1205, %1455 : vector<8x128xf32>
    %cst_462 = arith.constant 3.13916473E-7 : f32
    %1457 = vector.broadcast %cst_462 : f32 to vector<8x128xf32>
    %1458 = arith.mulf %1453, %1457 : vector<8x128xf32>
    %1459 = arith.subf %1456, %1458 : vector<8x128xf32>
    %cst_463 = arith.constant 5.39030253E-15 : f32
    %1460 = vector.broadcast %cst_463 : f32 to vector<8x128xf32>
    %1461 = arith.mulf %1453, %1460 : vector<8x128xf32>
    %1462 = arith.subf %1459, %1461 : vector<8x128xf32>
    %1463 = arith.mulf %1462, %1462 : vector<8x128xf32>
    %cst_464 = arith.constant -1.95152956E-4 : f32
    %1464 = vector.broadcast %cst_464 : f32 to vector<8x128xf32>
    %1465 = arith.mulf %1464, %1463 : vector<8x128xf32>
    %cst_465 = arith.constant 0.00833216123 : f32
    %1466 = vector.broadcast %cst_465 : f32 to vector<8x128xf32>
    %1467 = arith.addf %1465, %1466 : vector<8x128xf32>
    %1468 = arith.mulf %1467, %1463 : vector<8x128xf32>
    %cst_466 = arith.constant 0.166666552 : f32
    %1469 = vector.broadcast %cst_466 : f32 to vector<8x128xf32>
    %1470 = arith.subf %1468, %1469 : vector<8x128xf32>
    %1471 = arith.mulf %1470, %1463 : vector<8x128xf32>
    %1472 = arith.mulf %1471, %1462 : vector<8x128xf32>
    %1473 = arith.addf %1472, %1462 : vector<8x128xf32>
    %cst_467 = arith.constant 2.44331568E-5 : f32
    %1474 = vector.broadcast %cst_467 : f32 to vector<8x128xf32>
    %1475 = arith.mulf %1474, %1463 : vector<8x128xf32>
    %cst_468 = arith.constant 0.00138873165 : f32
    %1476 = vector.broadcast %cst_468 : f32 to vector<8x128xf32>
    %1477 = arith.subf %1475, %1476 : vector<8x128xf32>
    %1478 = arith.mulf %1477, %1463 : vector<8x128xf32>
    %cst_469 = arith.constant 0.0416666456 : f32
    %1479 = vector.broadcast %cst_469 : f32 to vector<8x128xf32>
    %1480 = arith.addf %1478, %1479 : vector<8x128xf32>
    %1481 = arith.mulf %1480, %1463 : vector<8x128xf32>
    %1482 = arith.mulf %1481, %1463 : vector<8x128xf32>
    %cst_470 = arith.constant 5.000000e-01 : f32
    %1483 = vector.broadcast %cst_470 : f32 to vector<8x128xf32>
    %1484 = arith.mulf %1483, %1463 : vector<8x128xf32>
    %1485 = arith.subf %1482, %1484 : vector<8x128xf32>
    %cst_471 = arith.constant 1.000000e+00 : f32
    %1486 = vector.broadcast %cst_471 : f32 to vector<8x128xf32>
    %1487 = arith.addf %1485, %1486 : vector<8x128xf32>
    %c1_i32_472 = arith.constant 1 : i32
    %1488 = vector.broadcast %c1_i32_472 : i32 to vector<8x128xi32>
    %1489 = arith.andi %1452, %1488 : vector<8x128xi32>
    %c1_i32_473 = arith.constant 1 : i32
    %1490 = vector.broadcast %c1_i32_473 : i32 to vector<8x128xi32>
    %1491 = arith.cmpi eq, %1489, %1490 : vector<8x128xi32>
    %1492 = arith.select %1491, %1487, %1473 : vector<8x128xi1>, vector<8x128xf32>
    %1493 = arith.select %1491, %1473, %1487 : vector<8x128xi1>, vector<8x128xf32>
    %c2_i32_474 = arith.constant 2 : i32
    %1494 = vector.broadcast %c2_i32_474 : i32 to vector<8x128xi32>
    %1495 = arith.andi %1452, %1494 : vector<8x128xi32>
    %c2_i32_475 = arith.constant 2 : i32
    %1496 = vector.broadcast %c2_i32_475 : i32 to vector<8x128xi32>
    %1497 = arith.cmpi eq, %1495, %1496 : vector<8x128xi32>
    %cst_476 = arith.constant 0.000000e+00 : f32
    %1498 = vector.broadcast %cst_476 : f32 to vector<8x128xf32>
    %1499 = arith.subf %1498, %1492 : vector<8x128xf32>
    %1500 = arith.select %1497, %1499, %1492 : vector<8x128xi1>, vector<8x128xf32>
    %c1_i32_477 = arith.constant 1 : i32
    %1501 = vector.broadcast %c1_i32_477 : i32 to vector<8x128xi32>
    %1502 = arith.addi %1452, %1501 : vector<8x128xi32>
    %c2_i32_478 = arith.constant 2 : i32
    %1503 = vector.broadcast %c2_i32_478 : i32 to vector<8x128xi32>
    %1504 = arith.andi %1502, %1503 : vector<8x128xi32>
    %c2_i32_479 = arith.constant 2 : i32
    %1505 = vector.broadcast %c2_i32_479 : i32 to vector<8x128xi32>
    %1506 = arith.cmpi eq, %1504, %1505 : vector<8x128xi32>
    %cst_480 = arith.constant 0.000000e+00 : f32
    %1507 = vector.broadcast %cst_480 : f32 to vector<8x128xf32>
    %1508 = arith.subf %1507, %1493 : vector<8x128xf32>
    %1509 = arith.select %1506, %1508, %1493 : vector<8x128xi1>, vector<8x128xf32>
    %1510 = arith.mulf %977, %1509 : vector<8x128xf32>
    %cst_481 = arith.constant 2.000000e-08 : f32
    %1511 = vector.broadcast %cst_481 : f32 to vector<8x128xf32>
    %1512 = arith.addf %1510, %1511 : vector<8x128xf32>
    %c0_482 = arith.constant 0 : index
    %c3_483 = arith.constant 3 : index
    %c0_484 = arith.constant 0 : index
    %c0_485 = arith.constant 0 : index
    %1513 = vector.load %arg18[%c0_482, %c3_483, %c0_484, %c0_485] : memref<1x4x8x128xf32, #tpu.memory_space<vmem>>, vector<1x1x8x128xf32>
    %1514 = vector.shape_cast %1513 : vector<1x1x8x128xf32> to vector<8x128xf32>
    %1515 = vector.shape_cast %1512 : vector<8x128xf32> to vector<1x1x8x128xf32>
    tpu.vector_store %arg18[%c0_482, %c3_483, %c0_484, %c0_485], %1515 {strides = array<i32>} : memref<1x4x8x128xf32, #tpu.memory_space<vmem>>, vector<1x1x8x128xf32>,
    %1516 = arith.mulf %977, %1500 : vector<8x128xf32>
    %cst_486 = arith.constant 9.99999993E-9 : f32
    %1517 = vector.broadcast %cst_486 : f32 to vector<8x128xf32>
    %1518 = arith.addf %1516, %1517 : vector<8x128xf32>
    %c0_487 = arith.constant 0 : index
    %c3_488 = arith.constant 3 : index
    %c0_489 = arith.constant 0 : index
    %c0_490 = arith.constant 0 : index
    %1519 = vector.load %arg19[%c0_487, %c3_488, %c0_489, %c0_490] : memref<1x4x8x128xf32, #tpu.memory_space<vmem>>, vector<1x1x8x128xf32>
    %1520 = vector.shape_cast %1519 : vector<1x1x8x128xf32> to vector<8x128xf32>
    %1521 = vector.shape_cast %1518 : vector<8x128xf32> to vector<1x1x8x128xf32>
    tpu.vector_store %arg19[%c0_487, %c3_488, %c0_489, %c0_490], %1521 {strides = array<i32>} : memref<1x4x8x128xf32, #tpu.memory_space<vmem>>, vector<1x1x8x128xf32>,
    return
  }
  func.func @transform_0(%arg0: i32, %arg1: i32) -> (i32, i32, i32, i32) {
    %c0_i32 = arith.constant 0 : i32
    %c0_i32_0 = arith.constant 0 : i32
    %c0_i32_1 = arith.constant 0 : i32
    return %arg0, %c0_i32, %arg1, %c0_i32_0 : i32, i32, i32, i32
  }
  func.func @transform_1(%arg0: i32, %arg1: i32) -> (i32, i32, i32, i32) {
    %c0_i32 = arith.constant 0 : i32
    %c0_i32_0 = arith.constant 0 : i32
    %c0_i32_1 = arith.constant 0 : i32
    return %arg0, %c0_i32, %arg1, %c0_i32_0 : i32, i32, i32, i32
  }
  func.func @transform_2(%arg0: i32, %arg1: i32) -> (i32, i32, i32, i32) {
    %c0_i32 = arith.constant 0 : i32
    %c0_i32_0 = arith.constant 0 : i32
    %c0_i32_1 = arith.constant 0 : i32
    return %arg0, %c0_i32, %arg1, %c0_i32_0 : i32, i32, i32, i32
  }
  func.func @transform_3(%arg0: i32, %arg1: i32) -> (i32, i32, i32, i32) {
    %c0_i32 = arith.constant 0 : i32
    %c0_i32_0 = arith.constant 0 : i32
    %c0_i32_1 = arith.constant 0 : i32
    return %arg0, %c0_i32, %arg1, %c0_i32_0 : i32, i32, i32, i32
  }
  func.func @transform_4(%arg0: i32, %arg1: i32) -> i32 {
    %c0_i32 = arith.constant 0 : i32
    %c0_i32_0 = arith.constant 0 : i32
    return %c0_i32 : i32
  }
  func.func @transform_5(%arg0: i32, %arg1: i32) -> i32 {
    %c0_i32 = arith.constant 0 : i32
    %c0_i32_0 = arith.constant 0 : i32
    return %c0_i32 : i32
  }
  func.func @transform_6(%arg0: i32, %arg1: i32) -> i32 {
    %c0_i32 = arith.constant 0 : i32
    %c0_i32_0 = arith.constant 0 : i32
    return %c0_i32 : i32
  }
  func.func @transform_7(%arg0: i32, %arg1: i32) -> i32 {
    %c0_i32 = arith.constant 0 : i32
    %c0_i32_0 = arith.constant 0 : i32
    return %c0_i32 : i32
  }
  func.func @transform_8(%arg0: i32, %arg1: i32) -> i32 {
    %c0_i32 = arith.constant 0 : i32
    %c0_i32_0 = arith.constant 0 : i32
    return %c0_i32 : i32
  }
  func.func @transform_9(%arg0: i32, %arg1: i32) -> i32 {
    %c0_i32 = arith.constant 0 : i32
    %c0_i32_0 = arith.constant 0 : i32
    return %c0_i32 : i32
  }
  func.func @transform_10(%arg0: i32, %arg1: i32) -> i32 {
    %c0_i32 = arith.constant 0 : i32
    %c0_i32_0 = arith.constant 0 : i32
    return %c0_i32 : i32
  }
  func.func @transform_11(%arg0: i32, %arg1: i32) -> i32 {
    %c0_i32 = arith.constant 0 : i32
    %c0_i32_0 = arith.constant 0 : i32
    return %c0_i32 : i32
  }
  func.func @transform_12(%arg0: i32, %arg1: i32) -> i32 {
    %c0_i32 = arith.constant 0 : i32
    %c0_i32_0 = arith.constant 0 : i32
    return %c0_i32 : i32
  }
  func.func @transform_13(%arg0: i32, %arg1: i32) -> i32 {
    %c0_i32 = arith.constant 0 : i32
    %c0_i32_0 = arith.constant 0 : i32
    return %c0_i32 : i32
  }
  func.func @transform_14(%arg0: i32, %arg1: i32) -> i32 {
    %c0_i32 = arith.constant 0 : i32
    %c0_i32_0 = arith.constant 0 : i32
    return %c0_i32 : i32
  }
  func.func @transform_15(%arg0: i32, %arg1: i32) -> i32 {
    %c0_i32 = arith.constant 0 : i32
    %c0_i32_0 = arith.constant 0 : i32
    return %c0_i32 : i32
  }
  func.func @transform_16(%arg0: i32, %arg1: i32) -> (i32, i32, i32, i32) {
    %c0_i32 = arith.constant 0 : i32
    %c0_i32_0 = arith.constant 0 : i32
    %c0_i32_1 = arith.constant 0 : i32
    return %arg0, %c0_i32, %arg1, %c0_i32_0 : i32, i32, i32, i32
  }
  func.func @transform_17(%arg0: i32, %arg1: i32) -> (i32, i32, i32, i32) {
    %c0_i32 = arith.constant 0 : i32
    %c0_i32_0 = arith.constant 0 : i32
    %c0_i32_1 = arith.constant 0 : i32
    return %arg0, %c0_i32, %arg1, %c0_i32_0 : i32, i32, i32, i32
  }
}

module attributes {stable_mosaic.version = 11 : i64} {
  func.func @kernel(%arg0: i32, %arg1: i32, %arg2: memref<1x4x8x128xf32, #tpu.memory_space<vmem>>, %arg3: memref<16xf32, #tpu.memory_space<smem>>, %arg4: memref<4xf32, #tpu.memory_space<smem>>, %arg5: memref<1x4x8x128xf32, #tpu.memory_space<vmem>>) attributes {dimension_semantics = [#tpu.dimension_semantics<parallel>, #tpu.dimension_semantics<parallel>], iteration_bounds = array<i64: 2, 1>, scalar_prefetch = 0 : i64, scratch_operands = 0 : i64, tpu.core_type = #tpu.core_type<tc>, window_params = [{transform_indices = @transform_0, window_bounds = array<i64: 1, 4, 8, 128>}, {transform_indices = @transform_1, window_bounds = array<i64: 16>}, {transform_indices = @transform_2, window_bounds = array<i64: 4>}, {transform_indices = @transform_3, window_bounds = array<i64: 1, 4, 8, 128>}]} {
    %c0 = arith.constant 0 : index
    %c0_0 = arith.constant 0 : index
    %c0_1 = arith.constant 0 : index
    %c0_2 = arith.constant 0 : index
    %0 = vector.load %arg2[%c0, %c0_0, %c0_1, %c0_2] : memref<1x4x8x128xf32, #tpu.memory_space<vmem>>, vector<1x1x8x128xf32>
    %1 = vector.shape_cast %0 : vector<1x1x8x128xf32> to vector<8x128xf32>
    %2 = math.absf %1 : vector<8x128xf32>
    %c0_3 = arith.constant 0 : index
    %c1 = arith.constant 1 : index
    %c0_4 = arith.constant 0 : index
    %c0_5 = arith.constant 0 : index
    %3 = vector.load %arg2[%c0_3, %c1, %c0_4, %c0_5] : memref<1x4x8x128xf32, #tpu.memory_space<vmem>>, vector<1x1x8x128xf32>
    %4 = vector.shape_cast %3 : vector<1x1x8x128xf32> to vector<8x128xf32>
    %5 = math.absf %4 : vector<8x128xf32>
    %c0_6 = arith.constant 0 : index
    %c2 = arith.constant 2 : index
    %c0_7 = arith.constant 0 : index
    %c0_8 = arith.constant 0 : index
    %6 = vector.load %arg2[%c0_6, %c2, %c0_7, %c0_8] : memref<1x4x8x128xf32, #tpu.memory_space<vmem>>, vector<1x1x8x128xf32>
    %7 = vector.shape_cast %6 : vector<1x1x8x128xf32> to vector<8x128xf32>
    %8 = math.absf %7 : vector<8x128xf32>
    %c0_9 = arith.constant 0 : index
    %c3 = arith.constant 3 : index
    %c0_10 = arith.constant 0 : index
    %c0_11 = arith.constant 0 : index
    %9 = vector.load %arg2[%c0_9, %c3, %c0_10, %c0_11] : memref<1x4x8x128xf32, #tpu.memory_space<vmem>>, vector<1x1x8x128xf32>
    %10 = vector.shape_cast %9 : vector<1x1x8x128xf32> to vector<8x128xf32>
    %11 = math.absf %10 : vector<8x128xf32>
    %c0_12 = arith.constant 0 : index
    %12 = memref.load %arg3[%c0_12] : memref<16xf32, #tpu.memory_space<smem>>
    %13 = vector.broadcast %12 : f32 to vector<8x128xf32>
    %14 = arith.mulf %2, %13 : vector<8x128xf32>
    %c1_13 = arith.constant 1 : index
    %15 = memref.load %arg3[%c1_13] : memref<16xf32, #tpu.memory_space<smem>>
    %16 = vector.broadcast %15 : f32 to vector<8x128xf32>
    %17 = arith.mulf %5, %16 : vector<8x128xf32>
    %18 = arith.addf %14, %17 : vector<8x128xf32>
    %c2_14 = arith.constant 2 : index
    %19 = memref.load %arg3[%c2_14] : memref<16xf32, #tpu.memory_space<smem>>
    %20 = vector.broadcast %19 : f32 to vector<8x128xf32>
    %21 = arith.mulf %8, %20 : vector<8x128xf32>
    %22 = arith.addf %18, %21 : vector<8x128xf32>
    %c3_15 = arith.constant 3 : index
    %23 = memref.load %arg3[%c3_15] : memref<16xf32, #tpu.memory_space<smem>>
    %24 = vector.broadcast %23 : f32 to vector<8x128xf32>
    %25 = arith.mulf %11, %24 : vector<8x128xf32>
    %26 = arith.addf %22, %25 : vector<8x128xf32>
    %c0_16 = arith.constant 0 : index
    %27 = memref.load %arg4[%c0_16] : memref<4xf32, #tpu.memory_space<smem>>
    %28 = vector.broadcast %27 : f32 to vector<8x128xf32>
    %29 = arith.addf %26, %28 : vector<8x128xf32>
    %c4 = arith.constant 4 : index
    %30 = memref.load %arg3[%c4] : memref<16xf32, #tpu.memory_space<smem>>
    %31 = vector.broadcast %30 : f32 to vector<8x128xf32>
    %32 = arith.mulf %2, %31 : vector<8x128xf32>
    %c5 = arith.constant 5 : index
    %33 = memref.load %arg3[%c5] : memref<16xf32, #tpu.memory_space<smem>>
    %34 = vector.broadcast %33 : f32 to vector<8x128xf32>
    %35 = arith.mulf %5, %34 : vector<8x128xf32>
    %36 = arith.addf %32, %35 : vector<8x128xf32>
    %c6 = arith.constant 6 : index
    %37 = memref.load %arg3[%c6] : memref<16xf32, #tpu.memory_space<smem>>
    %38 = vector.broadcast %37 : f32 to vector<8x128xf32>
    %39 = arith.mulf %8, %38 : vector<8x128xf32>
    %40 = arith.addf %36, %39 : vector<8x128xf32>
    %c7 = arith.constant 7 : index
    %41 = memref.load %arg3[%c7] : memref<16xf32, #tpu.memory_space<smem>>
    %42 = vector.broadcast %41 : f32 to vector<8x128xf32>
    %43 = arith.mulf %11, %42 : vector<8x128xf32>
    %44 = arith.addf %40, %43 : vector<8x128xf32>
    %c1_17 = arith.constant 1 : index
    %45 = memref.load %arg4[%c1_17] : memref<4xf32, #tpu.memory_space<smem>>
    %46 = vector.broadcast %45 : f32 to vector<8x128xf32>
    %47 = arith.addf %44, %46 : vector<8x128xf32>
    %c8 = arith.constant 8 : index
    %48 = memref.load %arg3[%c8] : memref<16xf32, #tpu.memory_space<smem>>
    %49 = vector.broadcast %48 : f32 to vector<8x128xf32>
    %50 = arith.mulf %2, %49 : vector<8x128xf32>
    %c9 = arith.constant 9 : index
    %51 = memref.load %arg3[%c9] : memref<16xf32, #tpu.memory_space<smem>>
    %52 = vector.broadcast %51 : f32 to vector<8x128xf32>
    %53 = arith.mulf %5, %52 : vector<8x128xf32>
    %54 = arith.addf %50, %53 : vector<8x128xf32>
    %c10 = arith.constant 10 : index
    %55 = memref.load %arg3[%c10] : memref<16xf32, #tpu.memory_space<smem>>
    %56 = vector.broadcast %55 : f32 to vector<8x128xf32>
    %57 = arith.mulf %8, %56 : vector<8x128xf32>
    %58 = arith.addf %54, %57 : vector<8x128xf32>
    %c11 = arith.constant 11 : index
    %59 = memref.load %arg3[%c11] : memref<16xf32, #tpu.memory_space<smem>>
    %60 = vector.broadcast %59 : f32 to vector<8x128xf32>
    %61 = arith.mulf %11, %60 : vector<8x128xf32>
    %62 = arith.addf %58, %61 : vector<8x128xf32>
    %c2_18 = arith.constant 2 : index
    %63 = memref.load %arg4[%c2_18] : memref<4xf32, #tpu.memory_space<smem>>
    %64 = vector.broadcast %63 : f32 to vector<8x128xf32>
    %65 = arith.addf %62, %64 : vector<8x128xf32>
    %c12 = arith.constant 12 : index
    %66 = memref.load %arg3[%c12] : memref<16xf32, #tpu.memory_space<smem>>
    %67 = vector.broadcast %66 : f32 to vector<8x128xf32>
    %68 = arith.mulf %2, %67 : vector<8x128xf32>
    %c13 = arith.constant 13 : index
    %69 = memref.load %arg3[%c13] : memref<16xf32, #tpu.memory_space<smem>>
    %70 = vector.broadcast %69 : f32 to vector<8x128xf32>
    %71 = arith.mulf %5, %70 : vector<8x128xf32>
    %72 = arith.addf %68, %71 : vector<8x128xf32>
    %c14 = arith.constant 14 : index
    %73 = memref.load %arg3[%c14] : memref<16xf32, #tpu.memory_space<smem>>
    %74 = vector.broadcast %73 : f32 to vector<8x128xf32>
    %75 = arith.mulf %8, %74 : vector<8x128xf32>
    %76 = arith.addf %72, %75 : vector<8x128xf32>
    %c15 = arith.constant 15 : index
    %77 = memref.load %arg3[%c15] : memref<16xf32, #tpu.memory_space<smem>>
    %78 = vector.broadcast %77 : f32 to vector<8x128xf32>
    %79 = arith.mulf %11, %78 : vector<8x128xf32>
    %80 = arith.addf %76, %79 : vector<8x128xf32>
    %c3_19 = arith.constant 3 : index
    %81 = memref.load %arg4[%c3_19] : memref<4xf32, #tpu.memory_space<smem>>
    %82 = vector.broadcast %81 : f32 to vector<8x128xf32>
    %83 = arith.addf %80, %82 : vector<8x128xf32>
    %c0_20 = arith.constant 0 : index
    %c0_21 = arith.constant 0 : index
    %c0_22 = arith.constant 0 : index
    %c0_23 = arith.constant 0 : index
    %84 = vector.load %arg5[%c0_20, %c0_21, %c0_22, %c0_23] : memref<1x4x8x128xf32, #tpu.memory_space<vmem>>, vector<1x1x8x128xf32>
    %85 = vector.shape_cast %84 : vector<1x1x8x128xf32> to vector<8x128xf32>
    %86 = vector.shape_cast %29 : vector<8x128xf32> to vector<1x1x8x128xf32>
    tpu.vector_store %arg5[%c0_20, %c0_21, %c0_22, %c0_23], %86 {strides = array<i32>} : memref<1x4x8x128xf32, #tpu.memory_space<vmem>>, vector<1x1x8x128xf32>,
    %c0_24 = arith.constant 0 : index
    %c1_25 = arith.constant 1 : index
    %c0_26 = arith.constant 0 : index
    %c0_27 = arith.constant 0 : index
    %87 = vector.load %arg5[%c0_24, %c1_25, %c0_26, %c0_27] : memref<1x4x8x128xf32, #tpu.memory_space<vmem>>, vector<1x1x8x128xf32>
    %88 = vector.shape_cast %87 : vector<1x1x8x128xf32> to vector<8x128xf32>
    %89 = vector.shape_cast %47 : vector<8x128xf32> to vector<1x1x8x128xf32>
    tpu.vector_store %arg5[%c0_24, %c1_25, %c0_26, %c0_27], %89 {strides = array<i32>} : memref<1x4x8x128xf32, #tpu.memory_space<vmem>>, vector<1x1x8x128xf32>,
    %c0_28 = arith.constant 0 : index
    %c2_29 = arith.constant 2 : index
    %c0_30 = arith.constant 0 : index
    %c0_31 = arith.constant 0 : index
    %90 = vector.load %arg5[%c0_28, %c2_29, %c0_30, %c0_31] : memref<1x4x8x128xf32, #tpu.memory_space<vmem>>, vector<1x1x8x128xf32>
    %91 = vector.shape_cast %90 : vector<1x1x8x128xf32> to vector<8x128xf32>
    %92 = vector.shape_cast %65 : vector<8x128xf32> to vector<1x1x8x128xf32>
    tpu.vector_store %arg5[%c0_28, %c2_29, %c0_30, %c0_31], %92 {strides = array<i32>} : memref<1x4x8x128xf32, #tpu.memory_space<vmem>>, vector<1x1x8x128xf32>,
    %c0_32 = arith.constant 0 : index
    %c3_33 = arith.constant 3 : index
    %c0_34 = arith.constant 0 : index
    %c0_35 = arith.constant 0 : index
    %93 = vector.load %arg5[%c0_32, %c3_33, %c0_34, %c0_35] : memref<1x4x8x128xf32, #tpu.memory_space<vmem>>, vector<1x1x8x128xf32>
    %94 = vector.shape_cast %93 : vector<1x1x8x128xf32> to vector<8x128xf32>
    %95 = vector.shape_cast %83 : vector<8x128xf32> to vector<1x1x8x128xf32>
    tpu.vector_store %arg5[%c0_32, %c3_33, %c0_34, %c0_35], %95 {strides = array<i32>} : memref<1x4x8x128xf32, #tpu.memory_space<vmem>>, vector<1x1x8x128xf32>,
    return
  }
  func.func @transform_0(%arg0: i32, %arg1: i32) -> (i32, i32, i32, i32) {
    %c0_i32 = arith.constant 0 : i32
    %c0_i32_0 = arith.constant 0 : i32
    %c0_i32_1 = arith.constant 0 : i32
    return %arg0, %c0_i32, %arg1, %c0_i32_0 : i32, i32, i32, i32
  }
  func.func @transform_1(%arg0: i32, %arg1: i32) -> i32 {
    %c0_i32 = arith.constant 0 : i32
    %c0_i32_0 = arith.constant 0 : i32
    return %c0_i32 : i32
  }
  func.func @transform_2(%arg0: i32, %arg1: i32) -> i32 {
    %c0_i32 = arith.constant 0 : i32
    %c0_i32_0 = arith.constant 0 : i32
    return %c0_i32 : i32
  }
  func.func @transform_3(%arg0: i32, %arg1: i32) -> (i32, i32, i32, i32) {
    %c0_i32 = arith.constant 0 : i32
    %c0_i32_0 = arith.constant 0 : i32
    %c0_i32_1 = arith.constant 0 : i32
    return %arg0, %c0_i32, %arg1, %c0_i32_0 : i32, i32, i32, i32
  }
}

</mosaic_0001>

<llo_original>
// kernel: squeeze.7
$region0: #{squeeze.7}
  %s0 = inlined_call_operand.vmem [shape: f32[4,4], index: 0, kind: input, shape index: {}]
  %s1 = inlined_call_operand.vmem [shape: f32[16], index: 1, kind: output, shape index: {}]
  $region1: #{squeeze.7} parent=0
    #allocation0 [shape = 'u8[4096]{0}', space=vmem, size = 0x1000, scoped, tag = 'scoped mem for output reshape']
    #allocation1 [shape = 'u8[4096]{0}', space=vmem, size = 0x1000, scoped, tag = 'scoped mem for input reshape']
    %s3 = ssub.s32 16, 1
    %v4 = vld [vmem:[%s0] sm:%s3]
    %5 = vst [vmem:[#allocation1] sm:%s3] %v4
    %v6 = vld [vmem:[#allocation1] sm:$0x1]
    %vm7 = vcmask 31744
    %8 = vst.msk [vmem:[#allocation0] sm:$0x1] %vm7, %v6
    %s9 = scalar_lea.vmem [#allocation1], 3
    %v10 = vld [vmem:[%s9] sm:$0x1]
    %11 = vrot.lane.b32.xlu0 %v10, 12
    %v12 = vpop.permute.xlu0 %11
    %vm13 = vcmask 130144
    %14 = vst.msk [vmem:[#allocation0] sm:$0x1] %vm13, %v12
    %s15 = scalar_lea.vmem [#allocation1], 2
    %v16 = vld [vmem:[%s15] sm:$0x1]
    %17 = vrot.lane.b32.xlu0 %v16, 8
    %v18 = vpop.permute.xlu0 %17
    %vm19 = vcmask 97344
    %20 = vst.msk [vmem:[#allocation0] sm:$0x1] %vm19, %v18
    %s21 = scalar_lea.vmem [#allocation1], 1
    %v22 = vld [vmem:[%s21] sm:$0x1]
    %23 = vrot.lane.b32.xlu0 %v22, 4
    %v24 = vpop.permute.xlu0 %23
    %vm25 = vcmask 64544
    %26 = vst.msk [vmem:[#allocation0] sm:$0x1] %vm25, %v24
    %s28 = ssub.s32 2, 1
    %v29 = vld [vmem:[#allocation0] sm:%s28]
    %s31 = ssub.s32 2, 1
    %32 = vst [vmem:[%s1] sm:%s31] %v29

// kernel: squeeze.9
$region0: #{squeeze.9}
  %s0 = inlined_call_operand.vmem [shape: f32[4,8], index: 0, kind: input, shape index: {}]
  %s1 = inlined_call_operand.vmem [shape: f32[32], index: 1, kind: output, shape index: {}]
  $region1: #{squeeze.9} parent=0
    #allocation0 [shape = 'u8[4096]{0}', space=vmem, size = 0x1000, scoped, tag = 'scoped mem for output reshape']
    #allocation1 [shape = 'u8[4096]{0}', space=vmem, size = 0x1000, scoped, tag = 'scoped mem for input reshape']
    %s3 = ssub.s32 16, 1
    %v4 = vld [vmem:[%s0] sm:%s3]
    %5 = vst [vmem:[#allocation1] sm:%s3] %v4
    %v6 = vld [vmem:[#allocation1] sm:$0x1]
    %vm7 = vcmask 64512
    %8 = vst.msk [vmem:[#allocation0] sm:$0x1] %vm7, %v6
    %s9 = scalar_lea.vmem [#allocation1], 3
    %v10 = vld [vmem:[%s9] sm:$0x1]
    %11 = vrot.lane.b32.xlu0 %v10, 24
    %v12 = vpop.permute.xlu0 %11
    %vm13 = vcmask 261312
    %14 = vst.msk [vmem:[#allocation0] sm:$0x1] %vm13, %v12
    %s15 = scalar_lea.vmem [#allocation1], 2
    %v16 = vld [vmem:[%s15] sm:$0x1]
    %17 = vrot.lane.b32.xlu0 %v16, 16
    %v18 = vpop.permute.xlu0 %17
    %vm19 = vcmask 195712
    %20 = vst.msk [vmem:[#allocation0] sm:$0x1] %vm19, %v18
    %s21 = scalar_lea.vmem [#allocation1], 1
    %v22 = vld [vmem:[%s21] sm:$0x1]
    %23 = vrot.lane.b32.xlu0 %v22, 8
    %v24 = vpop.permute.xlu0 %23
    %vm25 = vcmask 130112
    %26 = vst.msk [vmem:[#allocation0] sm:$0x1] %vm25, %v24
    %s28 = ssub.s32 2, 1
    %v29 = vld [vmem:[#allocation0] sm:%s28]
    %s31 = ssub.s32 2, 1
    %32 = vst [vmem:[%s1] sm:%s31] %v29

// kernel: reverse.0
$region0: #{reverse.0}
  %s0 = inlined_call_operand.vmem [shape: f32[2,4,16,7], index: 0, kind: input, shape index: {}]
  %s1 = inlined_call_operand.vmem [shape: f32[2,4,16,7], index: 1, kind: output, shape index: {}]
  $region1: #{reverse.0} parent=0
    #allocation0 [shape = 'u8[65536]{0}', space=vmem, size = 0x10000, scoped, tag = 'operand span for operand 0']
    #allocation1 [shape = 'u8[32768]{0}', space=vmem, size = 0x8000, scoped, tag = 'operand span for operand 1']
    %s2 = scalar_lea.vmem [#allocation0], 8
    // Predicated region
    $region2: #{reverse.0} parent=1 // pred_check
      _
    $region3: #{reverse.0} parent=1 // pred_check_branch
      %4 = sbr.rel (0) target = $region5
    $region4: #{reverse.0} parent=1 // pred_region
      // Predicated region
      $region6: #{reverse.0} parent=4 // pred_check
        _
      $region7: #{reverse.0} parent=4 // pred_check_branch
        %6 = sbr.rel (0) target = $region9
      $region8: #{reverse.0} parent=4 // pred_region
        // Predicated region
        $region21: #{reverse.0} parent=8 // pred_check
          _
        $region22: #{reverse.0} parent=8 // pred_check_branch
          %36 = sbr.rel (0) target = $region24
        $region23: #{reverse.0} parent=8 // pred_region
          loop: start=0, step=1, limit=1
          $region25: #{reverse.0} parent=23 // loop_pre_header
            _
          $region26: #{reverse.0} parent=23 // loop_header
            %s38 = sphi 0, %s42
            %p39 = scmp.ge.s32.totalorder %s38, 1
            %s43 = sphi %s0, %s0
            %s44 = sphi %s2, %s2
          $region27: #{reverse.0} parent=23 // loop_header_branch
            %41 = sbr.rel (%p39) target = $region31
          $region28: #{reverse.0} parent=23 // loop_body
            %v45 = vld [vmem:[%s43] sm:$0xff]
            %46 = vst [vmem:[%s44] sm:$0xff] %v45
            %v47 = vld [vmem:[%s43 + $0x8] sm:$0xff]
            %48 = vst [vmem:[%s44 + $0x10] sm:$0xff] %v47
            %v49 = vld [vmem:[%s43 + $0x10] sm:$0xff]
            %50 = vst [vmem:[%s44 + $0x20] sm:$0xff] %v49
            %v51 = vld [vmem:[%s43 + $0x18] sm:$0xff]
            %52 = vst [vmem:[%s44 + $0x30] sm:$0xff] %v51
            %v53 = vld [vmem:[%s43 + $0x20] sm:$0xff]
            %54 = vst [vmem:[%s44 + $0x40] sm:$0xff] %v53
            %v55 = vld [vmem:[%s43 + $0x28] sm:$0xff]
            %56 = vst [vmem:[%s44 + $0x50] sm:$0xff] %v55
            %v57 = vld [vmem:[%s43 + $0x30] sm:$0xff]
            %58 = vst [vmem:[%s44 + $0x60] sm:$0xff] %v57
            %v59 = vld [vmem:[%s43 + $0x38] sm:$0xff]
            %60 = vst [vmem:[%s44 + $0x70] sm:$0xff] %v59
          $region29: #{reverse.0} parent=23 // loop_footer
            %s42 = sadd.s32 1, %s38
          $region30: #{reverse.0} parent=23 // loop_footer_branch
            %37 = sbr.rel target = $region26
          $region31: #{reverse.0} parent=23 // loop_exit
            _
        $region24: #{reverse.0} parent=8 // pred_fallthru
          _
        // Predicated region
        $region32: #{reverse.0} parent=8 // pred_check
          _
        $region33: #{reverse.0} parent=8 // pred_check_branch
          %62 = sbr.rel target = $region35
        $region34: #{reverse.0} parent=8 // pred_region
          _
        $region35: #{reverse.0} parent=8 // pred_fallthru
          _
      $region9: #{reverse.0} parent=4 // pred_fallthru
        _
      // Predicated region
      $region10: #{reverse.0} parent=4 // pred_check
        _
      $region11: #{reverse.0} parent=4 // pred_check_branch
        %8 = sbr.rel target = $region13
      $region12: #{reverse.0} parent=4 // pred_region
        %s10 = ssub.s32 256, 1
        loop: start=0, step=1, limit=1
        $region14: #{reverse.0} parent=12 // loop_pre_header
          _
        $region15: #{reverse.0} parent=12 // loop_header
          %s12 = sphi 0, %s16
          %p13 = scmp.ge.s32.totalorder %s12, 1
          %s17 = sphi %s0, %s0
          %s18 = sphi %s2, %s2
        $region16: #{reverse.0} parent=12 // loop_header_branch
          %15 = sbr.rel (%p13) target = $region20
        $region17: #{reverse.0} parent=12 // loop_body
          %v19 = vld [vmem:[%s17] sm:%s10]
          %20 = vst [vmem:[%s18] sm:%s10] %v19
          %v21 = vld [vmem:[%s17 + $0x8] sm:%s10]
          %22 = vst [vmem:[%s18 + $0x10] sm:%s10] %v21
          %v23 = vld [vmem:[%s17 + $0x10] sm:%s10]
          %24 = vst [vmem:[%s18 + $0x20] sm:%s10] %v23
          %v25 = vld [vmem:[%s17 + $0x18] sm:%s10]
          %26 = vst [vmem:[%s18 + $0x30] sm:%s10] %v25
          %v27 = vld [vmem:[%s17 + $0x20] sm:%s10]
          %28 = vst [vmem:[%s18 + $0x40] sm:%s10] %v27
          %v29 = vld [vmem:[%s17 + $0x28] sm:%s10]
          %30 = vst [vmem:[%s18 + $0x50] sm:%s10] %v29
          %v31 = vld [vmem:[%s17 + $0x30] sm:%s10]
          %32 = vst [vmem:[%s18 + $0x60] sm:%s10] %v31
          %v33 = vld [vmem:[%s17 + $0x38] sm:%s10]
          %34 = vst [vmem:[%s18 + $0x70] sm:%s10] %v33
        $region18: #{reverse.0} parent=12 // loop_footer
          %s16 = sadd.s32 1, %s12
        $region19: #{reverse.0} parent=12 // loop_footer_branch
          %11 = sbr.rel target = $region15
        $region20: #{reverse.0} parent=12 // loop_exit
          _
      $region13: #{reverse.0} parent=4 // pred_fallthru
        _
    $region5: #{reverse.0} parent=1 // pred_fallthru
      _
    %63 = vnop
    %s64 = scalar_lea.vmem [#allocation0], 7
    %v65 = vld [vmem:[%s64] ss:$-1 sm:$0xff]
    %v66 = vrot.slane %v65, 1
    %67 = vst [vmem:[#allocation1] sm:$0xff] %v66
    %s68 = scalar_lea.vmem [#allocation0], 8
    %s69 = scalar_lea.vmem %s68, 7 [#allocation0]
    %v70 = vld [vmem:[%s69] ss:$-1 sm:$0xff]
    %v71 = vrot.slane %v70, 1
    %v72 = vlaneseq
    %v73 = vshrl.u32 %v72, 7
    %vm74 = vcmp.lt.s32.totalorder %v73, 7
    %75 = vst.msk [vmem:[#allocation1] sm:$0xff] %vm74, %v71
    %s76 = scalar_lea.vmem [#allocation1], 8
    %s77 = scalar_lea.vmem [#allocation0], 16
    %s78 = scalar_lea.vmem %s77, 7 [#allocation0]
    %v79 = vld [vmem:[%s78] ss:$-1 sm:$0xff]
    %v80 = vrot.slane %v79, 1
    %81 = vst [vmem:[%s76] sm:$0xff] %v80
    %s82 = scalar_lea.vmem %s77, 8 [#allocation0]
    %s83 = scalar_lea.vmem %s82, 7 [#allocation0]
    %v84 = vld [vmem:[%s83] ss:$-1 sm:$0xff]
    %v85 = vrot.slane %v84, 1
    %v86 = vlaneseq
    %v87 = vshrl.u32 %v86, 7
    %vm88 = vcmp.lt.s32.totalorder %v87, 7
    %89 = vst.msk [vmem:[%s76] sm:$0xff] %vm88, %v85
    %s90 = scalar_lea.vmem [#allocation1], 16
    %s91 = scalar_lea.vmem [#allocation0], 32
    %s92 = scalar_lea.vmem %s91, 7 [#allocation0]
    %v93 = vld [vmem:[%s92] ss:$-1 sm:$0xff]
    %v94 = vrot.slane %v93, 1
    %95 = vst [vmem:[%s90] sm:$0xff] %v94
    %s96 = scalar_lea.vmem %s91, 8 [#allocation0]
    %s97 = scalar_lea.vmem %s96, 7 [#allocation0]
    %v98 = vld [vmem:[%s97] ss:$-1 sm:$0xff]
    %v99 = vrot.slane %v98, 1
    %v100 = vlaneseq
    %v101 = vshrl.u32 %v100, 7
    %vm102 = vcmp.lt.s32.totalorder %v101, 7
    %103 = vst.msk [vmem:[%s90] sm:$0xff] %vm102, %v99
    %s104 = scalar_lea.vmem [#allocation1], 24
    %s105 = scalar_lea.vmem [#allocation0], 48
    %s106 = scalar_lea.vmem %s105, 7 [#allocation0]
    %v107 = vld [vmem:[%s106] ss:$-1 sm:$0xff]
    %v108 = vrot.slane %v107, 1
    %109 = vst [vmem:[%s104] sm:$0xff] %v108
    %s110 = scalar_lea.vmem %s105, 8 [#allocation0]
    %s111 = scalar_lea.vmem %s110, 7 [#allocation0]
    %v112 = vld [vmem:[%s111] ss:$-1 sm:$0xff]
    %v113 = vrot.slane %v112, 1
    %v114 = vlaneseq
    %v115 = vshrl.u32 %v114, 7
    %vm116 = vcmp.lt.s32.totalorder %v115, 7
    %117 = vst.msk [vmem:[%s104] sm:$0xff] %vm116, %v113
    %s118 = scalar_lea.vmem [#allocation1], 32
    %s119 = scalar_lea.vmem [#allocation0], 64
    %s120 = scalar_lea.vmem %s119, 7 [#allocation0]
    %v121 = vld [vmem:[%s120] ss:$-1 sm:$0xff]
    %v122 = vrot.slane %v121, 1
    %123 = vst [vmem:[%s118] sm:$0xff] %v122
    %s124 = scalar_lea.vmem %s119, 8 [#allocation0]
    %s125 = scalar_lea.vmem %s124, 7 [#allocation0]
    %v126 = vld [vmem:[%s125] ss:$-1 sm:$0xff]
    %v127 = vrot.slane %v126, 1
    %v128 = vlaneseq
    %v129 = vshrl.u32 %v128, 7
    %vm130 = vcmp.lt.s32.totalorder %v129, 7
    %131 = vst.msk [vmem:[%s118] sm:$0xff] %vm130, %v127
    %s132 = scalar_lea.vmem [#allocation1], 40
    %s133 = scalar_lea.vmem [#allocation0], 80
    %s134 = scalar_lea.vmem %s133, 7 [#allocation0]
    %v135 = vld [vmem:[%s134] ss:$-1 sm:$0xff]
    %v136 = vrot.slane %v135, 1
    %137 = vst [vmem:[%s132] sm:$0xff] %v136
    %s138 = scalar_lea.vmem %s133, 8 [#allocation0]
    %s139 = scalar_lea.vmem %s138, 7 [#allocation0]
    %v140 = vld [vmem:[%s139] ss:$-1 sm:$0xff]
    %v141 = vrot.slane %v140, 1
    %v142 = vlaneseq
    %v143 = vshrl.u32 %v142, 7
    %vm144 = vcmp.lt.s32.totalorder %v143, 7
    %145 = vst.msk [vmem:[%s132] sm:$0xff] %vm144, %v141
    %s146 = scalar_lea.vmem [#allocation1], 48
    %s147 = scalar_lea.vmem [#allocation0], 96
    %s148 = scalar_lea.vmem %s147, 7 [#allocation0]
    %v149 = vld [vmem:[%s148] ss:$-1 sm:$0xff]
    %v150 = vrot.slane %v149, 1
    %151 = vst [vmem:[%s146] sm:$0xff] %v150
    %s152 = scalar_lea.vmem %s147, 8 [#allocation0]
    %s153 = scalar_lea.vmem %s152, 7 [#allocation0]
    %v154 = vld [vmem:[%s153] ss:$-1 sm:$0xff]
    %v155 = vrot.slane %v154, 1
    %v156 = vlaneseq
    %v157 = vshrl.u32 %v156, 7
    %vm158 = vcmp.lt.s32.totalorder %v157, 7
    %159 = vst.msk [vmem:[%s146] sm:$0xff] %vm158, %v155
    %s160 = scalar_lea.vmem [#allocation1], 56
    %s161 = scalar_lea.vmem [#allocation0], 112
    %s162 = scalar_lea.vmem %s161, 7 [#allocation0]
    %v163 = vld [vmem:[%s162] ss:$-1 sm:$0xff]
    %v164 = vrot.slane %v163, 1
    %165 = vst [vmem:[%s160] sm:$0xff] %v164
    %s166 = scalar_lea.vmem %s161, 8 [#allocation0]
    %s167 = scalar_lea.vmem %s166, 7 [#allocation0]
    %v168 = vld [vmem:[%s167] ss:$-1 sm:$0xff]
    %v169 = vrot.slane %v168, 1
    %v170 = vlaneseq
    %v171 = vshrl.u32 %v170, 7
    %vm172 = vcmp.lt.s32.totalorder %v171, 7
    %173 = vst.msk [vmem:[%s160] sm:$0xff] %vm172, %v169
    // Predicated region
    $region36: #{reverse.0} parent=1 // pred_check
      _
    $region37: #{reverse.0} parent=1 // pred_check_branch
      %175 = sbr.rel (0) target = $region39
    $region38: #{reverse.0} parent=1 // pred_region
      // Predicated region
      $region40: #{reverse.0} parent=38 // pred_check
        _
      $region41: #{reverse.0} parent=38 // pred_check_branch
        %177 = sbr.rel (0) target = $region43
      $region42: #{reverse.0} parent=38 // pred_region
        // Predicated region
        $region55: #{reverse.0} parent=42 // pred_check
          _
        $region56: #{reverse.0} parent=42 // pred_check_branch
          %207 = sbr.rel (0) target = $region58
        $region57: #{reverse.0} parent=42 // pred_region
          loop: start=0, step=1, limit=1
          $region59: #{reverse.0} parent=57 // loop_pre_header
            _
          $region60: #{reverse.0} parent=57 // loop_header
            %s209 = sphi 0, %s213
            %p210 = scmp.ge.s32.totalorder %s209, 1
            %s214 = sphi [#allocation1], [#allocation1]
            %s215 = sphi %s1, %s1
          $region61: #{reverse.0} parent=57 // loop_header_branch
            %212 = sbr.rel (%p210) target = $region65
          $region62: #{reverse.0} parent=57 // loop_body
            %v216 = vld [vmem:[%s214] sm:$0xff]
            %217 = vst [vmem:[%s215] sm:$0xff] %v216
            %v218 = vld [vmem:[%s214 + $0x8] sm:$0xff]
            %219 = vst [vmem:[%s215 + $0x8] sm:$0xff] %v218
            %v220 = vld [vmem:[%s214 + $0x10] sm:$0xff]
            %221 = vst [vmem:[%s215 + $0x10] sm:$0xff] %v220
            %v222 = vld [vmem:[%s214 + $0x18] sm:$0xff]
            %223 = vst [vmem:[%s215 + $0x18] sm:$0xff] %v222
            %v224 = vld [vmem:[%s214 + $0x20] sm:$0xff]
            %225 = vst [vmem:[%s215 + $0x20] sm:$0xff] %v224
            %v226 = vld [vmem:[%s214 + $0x28] sm:$0xff]
            %227 = vst [vmem:[%s215 + $0x28] sm:$0xff] %v226
            %v228 = vld [vmem:[%s214 + $0x30] sm:$0xff]
            %229 = vst [vmem:[%s215 + $0x30] sm:$0xff] %v228
            %v230 = vld [vmem:[%s214 + $0x38] sm:$0xff]
            %231 = vst [vmem:[%s215 + $0x38] sm:$0xff] %v230
          $region63: #{reverse.0} parent=57 // loop_footer
            %s213 = sadd.s32 1, %s209
          $region64: #{reverse.0} parent=57 // loop_footer_branch
            %208 = sbr.rel target = $region60
          $region65: #{reverse.0} parent=57 // loop_exit
            _
        $region58: #{reverse.0} parent=42 // pred_fallthru
          _
        // Predicated region
        $region66: #{reverse.0} parent=42 // pred_check
          _
        $region67: #{reverse.0} parent=42 // pred_check_branch
          %233 = sbr.rel target = $region69
        $region68: #{reverse.0} parent=42 // pred_region
          _
        $region69: #{reverse.0} parent=42 // pred_fallthru
          _
      $region43: #{reverse.0} parent=38 // pred_fallthru
        _
      // Predicated region
      $region44: #{reverse.0} parent=38 // pred_check
        _
      $region45: #{reverse.0} parent=38 // pred_check_branch
        %179 = sbr.rel target = $region47
      $region46: #{reverse.0} parent=38 // pred_region
        %s181 = ssub.s32 256, 1
        loop: start=0, step=1, limit=1
        $region48: #{reverse.0} parent=46 // loop_pre_header
          _
        $region49: #{reverse.0} parent=46 // loop_header
          %s183 = sphi 0, %s187
          %p184 = scmp.ge.s32.totalorder %s183, 1
          %s188 = sphi [#allocation1], [#allocation1]
          %s189 = sphi %s1, %s1
        $region50: #{reverse.0} parent=46 // loop_header_branch
          %186 = sbr.rel (%p184) target = $region54
        $region51: #{reverse.0} parent=46 // loop_body
          %v190 = vld [vmem:[%s188] sm:%s181]
          %191 = vst [vmem:[%s189] sm:%s181] %v190
          %v192 = vld [vmem:[%s188 + $0x8] sm:%s181]
          %193 = vst [vmem:[%s189 + $0x8] sm:%s181] %v192
          %v194 = vld [vmem:[%s188 + $0x10] sm:%s181]
          %195 = vst [vmem:[%s189 + $0x10] sm:%s181] %v194
          %v196 = vld [vmem:[%s188 + $0x18] sm:%s181]
          %197 = vst [vmem:[%s189 + $0x18] sm:%s181] %v196
          %v198 = vld [vmem:[%s188 + $0x20] sm:%s181]
          %199 = vst [vmem:[%s189 + $0x20] sm:%s181] %v198
          %v200 = vld [vmem:[%s188 + $0x28] sm:%s181]
          %201 = vst [vmem:[%s189 + $0x28] sm:%s181] %v200
          %v202 = vld [vmem:[%s188 + $0x30] sm:%s181]
          %203 = vst [vmem:[%s189 + $0x30] sm:%s181] %v202
          %v204 = vld [vmem:[%s188 + $0x38] sm:%s181]
          %205 = vst [vmem:[%s189 + $0x38] sm:%s181] %v204
        $region52: #{reverse.0} parent=46 // loop_footer
          %s187 = sadd.s32 1, %s183
        $region53: #{reverse.0} parent=46 // loop_footer_branch
          %182 = sbr.rel target = $region49
        $region54: #{reverse.0} parent=46 // loop_exit
          _
      $region47: #{reverse.0} parent=38 // pred_fallthru
        _
    $region39: #{reverse.0} parent=1 // pred_fallthru
      _
    %234 = vnop

// kernel: fdb_forward.3
$region0: #{fdb_forward.3}
  #allocation0 [shape = 'u32[]', space=smem, size = 0x4, offset = 0x4, fixed_abs, tag = 'smem constant byte address 0x4 - core index']
  #allocation1 [shape = 'u32[72,128]{1,0:T(1,128)}', space=vmem, size = 0x9000, scoped, tag = 'internal scratch']
  %s0 = inlined_call_operand.vmem [shape: f32[2,4,8,128], index: 0, kind: input, shape index: {}]
  %s1 = inlined_call_operand.vmem [shape: f32[16], index: 1, kind: input, shape index: {}]
  %s2 = inlined_call_operand.vmem [shape: f32[4], index: 2, kind: input, shape index: {}]
  %s3 = inlined_call_operand.vmem [shape: f32[2,4,8,128], index: 3, kind: output, shape index: {}]
  %s4 = sld [smem:[#allocation0]]
  $region53: #{fdb_forward.3} parent=0
    _
  %s6 = ssub.s32 1, %s4
  %s7 = scalar_select 0, %s6, %s4
  $region1: #{fdb_forward.3} parent=0
    #allocation2 [shape = 'u8[512]{0}', space=smem, size = 0x200, scoped, tag = 'input window, operand 1, single buffered']
    #allocation3 [shape = 's32[2]{0}', space=sflag, size = 0x8, scoped, tag = 'scoped memory for fdb_forward.3']
    #allocation4 [shape = 'u8[512]{0}', space=smem, size = 0x200, scoped, tag = 'input window, operand 2, single buffered']
    #allocation5 [shape = 's32[1]{0}', space=sflag, size = 0x4, scoped, tag = 'scoped memory for fdb_forward.3']
    %8 = vsyncpa [#allocation3], 0
    %9 = vsyncpa [#allocation5], 0
    loop: start=0, step=1, limit=4
    $region2: #{fdb_forward.3} parent=1 // loop_pre_header
      _
    $region3: #{fdb_forward.3} parent=1 // loop_header
      %s11 = sphi 0, %s15
      %p12 = scmp.ge.s32.totalorder %s11, 4
      %s18 = sphi 0, %s30
      %s19 = sphi 0, %s26
      %s20 = sphi 0, %s18
      %s21 = sphi 0, %s19
      %s22 = sphi 0, %s20
      %s23 = sphi 0, %s21
      %s35 = sphi 0, %s37
      %s38 = sphi 0, %s35
      %s39 = sphi 0, %s38
      %s55 = sphi 0, %s39
      %s59 = sphi 0, %s59
      %s61 = sphi 0, %s59
      %s62 = sphi 0, %s61
      %s76 = sphi 0, %s62
      %s80 = sphi 0, %s80
      %s82 = sphi 0, %s80
      %s83 = sphi 0, %s82
      %s97 = sphi 0, %s83
      %s105 = sphi 0, %s107
      %s108 = sphi 0, %s105
      %s109 = sphi 0, %s108
      %s125 = sphi 0, %s109
    $region4: #{fdb_forward.3} parent=1 // loop_header_branch
      %14 = sbr.rel (%p12) target = $region8
    $region5: #{fdb_forward.3} parent=1 // loop_body
      %s16 = ssub.s32 %s11, 1
      %s17 = ssub.s32 %s11, 2
      %s24 = sadd.s32 1, %s19
      %p25 = scmp.ge.s32.totalorder %s24, 1
      %s26 = scalar_select %p25, 0, %s24
      %s27 = sadd.s32 1, %s18
      %s28 = scalar_select %p25, %s27, %s18
      %p29 = scmp.ge.s32.totalorder %s28, 2
      %s30 = scalar_select %p29, 0, %s28
      %s31 = ssub.s32 %s18, %s30
      %s32 = ssub.s32 %s19, %s26
      %s33 = sor.u32 %s31, %s32
      %p34 = scmp.eq.s32.totalorder %s33, 0
      %s36 = sadd.s32 %s35, 1
      %s37 = scalar_select %p34, %s35, %s36
      %p40 = pneg %p34
      %p41 = scmp.eq.s32.totalorder %s11, 1
      %p42 = por %p40, %p41
      %p43 = scmp.ne.s32.totalorder %s35, %s38
      %p44 = scmp.eq.s32.totalorder %s11, 0
      %p45 = por %p43, %p44
      %p46 = scmp.ne.s32.totalorder %s35, %s38
      %p47 = scmp.eq.s32.totalorder %s16, 1
      %p48 = por %p46, %p47
      %p49 = scmp.ne.s32.totalorder %s38, %s39
      %p50 = scmp.eq.s32.totalorder %s16, 0
      %p51 = por %p49, %p50
      %p52 = scmp.ne.s32.totalorder %s38, %s39
      %p53 = scmp.eq.s32.totalorder %s17, 1
      %p54 = por %p52, %p53
      %p56 = scmp.ne.s32.totalorder %s39, %s55
      %p57 = scmp.eq.s32.totalorder %s17, 0
      %p58 = por %p56, %p57
      %s60 = sadd.s32 %s59, 1
      %p63 = scmp.eq.s32.totalorder %s11, 1
      %p64 = scmp.ne.s32.totalorder %s59, %s61
      %p65 = scmp.eq.s32.totalorder %s11, 0
      %p66 = por %p64, %p65
      %p67 = scmp.ne.s32.totalorder %s59, %s61
      %p68 = scmp.eq.s32.totalorder %s16, 1
      %p69 = por %p67, %p68
      %p70 = scmp.ne.s32.totalorder %s61, %s62
      %p71 = scmp.eq.s32.totalorder %s16, 0
      %p72 = por %p70, %p71
      %p73 = scmp.ne.s32.totalorder %s61, %s62
      %p74 = scmp.eq.s32.totalorder %s17, 1
      %p75 = por %p73, %p74
      %p77 = scmp.ne.s32.totalorder %s62, %s76
      %p78 = scmp.eq.s32.totalorder %s17, 0
      %p79 = por %p77, %p78
      %s81 = sadd.s32 %s80, 1
      %p84 = scmp.eq.s32.totalorder %s11, 1
      %p85 = scmp.ne.s32.totalorder %s80, %s82
      %p86 = scmp.eq.s32.totalorder %s11, 0
      %p87 = por %p85, %p86
      %p88 = scmp.ne.s32.totalorder %s80, %s82
      %p89 = scmp.eq.s32.totalorder %s16, 1
      %p90 = por %p88, %p89
      %p91 = scmp.ne.s32.totalorder %s82, %s83
      %p92 = scmp.eq.s32.totalorder %s16, 0
      %p93 = por %p91, %p92
      %p94 = scmp.ne.s32.totalorder %s82, %s83
      %p95 = scmp.eq.s32.totalorder %s17, 1
      %p96 = por %p94, %p95
      %p98 = scmp.ne.s32.totalorder %s83, %s97
      %p99 = scmp.eq.s32.totalorder %s17, 0
      %p100 = por %p98, %p99
      %s101 = ssub.s32 %s18, %s30
      %s102 = ssub.s32 %s19, %s26
      %s103 = sor.u32 %s101, %s102
      %p104 = scmp.eq.s32.totalorder %s103, 0
      %s106 = sadd.s32 %s105, 1
      %s107 = scalar_select %p104, %s105, %s106
      %p110 = pneg %p104
      %p111 = scmp.eq.s32.totalorder %s11, 1
      %p112 = por %p110, %p111
      %p113 = scmp.ne.s32.totalorder %s105, %s108
      %p114 = scmp.eq.s32.totalorder %s11, 0
      %p115 = por %p113, %p114
      %p116 = scmp.ne.s32.totalorder %s105, %s108
      %p117 = scmp.eq.s32.totalorder %s16, 1
      %p118 = por %p116, %p117
      %p119 = scmp.ne.s32.totalorder %s108, %s109
      %p120 = scmp.eq.s32.totalorder %s16, 0
      %p121 = por %p119, %p120
      %p122 = scmp.ne.s32.totalorder %s108, %s109
      %p123 = scmp.eq.s32.totalorder %s17, 1
      %p124 = por %p122, %p123
      %p126 = scmp.ne.s32.totalorder %s109, %s125
      %p127 = scmp.eq.s32.totalorder %s17, 0
      %p128 = por %p126, %p127
      %p129 = scmp.le.s32.totalorder 1, %s11
      %p130 = scmp.lt.s32.totalorder %s11, 3
      %p131 = pnand %p129, %p130
      %p132 = pneg %p131
      // Predicated region
      $region9: #{fdb_forward.3} parent=5 // pred_check
        _
      $region10: #{fdb_forward.3} parent=5 // pred_check_branch
        %134 = sbr.rel (%p131) target = $region12
      $region11: #{fdb_forward.3} parent=5 // pred_region
        %s135 = ssub.s32 %s11, 1
        // Predicated region
        $region13: #{fdb_forward.3} parent=11 // pred_check
          %p136 = pneg %p72
        $region14: #{fdb_forward.3} parent=11 // pred_check_branch
          %138 = sbr.rel (%p136) target = $region16
        $region15: #{fdb_forward.3} parent=11 // pred_region
          %140 = vsyncadd [#allocation3], 0
          %s142 = sshll.u32 %s1, 4
          %s143 = int_to_ptr.vmem [resolvable:$true] %s142
          %145 = dma.vmem_to_smem %s143, 16, [#allocation2], [#allocation3]
        $region16: #{fdb_forward.3} parent=11 // pred_fallthru
          _
        // Predicated region
        $region17: #{fdb_forward.3} parent=11 // pred_check
          %p146 = pneg %p93
        $region18: #{fdb_forward.3} parent=11 // pred_check_branch
          %148 = sbr.rel (%p146) target = $region20
        $region19: #{fdb_forward.3} parent=11 // pred_region
          %150 = vsyncadd [#allocation5], 0
          %s152 = sshll.u32 %s2, 4
          %s153 = int_to_ptr.vmem [resolvable:$true] %s152
          %155 = dma.vmem_to_smem %s153, 16, [#allocation4], [#allocation5]
        $region20: #{fdb_forward.3} parent=11 // pred_fallthru
          _
      $region12: #{fdb_forward.3} parent=5 // pred_fallthru
        _
      %p156 = scmp.lt.s32.totalorder %s11, 2
      // Predicated region
      $region21: #{fdb_forward.3} parent=5 // pred_check
        %p157 = pneg %p156
      $region22: #{fdb_forward.3} parent=5 // pred_check_branch
        %159 = sbr.rel (%p157) target = $region24
      $region23: #{fdb_forward.3} parent=5 // pred_region
        // Predicated region
        $region25: #{fdb_forward.3} parent=23 // pred_check
          %p160 = pneg %p45
        $region26: #{fdb_forward.3} parent=23 // pred_check_branch
          %162 = sbr.rel (%p160) target = $region28
        $region27: #{fdb_forward.3} parent=23 // pred_region
          %p163 = scmp.lt.s32.totalorder %s18, 1
          %s164 = scalar_select %p163, %s18, 1
          %p165 = scmp.lt.s32.totalorder %s19, 0
          %s166 = scalar_select %p165, %s19, 0
          %s167 = smul.addr %s164, 4
          %s168 = sadd.s32 %s166, %s167
          %s169 = smul.addr %s168, 8
          %s170 = scalar_lea.vmem %s0, %s169
        $region28: #{fdb_forward.3} parent=23 // pred_fallthru
          _
      $region24: #{fdb_forward.3} parent=5 // pred_fallthru
        _
      %p171 = scmp.le.s32.totalorder 1, %s11
      %p172 = scmp.lt.s32.totalorder %s11, 3
      %p173 = pnand %p171, %p172
      %p174 = pneg %p173
      // Predicated region
      $region29: #{fdb_forward.3} parent=5 // pred_check
        _
      $region30: #{fdb_forward.3} parent=5 // pred_check_branch
        %176 = sbr.rel (%p173) target = $region32
      $region31: #{fdb_forward.3} parent=5 // pred_region
        %s177 = ssub.s32 %s11, 1
        // Predicated region
        $region33: #{fdb_forward.3} parent=31 // pred_check
          %p178 = pneg %p72
        $region34: #{fdb_forward.3} parent=31 // pred_check_branch
          %180 = sbr.rel (%p178) target = $region36
        $region35: #{fdb_forward.3} parent=31 // pred_region
          %182 = dma.done [#allocation3], 16
        $region36: #{fdb_forward.3} parent=31 // pred_fallthru
          _
        // Predicated region
        $region37: #{fdb_forward.3} parent=31 // pred_check
          %p183 = pneg %p93
        $region38: #{fdb_forward.3} parent=31 // pred_check_branch
          %185 = sbr.rel (%p183) target = $region40
        $region39: #{fdb_forward.3} parent=31 // pred_region
          %187 = dma.done [#allocation5], 16
        $region40: #{fdb_forward.3} parent=31 // pred_fallthru
          _
        %188 = sfence
        %p189 = scmp.lt.s32.totalorder %s20, 1
        %s190 = scalar_select %p189, %s20, 1
        %p191 = scmp.lt.s32.totalorder %s21, 0
        %s192 = scalar_select %p191, %s21, 0
        %s193 = smul.addr %s190, 4
        %s194 = sadd.s32 %s192, %s193
        %s195 = smul.addr %s194, 8
        %s196 = scalar_lea.vmem %s0, %s195
        %p197 = pneg %p51
        %p198 = pneg %p48
        %p199 = pneg %p72
        %p200 = pneg %p69
        %p201 = pneg %p93
        %p202 = pneg %p90
        %p203 = pneg %p121
        %p204 = pneg %p118
        %p205 = scmp.lt.s32.totalorder %s20, 1
        %s206 = scalar_select %p205, %s20, 1
        %p207 = scmp.lt.s32.totalorder %s21, 0
        %s208 = scalar_select %p207, %s21, 0
        %s209 = smul.addr %s206, 4
        %s210 = sadd.s32 %s208, %s209
        %s211 = smul.addr %s210, 8
        %s212 = scalar_lea.vmem %s3, %s211
        %p213 = scmp.lt.s32.totalorder %s20, 1
        %s214 = scalar_select %p213, %s20, 1
        %p215 = scmp.lt.s32.totalorder %s21, 0
        %s216 = scalar_select %p215, %s21, 0
        %s217 = smul.addr %s214, 4
        %s218 = sadd.s32 %s216, %s217
        %s219 = smul.addr %s218, 8
        %s220 = scalar_lea.vmem %s0, %s219
        %p221 = scmp.lt.s32.totalorder %s20, 1
        %s222 = scalar_select %p221, %s20, 1
        %p223 = scmp.lt.s32.totalorder %s21, 0
        %s224 = scalar_select %p223, %s21, 0
        %s225 = smul.addr %s222, 4
        %s226 = sadd.s32 %s224, %s225
        %s227 = smul.addr %s226, 8
        %s228 = scalar_lea.vmem %s3, %s227
        %v229 = vld [vmem:[%s220] sm:$0xff]
        %v230 = vand.u32 2147483647, %v229
        %s231 = scalar_lea.vmem %s220, 8
        %v232 = vld [vmem:[%s231] sm:$0xff]
        %v233 = vand.u32 2147483647, %v232
        %s234 = scalar_lea.vmem %s220, 16
        %v235 = vld [vmem:[%s234] sm:$0xff]
        %v236 = vand.u32 2147483647, %v235
        %s237 = scalar_lea.vmem %s220, 24
        %v238 = vld [vmem:[%s237] sm:$0xff]
        %v239 = vand.u32 2147483647, %v238
        %s240 = sld [smem:[#allocation2]]
        %v241 = vstv %s240
        %v242 = vmul.f32 %v230, %v241
        %s243 = sld [smem:[#allocation2 + $0x1]]
        %v244 = vstv %s243
        %v245 = vmul.f32 %v233, %v244
        %v246 = vadd.f32 %v242, %v245
        %s247 = sld [smem:[#allocation2 + $0x2]]
        %v248 = vstv %s247
        %v249 = vmul.f32 %v236, %v248
        %v250 = vadd.f32 %v246, %v249
        %s251 = sld [smem:[#allocation2 + $0x3]]
        %v252 = vstv %s251
        %v253 = vmul.f32 %v239, %v252
        %v254 = vadd.f32 %v250, %v253
        %s255 = sld [smem:[#allocation4]]
        %v256 = vstv %s255
        %v257 = vadd.f32 %v254, %v256
        %s258 = sld [smem:[#allocation2 + $0x4]]
        %v259 = vstv %s258
        %v260 = vmul.f32 %v230, %v259
        %s261 = sld [smem:[#allocation2 + $0x5]]
        %v262 = vstv %s261
        %v263 = vmul.f32 %v233, %v262
        %v264 = vadd.f32 %v260, %v263
        %s265 = sld [smem:[#allocation2 + $0x6]]
        %v266 = vstv %s265
        %v267 = vmul.f32 %v236, %v266
        %v268 = vadd.f32 %v264, %v267
        %s269 = sld [smem:[#allocation2 + $0x7]]
        %v270 = vstv %s269
        %v271 = vmul.f32 %v239, %v270
        %v272 = vadd.f32 %v268, %v271
        %s273 = sld [smem:[#allocation4 + $0x1]]
        %v274 = vstv %s273
        %v275 = vadd.f32 %v272, %v274
        %s276 = sld [smem:[#allocation2 + $0x8]]
        %v277 = vstv %s276
        %v278 = vmul.f32 %v230, %v277
        %s279 = sld [smem:[#allocation2 + $0x9]]
        %v280 = vstv %s279
        %v281 = vmul.f32 %v233, %v280
        %v282 = vadd.f32 %v278, %v281
        %s283 = sld [smem:[#allocation2 + $0xa]]
        %v284 = vstv %s283
        %v285 = vmul.f32 %v236, %v284
        %v286 = vadd.f32 %v282, %v285
        %s287 = sld [smem:[#allocation2 + $0xb]]
        %v288 = vstv %s287
        %v289 = vmul.f32 %v239, %v288
        %v290 = vadd.f32 %v286, %v289
        %s291 = sld [smem:[#allocation4 + $0x2]]
        %v292 = vstv %s291
        %v293 = vadd.f32 %v290, %v292
        %s294 = sld [smem:[#allocation2 + $0xc]]
        %v295 = vstv %s294
        %v296 = vmul.f32 %v230, %v295
        %s297 = sld [smem:[#allocation2 + $0xd]]
        %v298 = vstv %s297
        %v299 = vmul.f32 %v233, %v298
        %v300 = vadd.f32 %v296, %v299
        %s301 = sld [smem:[#allocation2 + $0xe]]
        %v302 = vstv %s301
        %v303 = vmul.f32 %v236, %v302
        %v304 = vadd.f32 %v300, %v303
        %s305 = sld [smem:[#allocation2 + $0xf]]
        %v306 = vstv %s305
        %v307 = vmul.f32 %v239, %v306
        %v308 = vadd.f32 %v304, %v307
        %s309 = sld [smem:[#allocation4 + $0x3]]
        %v310 = vstv %s309
        %v311 = vadd.f32 %v308, %v310
        %312 = vst [vmem:[%s228] sm:$0xff] %v257
        %s313 = scalar_lea.vmem %s228, 8
        %314 = vst [vmem:[%s313] sm:$0xff] %v275
        %s315 = scalar_lea.vmem %s228, 16
        %316 = vst [vmem:[%s315] sm:$0xff] %v293
        %s317 = scalar_lea.vmem %s228, 24
        %318 = vst [vmem:[%s317] sm:$0xff] %v311
        %p319 = scmp.lt.s32.totalorder %s20, 1
        %s320 = scalar_select %p319, %s20, 1
        %p321 = scmp.lt.s32.totalorder %s21, 0
        %s322 = scalar_select %p321, %s21, 0
        %s323 = smul.addr %s320, 4
        %s324 = sadd.s32 %s322, %s323
        %s325 = smul.addr %s324, 8
        %s326 = scalar_lea.vmem %s3, %s325
        // Predicated region
        $region41: #{fdb_forward.3} parent=31 // pred_check
          %p327 = pneg %p118
        $region42: #{fdb_forward.3} parent=31 // pred_check_branch
          %329 = sbr.rel (%p327) target = $region44
        $region43: #{fdb_forward.3} parent=31 // pred_region
          _
        $region44: #{fdb_forward.3} parent=31 // pred_fallthru
          _
      $region32: #{fdb_forward.3} parent=5 // pred_fallthru
        _
      %p330 = scmp.le.s32.totalorder 2, %s11
      // Predicated region
      $region45: #{fdb_forward.3} parent=5 // pred_check
        %p331 = pneg %p330
      $region46: #{fdb_forward.3} parent=5 // pred_check_branch
        %333 = sbr.rel (%p331) target = $region48
      $region47: #{fdb_forward.3} parent=5 // pred_region
        %s334 = ssub.s32 %s11, 2
        // Predicated region
        $region49: #{fdb_forward.3} parent=47 // pred_check
          %p335 = pneg %p124
        $region50: #{fdb_forward.3} parent=47 // pred_check_branch
          %337 = sbr.rel (%p335) target = $region52
        $region51: #{fdb_forward.3} parent=47 // pred_region
          %p338 = scmp.lt.s32.totalorder %s22, 1
          %s339 = scalar_select %p338, %s22, 1
          %p340 = scmp.lt.s32.totalorder %s23, 0
          %s341 = scalar_select %p340, %s23, 0
          %s342 = smul.addr %s339, 4
          %s343 = sadd.s32 %s341, %s342
          %s344 = smul.addr %s343, 8
          %s345 = scalar_lea.vmem %s3, %s344
        $region52: #{fdb_forward.3} parent=47 // pred_fallthru
          _
      $region48: #{fdb_forward.3} parent=5 // pred_fallthru
        _
    $region6: #{fdb_forward.3} parent=1 // loop_footer
      %s15 = sadd.s32 1, %s11
    $region7: #{fdb_forward.3} parent=1 // loop_footer_branch
      %10 = sbr.rel target = $region3
    $region8: #{fdb_forward.3} parent=1 // loop_exit
      _
    %346 = vsyncpa [#allocation3], 1
    %s347 = scalar_lea.sflag [#allocation3], 1
    %348 = vsyncpa %s347, 1
    %349 = vsyncpa [#allocation5], 1

// kernel: fdb_forward.2
$region0: #{fdb_forward.2}
  #allocation0 [shape = 'u32[]', space=smem, size = 0x4, offset = 0x4, fixed_abs, tag = 'smem constant byte address 0x4 - core index']
  #allocation1 [shape = 'u32[72,128]{1,0:T(1,128)}', space=vmem, size = 0x9000, scoped, tag = 'internal scratch']
  %s0 = inlined_call_operand.vmem [shape: f32[2,4,8,128], index: 0, kind: input, shape index: {}]
  %s1 = inlined_call_operand.vmem [shape: f32[2,4,8,128], index: 1, kind: input, shape index: {}]
  %s2 = inlined_call_operand.vmem [shape: f32[2,4,8,128], index: 2, kind: input, shape index: {}]
  %s3 = inlined_call_operand.vmem [shape: f32[2,4,8,128], index: 3, kind: input, shape index: {}]
  %s4 = inlined_call_operand.vmem [shape: f32[16], index: 4, kind: input, shape index: {}]
  %s5 = inlined_call_operand.vmem [shape: f32[4], index: 5, kind: input, shape index: {}]
  %s6 = inlined_call_operand.vmem [shape: f32[16], index: 6, kind: input, shape index: {}]
  %s7 = inlined_call_operand.vmem [shape: f32[4], index: 7, kind: input, shape index: {}]
  %s8 = inlined_call_operand.vmem [shape: f32[32], index: 8, kind: input, shape index: {}]
  %s9 = inlined_call_operand.vmem [shape: f32[4], index: 9, kind: input, shape index: {}]
  %s10 = inlined_call_operand.vmem [shape: f32[16], index: 10, kind: input, shape index: {}]
  %s11 = inlined_call_operand.vmem [shape: f32[4], index: 11, kind: input, shape index: {}]
  %s12 = inlined_call_operand.vmem [shape: f32[32], index: 12, kind: input, shape index: {}]
  %s13 = inlined_call_operand.vmem [shape: f32[4], index: 13, kind: input, shape index: {}]
  %s14 = inlined_call_operand.vmem [shape: f32[16], index: 14, kind: input, shape index: {}]
  %s15 = inlined_call_operand.vmem [shape: f32[4], index: 15, kind: input, shape index: {}]
  %s16 = inlined_call_operand.vmem [shape: f32[2,4,8,128], index: 16, kind: output, shape index: {0}]
  %s17 = inlined_call_operand.vmem [shape: f32[2,4,8,128], index: 17, kind: output, shape index: {1}]
  %18 = xla_tuple %s16, %s17
  %s19 = sld [smem:[#allocation0]]
  $region153: #{fdb_forward.2} parent=0
    _
  %s21 = ssub.s32 1, %s19
  %s22 = scalar_select 0, %s21, %s19
  $region1: #{fdb_forward.2} parent=0
    #allocation2 [shape = 'u8[512]{0}', space=smem, size = 0x200, scoped, tag = 'input window, operand 4, single buffered']
    #allocation3 [shape = 's32[2]{0}', space=sflag, size = 0x8, scoped, tag = 'scoped memory for fdb_forward.2']
    #allocation4 [shape = 'u8[512]{0}', space=smem, size = 0x200, scoped, tag = 'input window, operand 5, single buffered']
    #allocation5 [shape = 's32[1]{0}', space=sflag, size = 0x4, scoped, tag = 'scoped memory for fdb_forward.2']
    #allocation6 [shape = 'u8[512]{0}', space=smem, size = 0x200, scoped, tag = 'input window, operand 6, single buffered']
    #allocation7 [shape = 'u8[512]{0}', space=smem, size = 0x200, scoped, tag = 'input window, operand 7, single buffered']
    #allocation8 [shape = 's32[1]{0}', space=sflag, size = 0x4, scoped, tag = 'scoped memory for fdb_forward.2']
    #allocation9 [shape = 'u8[512]{0}', space=smem, size = 0x200, scoped, tag = 'input window, operand 8, single buffered']
    #allocation10 [shape = 'u8[512]{0}', space=smem, size = 0x200, scoped, tag = 'input window, operand 9, single buffered']
    #allocation11 [shape = 's32[1]{0}', space=sflag, size = 0x4, scoped, tag = 'scoped memory for fdb_forward.2']
    #allocation12 [shape = 'u8[512]{0}', space=smem, size = 0x200, scoped, tag = 'input window, operand 10, single buffered']
    #allocation13 [shape = 'u8[512]{0}', space=smem, size = 0x200, scoped, tag = 'input window, operand 11, single buffered']
    #allocation14 [shape = 's32[1]{0}', space=sflag, size = 0x4, scoped, tag = 'scoped memory for fdb_forward.2']
    #allocation15 [shape = 'u8[512]{0}', space=smem, size = 0x200, scoped, tag = 'input window, operand 12, single buffered']
    #allocation16 [shape = 'u8[512]{0}', space=smem, size = 0x200, scoped, tag = 'input window, operand 13, single buffered']
    #allocation17 [shape = 's32[1]{0}', space=sflag, size = 0x4, scoped, tag = 'scoped memory for fdb_forward.2']
    #allocation18 [shape = 'u8[512]{0}', space=smem, size = 0x200, scoped, tag = 'input window, operand 14, single buffered']
    #allocation19 [shape = 'u8[512]{0}', space=smem, size = 0x200, scoped, tag = 'input window, operand 15, single buffered']
    #allocation20 [shape = 's32[1]{0}', space=sflag, size = 0x4, scoped, tag = 'scoped memory for fdb_forward.2']
    %23 = vsyncpa [#allocation3], 0
    %24 = vsyncpa [#allocation5], 0
    %25 = vsyncpa [#allocation8], 0
    %26 = vsyncpa [#allocation11], 0
    %27 = vsyncpa [#allocation14], 0
    %28 = vsyncpa [#allocation17], 0
    %29 = vsyncpa [#allocation20], 0
    loop: start=0, step=1, limit=4
    $region2: #{fdb_forward.2} parent=1 // loop_pre_header
      _
    $region3: #{fdb_forward.2} parent=1 // loop_header
      %s31 = sphi 0, %s35
      %p32 = scmp.ge.s32.totalorder %s31, 4
      %s38 = sphi 0, %s50
      %s39 = sphi 0, %s46
      %s40 = sphi 0, %s38
      %s41 = sphi 0, %s39
      %s42 = sphi 0, %s40
      %s43 = sphi 0, %s41
      %s55 = sphi 0, %s57
      %s58 = sphi 0, %s55
      %s59 = sphi 0, %s58
      %s75 = sphi 0, %s59
      %s83 = sphi 0, %s85
      %s86 = sphi 0, %s83
      %s87 = sphi 0, %s86
      %s103 = sphi 0, %s87
      %s111 = sphi 0, %s113
      %s114 = sphi 0, %s111
      %s115 = sphi 0, %s114
      %s131 = sphi 0, %s115
      %s139 = sphi 0, %s141
      %s142 = sphi 0, %s139
      %s143 = sphi 0, %s142
      %s159 = sphi 0, %s143
      %s163 = sphi 0, %s163
      %s165 = sphi 0, %s163
      %s166 = sphi 0, %s165
      %s180 = sphi 0, %s166
      %s184 = sphi 0, %s184
      %s186 = sphi 0, %s184
      %s187 = sphi 0, %s186
      %s201 = sphi 0, %s187
      %s205 = sphi 0, %s205
      %s207 = sphi 0, %s205
      %s208 = sphi 0, %s207
      %s222 = sphi 0, %s208
      %s226 = sphi 0, %s226
      %s228 = sphi 0, %s226
      %s229 = sphi 0, %s228
      %s243 = sphi 0, %s229
      %s247 = sphi 0, %s247
      %s249 = sphi 0, %s247
      %s250 = sphi 0, %s249
      %s264 = sphi 0, %s250
      %s268 = sphi 0, %s268
      %s270 = sphi 0, %s268
      %s271 = sphi 0, %s270
      %s285 = sphi 0, %s271
      %s289 = sphi 0, %s289
      %s291 = sphi 0, %s289
      %s292 = sphi 0, %s291
      %s306 = sphi 0, %s292
      %s310 = sphi 0, %s310
      %s312 = sphi 0, %s310
      %s313 = sphi 0, %s312
      %s327 = sphi 0, %s313
      %s331 = sphi 0, %s331
      %s333 = sphi 0, %s331
      %s334 = sphi 0, %s333
      %s348 = sphi 0, %s334
      %s352 = sphi 0, %s352
      %s354 = sphi 0, %s352
      %s355 = sphi 0, %s354
      %s369 = sphi 0, %s355
      %s373 = sphi 0, %s373
      %s375 = sphi 0, %s373
      %s376 = sphi 0, %s375
      %s390 = sphi 0, %s376
      %s394 = sphi 0, %s394
      %s396 = sphi 0, %s394
      %s397 = sphi 0, %s396
      %s411 = sphi 0, %s397
      %s419 = sphi 0, %s421
      %s422 = sphi 0, %s419
      %s423 = sphi 0, %s422
      %s439 = sphi 0, %s423
      %s447 = sphi 0, %s449
      %s450 = sphi 0, %s447
      %s451 = sphi 0, %s450
      %s467 = sphi 0, %s451
    $region4: #{fdb_forward.2} parent=1 // loop_header_branch
      %34 = sbr.rel (%p32) target = $region8
    $region5: #{fdb_forward.2} parent=1 // loop_body
      %s36 = ssub.s32 %s31, 1
      %s37 = ssub.s32 %s31, 2
      %s44 = sadd.s32 1, %s39
      %p45 = scmp.ge.s32.totalorder %s44, 1
      %s46 = scalar_select %p45, 0, %s44
      %s47 = sadd.s32 1, %s38
      %s48 = scalar_select %p45, %s47, %s38
      %p49 = scmp.ge.s32.totalorder %s48, 2
      %s50 = scalar_select %p49, 0, %s48
      %s51 = ssub.s32 %s38, %s50
      %s52 = ssub.s32 %s39, %s46
      %s53 = sor.u32 %s51, %s52
      %p54 = scmp.eq.s32.totalorder %s53, 0
      %s56 = sadd.s32 %s55, 1
      %s57 = scalar_select %p54, %s55, %s56
      %p60 = pneg %p54
      %p61 = scmp.eq.s32.totalorder %s31, 1
      %p62 = por %p60, %p61
      %p63 = scmp.ne.s32.totalorder %s55, %s58
      %p64 = scmp.eq.s32.totalorder %s31, 0
      %p65 = por %p63, %p64
      %p66 = scmp.ne.s32.totalorder %s55, %s58
      %p67 = scmp.eq.s32.totalorder %s36, 1
      %p68 = por %p66, %p67
      %p69 = scmp.ne.s32.totalorder %s58, %s59
      %p70 = scmp.eq.s32.totalorder %s36, 0
      %p71 = por %p69, %p70
      %p72 = scmp.ne.s32.totalorder %s58, %s59
      %p73 = scmp.eq.s32.totalorder %s37, 1
      %p74 = por %p72, %p73
      %p76 = scmp.ne.s32.totalorder %s59, %s75
      %p77 = scmp.eq.s32.totalorder %s37, 0
      %p78 = por %p76, %p77
      %s79 = ssub.s32 %s38, %s50
      %s80 = ssub.s32 %s39, %s46
      %s81 = sor.u32 %s79, %s80
      %p82 = scmp.eq.s32.totalorder %s81, 0
      %s84 = sadd.s32 %s83, 1
      %s85 = scalar_select %p82, %s83, %s84
      %p88 = pneg %p82
      %p89 = scmp.eq.s32.totalorder %s31, 1
      %p90 = por %p88, %p89
      %p91 = scmp.ne.s32.totalorder %s83, %s86
      %p92 = scmp.eq.s32.totalorder %s31, 0
      %p93 = por %p91, %p92
      %p94 = scmp.ne.s32.totalorder %s83, %s86
      %p95 = scmp.eq.s32.totalorder %s36, 1
      %p96 = por %p94, %p95
      %p97 = scmp.ne.s32.totalorder %s86, %s87
      %p98 = scmp.eq.s32.totalorder %s36, 0
      %p99 = por %p97, %p98
      %p100 = scmp.ne.s32.totalorder %s86, %s87
      %p101 = scmp.eq.s32.totalorder %s37, 1
      %p102 = por %p100, %p101
      %p104 = scmp.ne.s32.totalorder %s87, %s103
      %p105 = scmp.eq.s32.totalorder %s37, 0
      %p106 = por %p104, %p105
      %s107 = ssub.s32 %s38, %s50
      %s108 = ssub.s32 %s39, %s46
      %s109 = sor.u32 %s107, %s108
      %p110 = scmp.eq.s32.totalorder %s109, 0
      %s112 = sadd.s32 %s111, 1
      %s113 = scalar_select %p110, %s111, %s112
      %p116 = pneg %p110
      %p117 = scmp.eq.s32.totalorder %s31, 1
      %p118 = por %p116, %p117
      %p119 = scmp.ne.s32.totalorder %s111, %s114
      %p120 = scmp.eq.s32.totalorder %s31, 0
      %p121 = por %p119, %p120
      %p122 = scmp.ne.s32.totalorder %s111, %s114
      %p123 = scmp.eq.s32.totalorder %s36, 1
      %p124 = por %p122, %p123
      %p125 = scmp.ne.s32.totalorder %s114, %s115
      %p126 = scmp.eq.s32.totalorder %s36, 0
      %p127 = por %p125, %p126
      %p128 = scmp.ne.s32.totalorder %s114, %s115
      %p129 = scmp.eq.s32.totalorder %s37, 1
      %p130 = por %p128, %p129
      %p132 = scmp.ne.s32.totalorder %s115, %s131
      %p133 = scmp.eq.s32.totalorder %s37, 0
      %p134 = por %p132, %p133
      %s135 = ssub.s32 %s38, %s50
      %s136 = ssub.s32 %s39, %s46
      %s137 = sor.u32 %s135, %s136
      %p138 = scmp.eq.s32.totalorder %s137, 0
      %s140 = sadd.s32 %s139, 1
      %s141 = scalar_select %p138, %s139, %s140
      %p144 = pneg %p138
      %p145 = scmp.eq.s32.totalorder %s31, 1
      %p146 = por %p144, %p145
      %p147 = scmp.ne.s32.totalorder %s139, %s142
      %p148 = scmp.eq.s32.totalorder %s31, 0
      %p149 = por %p147, %p148
      %p150 = scmp.ne.s32.totalorder %s139, %s142
      %p151 = scmp.eq.s32.totalorder %s36, 1
      %p152 = por %p150, %p151
      %p153 = scmp.ne.s32.totalorder %s142, %s143
      %p154 = scmp.eq.s32.totalorder %s36, 0
      %p155 = por %p153, %p154
      %p156 = scmp.ne.s32.totalorder %s142, %s143
      %p157 = scmp.eq.s32.totalorder %s37, 1
      %p158 = por %p156, %p157
      %p160 = scmp.ne.s32.totalorder %s143, %s159
      %p161 = scmp.eq.s32.totalorder %s37, 0
      %p162 = por %p160, %p161
      %s164 = sadd.s32 %s163, 1
      %p167 = scmp.eq.s32.totalorder %s31, 1
      %p168 = scmp.ne.s32.totalorder %s163, %s165
      %p169 = scmp.eq.s32.totalorder %s31, 0
      %p170 = por %p168, %p169
      %p171 = scmp.ne.s32.totalorder %s163, %s165
      %p172 = scmp.eq.s32.totalorder %s36, 1
      %p173 = por %p171, %p172
      %p174 = scmp.ne.s32.totalorder %s165, %s166
      %p175 = scmp.eq.s32.totalorder %s36, 0
      %p176 = por %p174, %p175
      %p177 = scmp.ne.s32.totalorder %s165, %s166
      %p178 = scmp.eq.s32.totalorder %s37, 1
      %p179 = por %p177, %p178
      %p181 = scmp.ne.s32.totalorder %s166, %s180
      %p182 = scmp.eq.s32.totalorder %s37, 0
      %p183 = por %p181, %p182
      %s185 = sadd.s32 %s184, 1
      %p188 = scmp.eq.s32.totalorder %s31, 1
      %p189 = scmp.ne.s32.totalorder %s184, %s186
      %p190 = scmp.eq.s32.totalorder %s31, 0
      %p191 = por %p189, %p190
      %p192 = scmp.ne.s32.totalorder %s184, %s186
      %p193 = scmp.eq.s32.totalorder %s36, 1
      %p194 = por %p192, %p193
      %p195 = scmp.ne.s32.totalorder %s186, %s187
      %p196 = scmp.eq.s32.totalorder %s36, 0
      %p197 = por %p195, %p196
      %p198 = scmp.ne.s32.totalorder %s186, %s187
      %p199 = scmp.eq.s32.totalorder %s37, 1
      %p200 = por %p198, %p199
      %p202 = scmp.ne.s32.totalorder %s187, %s201
      %p203 = scmp.eq.s32.totalorder %s37, 0
      %p204 = por %p202, %p203
      %s206 = sadd.s32 %s205, 1
      %p209 = scmp.eq.s32.totalorder %s31, 1
      %p210 = scmp.ne.s32.totalorder %s205, %s207
      %p211 = scmp.eq.s32.totalorder %s31, 0
      %p212 = por %p210, %p211
      %p213 = scmp.ne.s32.totalorder %s205, %s207
      %p214 = scmp.eq.s32.totalorder %s36, 1
      %p215 = por %p213, %p214
      %p216 = scmp.ne.s32.totalorder %s207, %s208
      %p217 = scmp.eq.s32.totalorder %s36, 0
      %p218 = por %p216, %p217
      %p219 = scmp.ne.s32.totalorder %s207, %s208
      %p220 = scmp.eq.s32.totalorder %s37, 1
      %p221 = por %p219, %p220
      %p223 = scmp.ne.s32.totalorder %s208, %s222
      %p224 = scmp.eq.s32.totalorder %s37, 0
      %p225 = por %p223, %p224
      %s227 = sadd.s32 %s226, 1
      %p230 = scmp.eq.s32.totalorder %s31, 1
      %p231 = scmp.ne.s32.totalorder %s226, %s228
      %p232 = scmp.eq.s32.totalorder %s31, 0
      %p233 = por %p231, %p232
      %p234 = scmp.ne.s32.totalorder %s226, %s228
      %p235 = scmp.eq.s32.totalorder %s36, 1
      %p236 = por %p234, %p235
      %p237 = scmp.ne.s32.totalorder %s228, %s229
      %p238 = scmp.eq.s32.totalorder %s36, 0
      %p239 = por %p237, %p238
      %p240 = scmp.ne.s32.totalorder %s228, %s229
      %p241 = scmp.eq.s32.totalorder %s37, 1
      %p242 = por %p240, %p241
      %p244 = scmp.ne.s32.totalorder %s229, %s243
      %p245 = scmp.eq.s32.totalorder %s37, 0
      %p246 = por %p244, %p245
      %s248 = sadd.s32 %s247, 1
      %p251 = scmp.eq.s32.totalorder %s31, 1
      %p252 = scmp.ne.s32.totalorder %s247, %s249
      %p253 = scmp.eq.s32.totalorder %s31, 0
      %p254 = por %p252, %p253
      %p255 = scmp.ne.s32.totalorder %s247, %s249
      %p256 = scmp.eq.s32.totalorder %s36, 1
      %p257 = por %p255, %p256
      %p258 = scmp.ne.s32.totalorder %s249, %s250
      %p259 = scmp.eq.s32.totalorder %s36, 0
      %p260 = por %p258, %p259
      %p261 = scmp.ne.s32.totalorder %s249, %s250
      %p262 = scmp.eq.s32.totalorder %s37, 1
      %p263 = por %p261, %p262
      %p265 = scmp.ne.s32.totalorder %s250, %s264
      %p266 = scmp.eq.s32.totalorder %s37, 0
      %p267 = por %p265, %p266
      %s269 = sadd.s32 %s268, 1
      %p272 = scmp.eq.s32.totalorder %s31, 1
      %p273 = scmp.ne.s32.totalorder %s268, %s270
      %p274 = scmp.eq.s32.totalorder %s31, 0
      %p275 = por %p273, %p274
      %p276 = scmp.ne.s32.totalorder %s268, %s270
      %p277 = scmp.eq.s32.totalorder %s36, 1
      %p278 = por %p276, %p277
      %p279 = scmp.ne.s32.totalorder %s270, %s271
      %p280 = scmp.eq.s32.totalorder %s36, 0
      %p281 = por %p279, %p280
      %p282 = scmp.ne.s32.totalorder %s270, %s271
      %p283 = scmp.eq.s32.totalorder %s37, 1
      %p284 = por %p282, %p283
      %p286 = scmp.ne.s32.totalorder %s271, %s285
      %p287 = scmp.eq.s32.totalorder %s37, 0
      %p288 = por %p286, %p287
      %s290 = sadd.s32 %s289, 1
      %p293 = scmp.eq.s32.totalorder %s31, 1
      %p294 = scmp.ne.s32.totalorder %s289, %s291
      %p295 = scmp.eq.s32.totalorder %s31, 0
      %p296 = por %p294, %p295
      %p297 = scmp.ne.s32.totalorder %s289, %s291
      %p298 = scmp.eq.s32.totalorder %s36, 1
      %p299 = por %p297, %p298
      %p300 = scmp.ne.s32.totalorder %s291, %s292
      %p301 = scmp.eq.s32.totalorder %s36, 0
      %p302 = por %p300, %p301
      %p303 = scmp.ne.s32.totalorder %s291, %s292
      %p304 = scmp.eq.s32.totalorder %s37, 1
      %p305 = por %p303, %p304
      %p307 = scmp.ne.s32.totalorder %s292, %s306
      %p308 = scmp.eq.s32.totalorder %s37, 0
      %p309 = por %p307, %p308
      %s311 = sadd.s32 %s310, 1
      %p314 = scmp.eq.s32.totalorder %s31, 1
      %p315 = scmp.ne.s32.totalorder %s310, %s312
      %p316 = scmp.eq.s32.totalorder %s31, 0
      %p317 = por %p315, %p316
      %p318 = scmp.ne.s32.totalorder %s310, %s312
      %p319 = scmp.eq.s32.totalorder %s36, 1
      %p320 = por %p318, %p319
      %p321 = scmp.ne.s32.totalorder %s312, %s313
      %p322 = scmp.eq.s32.totalorder %s36, 0
      %p323 = por %p321, %p322
      %p324 = scmp.ne.s32.totalorder %s312, %s313
      %p325 = scmp.eq.s32.totalorder %s37, 1
      %p326 = por %p324, %p325
      %p328 = scmp.ne.s32.totalorder %s313, %s327
      %p329 = scmp.eq.s32.totalorder %s37, 0
      %p330 = por %p328, %p329
      %s332 = sadd.s32 %s331, 1
      %p335 = scmp.eq.s32.totalorder %s31, 1
      %p336 = scmp.ne.s32.totalorder %s331, %s333
      %p337 = scmp.eq.s32.totalorder %s31, 0
      %p338 = por %p336, %p337
      %p339 = scmp.ne.s32.totalorder %s331, %s333
      %p340 = scmp.eq.s32.totalorder %s36, 1
      %p341 = por %p339, %p340
      %p342 = scmp.ne.s32.totalorder %s333, %s334
      %p343 = scmp.eq.s32.totalorder %s36, 0
      %p344 = por %p342, %p343
      %p345 = scmp.ne.s32.totalorder %s333, %s334
      %p346 = scmp.eq.s32.totalorder %s37, 1
      %p347 = por %p345, %p346
      %p349 = scmp.ne.s32.totalorder %s334, %s348
      %p350 = scmp.eq.s32.totalorder %s37, 0
      %p351 = por %p349, %p350
      %s353 = sadd.s32 %s352, 1
      %p356 = scmp.eq.s32.totalorder %s31, 1
      %p357 = scmp.ne.s32.totalorder %s352, %s354
      %p358 = scmp.eq.s32.totalorder %s31, 0
      %p359 = por %p357, %p358
      %p360 = scmp.ne.s32.totalorder %s352, %s354
      %p361 = scmp.eq.s32.totalorder %s36, 1
      %p362 = por %p360, %p361
      %p363 = scmp.ne.s32.totalorder %s354, %s355
      %p364 = scmp.eq.s32.totalorder %s36, 0
      %p365 = por %p363, %p364
      %p366 = scmp.ne.s32.totalorder %s354, %s355
      %p367 = scmp.eq.s32.totalorder %s37, 1
      %p368 = por %p366, %p367
      %p370 = scmp.ne.s32.totalorder %s355, %s369
      %p371 = scmp.eq.s32.totalorder %s37, 0
      %p372 = por %p370, %p371
      %s374 = sadd.s32 %s373, 1
      %p377 = scmp.eq.s32.totalorder %s31, 1
      %p378 = scmp.ne.s32.totalorder %s373, %s375
      %p379 = scmp.eq.s32.totalorder %s31, 0
      %p380 = por %p378, %p379
      %p381 = scmp.ne.s32.totalorder %s373, %s375
      %p382 = scmp.eq.s32.totalorder %s36, 1
      %p383 = por %p381, %p382
      %p384 = scmp.ne.s32.totalorder %s375, %s376
      %p385 = scmp.eq.s32.totalorder %s36, 0
      %p386 = por %p384, %p385
      %p387 = scmp.ne.s32.totalorder %s375, %s376
      %p388 = scmp.eq.s32.totalorder %s37, 1
      %p389 = por %p387, %p388
      %p391 = scmp.ne.s32.totalorder %s376, %s390
      %p392 = scmp.eq.s32.totalorder %s37, 0
      %p393 = por %p391, %p392
      %s395 = sadd.s32 %s394, 1
      %p398 = scmp.eq.s32.totalorder %s31, 1
      %p399 = scmp.ne.s32.totalorder %s394, %s396
      %p400 = scmp.eq.s32.totalorder %s31, 0
      %p401 = por %p399, %p400
      %p402 = scmp.ne.s32.totalorder %s394, %s396
      %p403 = scmp.eq.s32.totalorder %s36, 1
      %p404 = por %p402, %p403
      %p405 = scmp.ne.s32.totalorder %s396, %s397
      %p406 = scmp.eq.s32.totalorder %s36, 0
      %p407 = por %p405, %p406
      %p408 = scmp.ne.s32.totalorder %s396, %s397
      %p409 = scmp.eq.s32.totalorder %s37, 1
      %p410 = por %p408, %p409
      %p412 = scmp.ne.s32.totalorder %s397, %s411
      %p413 = scmp.eq.s32.totalorder %s37, 0
      %p414 = por %p412, %p413
      %s415 = ssub.s32 %s38, %s50
      %s416 = ssub.s32 %s39, %s46
      %s417 = sor.u32 %s415, %s416
      %p418 = scmp.eq.s32.totalorder %s417, 0
      %s420 = sadd.s32 %s419, 1
      %s421 = scalar_select %p418, %s419, %s420
      %p424 = pneg %p418
      %p425 = scmp.eq.s32.totalorder %s31, 1
      %p426 = por %p424, %p425
      %p427 = scmp.ne.s32.totalorder %s419, %s422
      %p428 = scmp.eq.s32.totalorder %s31, 0
      %p429 = por %p427, %p428
      %p430 = scmp.ne.s32.totalorder %s419, %s422
      %p431 = scmp.eq.s32.totalorder %s36, 1
      %p432 = por %p430, %p431
      %p433 = scmp.ne.s32.totalorder %s422, %s423
      %p434 = scmp.eq.s32.totalorder %s36, 0
      %p435 = por %p433, %p434
      %p436 = scmp.ne.s32.totalorder %s422, %s423
      %p437 = scmp.eq.s32.totalorder %s37, 1
      %p438 = por %p436, %p437
      %p440 = scmp.ne.s32.totalorder %s423, %s439
      %p441 = scmp.eq.s32.totalorder %s37, 0
      %p442 = por %p440, %p441
      %s443 = ssub.s32 %s38, %s50
      %s444 = ssub.s32 %s39, %s46
      %s445 = sor.u32 %s443, %s444
      %p446 = scmp.eq.s32.totalorder %s445, 0
      %s448 = sadd.s32 %s447, 1
      %s449 = scalar_select %p446, %s447, %s448
      %p452 = pneg %p446
      %p453 = scmp.eq.s32.totalorder %s31, 1
      %p454 = por %p452, %p453
      %p455 = scmp.ne.s32.totalorder %s447, %s450
      %p456 = scmp.eq.s32.totalorder %s31, 0
      %p457 = por %p455, %p456
      %p458 = scmp.ne.s32.totalorder %s447, %s450
      %p459 = scmp.eq.s32.totalorder %s36, 1
      %p460 = por %p458, %p459
      %p461 = scmp.ne.s32.totalorder %s450, %s451
      %p462 = scmp.eq.s32.totalorder %s36, 0
      %p463 = por %p461, %p462
      %p464 = scmp.ne.s32.totalorder %s450, %s451
      %p465 = scmp.eq.s32.totalorder %s37, 1
      %p466 = por %p464, %p465
      %p468 = scmp.ne.s32.totalorder %s451, %s467
      %p469 = scmp.eq.s32.totalorder %s37, 0
      %p470 = por %p468, %p469
      %p471 = scmp.le.s32.totalorder 1, %s31
      %p472 = scmp.lt.s32.totalorder %s31, 3
      %p473 = pnand %p471, %p472
      %p474 = pneg %p473
      // Predicated region
      $region9: #{fdb_forward.2} parent=5 // pred_check
        _
      $region10: #{fdb_forward.2} parent=5 // pred_check_branch
        %476 = sbr.rel (%p473) target = $region12
      $region11: #{fdb_forward.2} parent=5 // pred_region
        %s477 = ssub.s32 %s31, 1
        // Predicated region
        $region13: #{fdb_forward.2} parent=11 // pred_check
          %p478 = pneg %p176
        $region14: #{fdb_forward.2} parent=11 // pred_check_branch
          %480 = sbr.rel (%p478) target = $region16
        $region15: #{fdb_forward.2} parent=11 // pred_region
          %482 = vsyncadd [#allocation3], 0
          %s484 = sshll.u32 %s4, 4
          %s485 = int_to_ptr.vmem [resolvable:$true] %s484
          %487 = dma.vmem_to_smem %s485, 16, [#allocation2], [#allocation3]
        $region16: #{fdb_forward.2} parent=11 // pred_fallthru
          _
        // Predicated region
        $region17: #{fdb_forward.2} parent=11 // pred_check
          %p488 = pneg %p197
        $region18: #{fdb_forward.2} parent=11 // pred_check_branch
          %490 = sbr.rel (%p488) target = $region20
        $region19: #{fdb_forward.2} parent=11 // pred_region
          %492 = vsyncadd [#allocation5], 0
          %s494 = sshll.u32 %s5, 4
          %s495 = int_to_ptr.vmem [resolvable:$true] %s494
          %497 = dma.vmem_to_smem %s495, 16, [#allocation4], [#allocation5]
        $region20: #{fdb_forward.2} parent=11 // pred_fallthru
          _
        // Predicated region
        $region21: #{fdb_forward.2} parent=11 // pred_check
          %p498 = pneg %p218
        $region22: #{fdb_forward.2} parent=11 // pred_check_branch
          %500 = sbr.rel (%p498) target = $region24
        $region23: #{fdb_forward.2} parent=11 // pred_region
          %502 = vsyncadd [#allocation5], 0
          %s504 = sshll.u32 %s6, 4
          %s505 = int_to_ptr.vmem [resolvable:$true] %s504
          %507 = dma.vmem_to_smem %s505, 16, [#allocation6], [#allocation5]
        $region24: #{fdb_forward.2} parent=11 // pred_fallthru
          _
        // Predicated region
        $region25: #{fdb_forward.2} parent=11 // pred_check
          %p508 = pneg %p239
        $region26: #{fdb_forward.2} parent=11 // pred_check_branch
          %510 = sbr.rel (%p508) target = $region28
        $region27: #{fdb_forward.2} parent=11 // pred_region
          %512 = vsyncadd [#allocation8], 0
          %s514 = sshll.u32 %s7, 4
          %s515 = int_to_ptr.vmem [resolvable:$true] %s514
          %517 = dma.vmem_to_smem %s515, 16, [#allocation7], [#allocation8]
        $region28: #{fdb_forward.2} parent=11 // pred_fallthru
          _
        // Predicated region
        $region29: #{fdb_forward.2} parent=11 // pred_check
          %p518 = pneg %p260
        $region30: #{fdb_forward.2} parent=11 // pred_check_branch
          %520 = sbr.rel (%p518) target = $region32
        $region31: #{fdb_forward.2} parent=11 // pred_region
          %522 = vsyncadd [#allocation8], 0
          %s524 = sshll.u32 %s8, 4
          %s525 = int_to_ptr.vmem [resolvable:$true] %s524
          %527 = dma.vmem_to_smem %s525, 16, [#allocation9], [#allocation8]
        $region32: #{fdb_forward.2} parent=11 // pred_fallthru
          _
        // Predicated region
        $region33: #{fdb_forward.2} parent=11 // pred_check
          %p528 = pneg %p281
        $region34: #{fdb_forward.2} parent=11 // pred_check_branch
          %530 = sbr.rel (%p528) target = $region36
        $region35: #{fdb_forward.2} parent=11 // pred_region
          %532 = vsyncadd [#allocation11], 0
          %s534 = sshll.u32 %s9, 4
          %s535 = int_to_ptr.vmem [resolvable:$true] %s534
          %537 = dma.vmem_to_smem %s535, 16, [#allocation10], [#allocation11]
        $region36: #{fdb_forward.2} parent=11 // pred_fallthru
          _
        // Predicated region
        $region37: #{fdb_forward.2} parent=11 // pred_check
          %p538 = pneg %p302
        $region38: #{fdb_forward.2} parent=11 // pred_check_branch
          %540 = sbr.rel (%p538) target = $region40
        $region39: #{fdb_forward.2} parent=11 // pred_region
          %542 = vsyncadd [#allocation11], 0
          %s544 = sshll.u32 %s10, 4
          %s545 = int_to_ptr.vmem [resolvable:$true] %s544
          %547 = dma.vmem_to_smem %s545, 16, [#allocation12], [#allocation11]
        $region40: #{fdb_forward.2} parent=11 // pred_fallthru
          _
        // Predicated region
        $region41: #{fdb_forward.2} parent=11 // pred_check
          %p548 = pneg %p323
        $region42: #{fdb_forward.2} parent=11 // pred_check_branch
          %550 = sbr.rel (%p548) target = $region44
        $region43: #{fdb_forward.2} parent=11 // pred_region
          %552 = vsyncadd [#allocation14], 0
          %s554 = sshll.u32 %s11, 4
          %s555 = int_to_ptr.vmem [resolvable:$true] %s554
          %557 = dma.vmem_to_smem %s555, 16, [#allocation13], [#allocation14]
        $region44: #{fdb_forward.2} parent=11 // pred_fallthru
          _
        // Predicated region
        $region45: #{fdb_forward.2} parent=11 // pred_check
          %p558 = pneg %p344
        $region46: #{fdb_forward.2} parent=11 // pred_check_branch
          %560 = sbr.rel (%p558) target = $region48
        $region47: #{fdb_forward.2} parent=11 // pred_region
          %562 = vsyncadd [#allocation14], 0
          %s564 = sshll.u32 %s12, 4
          %s565 = int_to_ptr.vmem [resolvable:$true] %s564
          %567 = dma.vmem_to_smem %s565, 16, [#allocation15], [#allocation14]
        $region48: #{fdb_forward.2} parent=11 // pred_fallthru
          _
        // Predicated region
        $region49: #{fdb_forward.2} parent=11 // pred_check
          %p568 = pneg %p365
        $region50: #{fdb_forward.2} parent=11 // pred_check_branch
          %570 = sbr.rel (%p568) target = $region52
        $region51: #{fdb_forward.2} parent=11 // pred_region
          %572 = vsyncadd [#allocation17], 0
          %s574 = sshll.u32 %s13, 4
          %s575 = int_to_ptr.vmem [resolvable:$true] %s574
          %577 = dma.vmem_to_smem %s575, 16, [#allocation16], [#allocation17]
        $region52: #{fdb_forward.2} parent=11 // pred_fallthru
          _
        // Predicated region
        $region53: #{fdb_forward.2} parent=11 // pred_check
          %p578 = pneg %p386
        $region54: #{fdb_forward.2} parent=11 // pred_check_branch
          %580 = sbr.rel (%p578) target = $region56
        $region55: #{fdb_forward.2} parent=11 // pred_region
          %582 = vsyncadd [#allocation17], 0
          %s584 = sshll.u32 %s14, 4
          %s585 = int_to_ptr.vmem [resolvable:$true] %s584
          %587 = dma.vmem_to_smem %s585, 16, [#allocation18], [#allocation17]
        $region56: #{fdb_forward.2} parent=11 // pred_fallthru
          _
        // Predicated region
        $region57: #{fdb_forward.2} parent=11 // pred_check
          %p588 = pneg %p407
        $region58: #{fdb_forward.2} parent=11 // pred_check_branch
          %590 = sbr.rel (%p588) target = $region60
        $region59: #{fdb_forward.2} parent=11 // pred_region
          %592 = vsyncadd [#allocation20], 0
          %s594 = sshll.u32 %s15, 4
          %s595 = int_to_ptr.vmem [resolvable:$true] %s594
          %597 = dma.vmem_to_smem %s595, 16, [#allocation19], [#allocation20]
        $region60: #{fdb_forward.2} parent=11 // pred_fallthru
          _
      $region12: #{fdb_forward.2} parent=5 // pred_fallthru
        _
      %p598 = scmp.lt.s32.totalorder %s31, 2
      // Predicated region
      $region61: #{fdb_forward.2} parent=5 // pred_check
        %p599 = pneg %p598
      $region62: #{fdb_forward.2} parent=5 // pred_check_branch
        %601 = sbr.rel (%p599) target = $region64
      $region63: #{fdb_forward.2} parent=5 // pred_region
        // Predicated region
        $region65: #{fdb_forward.2} parent=63 // pred_check
          %p602 = pneg %p65
        $region66: #{fdb_forward.2} parent=63 // pred_check_branch
          %604 = sbr.rel (%p602) target = $region68
        $region67: #{fdb_forward.2} parent=63 // pred_region
          %p605 = scmp.lt.s32.totalorder %s38, 1
          %s606 = scalar_select %p605, %s38, 1
          %p607 = scmp.lt.s32.totalorder %s39, 0
          %s608 = scalar_select %p607, %s39, 0
          %s609 = smul.addr %s606, 4
          %s610 = sadd.s32 %s608, %s609
          %s611 = smul.addr %s610, 8
          %s612 = scalar_lea.vmem %s0, %s611
        $region68: #{fdb_forward.2} parent=63 // pred_fallthru
          _
        // Predicated region
        $region69: #{fdb_forward.2} parent=63 // pred_check
          %p613 = pneg %p93
        $region70: #{fdb_forward.2} parent=63 // pred_check_branch
          %615 = sbr.rel (%p613) target = $region72
        $region71: #{fdb_forward.2} parent=63 // pred_region
          %p616 = scmp.lt.s32.totalorder %s38, 1
          %s617 = scalar_select %p616, %s38, 1
          %p618 = scmp.lt.s32.totalorder %s39, 0
          %s619 = scalar_select %p618, %s39, 0
          %s620 = smul.addr %s617, 4
          %s621 = sadd.s32 %s619, %s620
          %s622 = smul.addr %s621, 8
          %s623 = scalar_lea.vmem %s1, %s622
        $region72: #{fdb_forward.2} parent=63 // pred_fallthru
          _
        // Predicated region
        $region73: #{fdb_forward.2} parent=63 // pred_check
          %p624 = pneg %p121
        $region74: #{fdb_forward.2} parent=63 // pred_check_branch
          %626 = sbr.rel (%p624) target = $region76
        $region75: #{fdb_forward.2} parent=63 // pred_region
          %p627 = scmp.lt.s32.totalorder %s38, 1
          %s628 = scalar_select %p627, %s38, 1
          %p629 = scmp.lt.s32.totalorder %s39, 0
          %s630 = scalar_select %p629, %s39, 0
          %s631 = smul.addr %s628, 4
          %s632 = sadd.s32 %s630, %s631
          %s633 = smul.addr %s632, 8
          %s634 = scalar_lea.vmem %s2, %s633
        $region76: #{fdb_forward.2} parent=63 // pred_fallthru
          _
        // Predicated region
        $region77: #{fdb_forward.2} parent=63 // pred_check
          %p635 = pneg %p149
        $region78: #{fdb_forward.2} parent=63 // pred_check_branch
          %637 = sbr.rel (%p635) target = $region80
        $region79: #{fdb_forward.2} parent=63 // pred_region
          %p638 = scmp.lt.s32.totalorder %s38, 1
          %s639 = scalar_select %p638, %s38, 1
          %p640 = scmp.lt.s32.totalorder %s39, 0
          %s641 = scalar_select %p640, %s39, 0
          %s642 = smul.addr %s639, 4
          %s643 = sadd.s32 %s641, %s642
          %s644 = smul.addr %s643, 8
          %s645 = scalar_lea.vmem %s3, %s644
        $region80: #{fdb_forward.2} parent=63 // pred_fallthru
          _
      $region64: #{fdb_forward.2} parent=5 // pred_fallthru
        _
      %p646 = scmp.le.s32.totalorder 1, %s31
      %p647 = scmp.lt.s32.totalorder %s31, 3
      %p648 = pnand %p646, %p647
      %p649 = pneg %p648
      // Predicated region
      $region81: #{fdb_forward.2} parent=5 // pred_check
        _
      $region82: #{fdb_forward.2} parent=5 // pred_check_branch
        %651 = sbr.rel (%p648) target = $region84
      $region83: #{fdb_forward.2} parent=5 // pred_region
        %s652 = ssub.s32 %s31, 1
        // Predicated region
        $region85: #{fdb_forward.2} parent=83 // pred_check
          %p653 = pneg %p176
        $region86: #{fdb_forward.2} parent=83 // pred_check_branch
          %655 = sbr.rel (%p653) target = $region88
        $region87: #{fdb_forward.2} parent=83 // pred_region
          %657 = dma.done [#allocation3], 16
        $region88: #{fdb_forward.2} parent=83 // pred_fallthru
          _
        // Predicated region
        $region89: #{fdb_forward.2} parent=83 // pred_check
          %p658 = pneg %p197
        $region90: #{fdb_forward.2} parent=83 // pred_check_branch
          %660 = sbr.rel (%p658) target = $region92
        $region91: #{fdb_forward.2} parent=83 // pred_region
          %662 = dma.done [#allocation5], 16
        $region92: #{fdb_forward.2} parent=83 // pred_fallthru
          _
        // Predicated region
        $region93: #{fdb_forward.2} parent=83 // pred_check
          %p663 = pneg %p218
        $region94: #{fdb_forward.2} parent=83 // pred_check_branch
          %665 = sbr.rel (%p663) target = $region96
        $region95: #{fdb_forward.2} parent=83 // pred_region
          %667 = dma.done [#allocation5], 16
        $region96: #{fdb_forward.2} parent=83 // pred_fallthru
          _
        // Predicated region
        $region97: #{fdb_forward.2} parent=83 // pred_check
          %p668 = pneg %p239
        $region98: #{fdb_forward.2} parent=83 // pred_check_branch
          %670 = sbr.rel (%p668) target = $region100
        $region99: #{fdb_forward.2} parent=83 // pred_region
          %672 = dma.done [#allocation8], 16
        $region100: #{fdb_forward.2} parent=83 // pred_fallthru
          _
        // Predicated region
        $region101: #{fdb_forward.2} parent=83 // pred_check
          %p673 = pneg %p260
        $region102: #{fdb_forward.2} parent=83 // pred_check_branch
          %675 = sbr.rel (%p673) target = $region104
        $region103: #{fdb_forward.2} parent=83 // pred_region
          %677 = dma.done [#allocation8], 16
        $region104: #{fdb_forward.2} parent=83 // pred_fallthru
          _
        // Predicated region
        $region105: #{fdb_forward.2} parent=83 // pred_check
          %p678 = pneg %p281
        $region106: #{fdb_forward.2} parent=83 // pred_check_branch
          %680 = sbr.rel (%p678) target = $region108
        $region107: #{fdb_forward.2} parent=83 // pred_region
          %682 = dma.done [#allocation11], 16
        $region108: #{fdb_forward.2} parent=83 // pred_fallthru
          _
        // Predicated region
        $region109: #{fdb_forward.2} parent=83 // pred_check
          %p683 = pneg %p302
        $region110: #{fdb_forward.2} parent=83 // pred_check_branch
          %685 = sbr.rel (%p683) target = $region112
        $region111: #{fdb_forward.2} parent=83 // pred_region
          %687 = dma.done [#allocation11], 16
        $region112: #{fdb_forward.2} parent=83 // pred_fallthru
          _
        // Predicated region
        $region113: #{fdb_forward.2} parent=83 // pred_check
          %p688 = pneg %p323
        $region114: #{fdb_forward.2} parent=83 // pred_check_branch
          %690 = sbr.rel (%p688) target = $region116
        $region115: #{fdb_forward.2} parent=83 // pred_region
          %692 = dma.done [#allocation14], 16
        $region116: #{fdb_forward.2} parent=83 // pred_fallthru
          _
        // Predicated region
        $region117: #{fdb_forward.2} parent=83 // pred_check
          %p693 = pneg %p344
        $region118: #{fdb_forward.2} parent=83 // pred_check_branch
          %695 = sbr.rel (%p693) target = $region120
        $region119: #{fdb_forward.2} parent=83 // pred_region
          %697 = dma.done [#allocation14], 16
        $region120: #{fdb_forward.2} parent=83 // pred_fallthru
          _
        // Predicated region
        $region121: #{fdb_forward.2} parent=83 // pred_check
          %p698 = pneg %p365
        $region122: #{fdb_forward.2} parent=83 // pred_check_branch
          %700 = sbr.rel (%p698) target = $region124
        $region123: #{fdb_forward.2} parent=83 // pred_region
          %702 = dma.done [#allocation17], 16
        $region124: #{fdb_forward.2} parent=83 // pred_fallthru
          _
        // Predicated region
        $region125: #{fdb_forward.2} parent=83 // pred_check
          %p703 = pneg %p386
        $region126: #{fdb_forward.2} parent=83 // pred_check_branch
          %705 = sbr.rel (%p703) target = $region128
        $region127: #{fdb_forward.2} parent=83 // pred_region
          %707 = dma.done [#allocation17], 16
        $region128: #{fdb_forward.2} parent=83 // pred_fallthru
          _
        // Predicated region
        $region129: #{fdb_forward.2} parent=83 // pred_check
          %p708 = pneg %p407
        $region130: #{fdb_forward.2} parent=83 // pred_check_branch
          %710 = sbr.rel (%p708) target = $region132
        $region131: #{fdb_forward.2} parent=83 // pred_region
          %712 = dma.done [#allocation20], 16
        $region132: #{fdb_forward.2} parent=83 // pred_fallthru
          _
        %713 = sfence
        %p714 = scmp.lt.s32.totalorder %s40, 1
        %s715 = scalar_select %p714, %s40, 1
        %p716 = scmp.lt.s32.totalorder %s41, 0
        %s717 = scalar_select %p716, %s41, 0
        %s718 = smul.addr %s715, 4
        %s719 = sadd.s32 %s717, %s718
        %s720 = smul.addr %s719, 8
        %s721 = scalar_lea.vmem %s0, %s720
        %p722 = pneg %p71
        %p723 = pneg %p68
        %p724 = scmp.lt.s32.totalorder %s40, 1
        %s725 = scalar_select %p724, %s40, 1
        %p726 = scmp.lt.s32.totalorder %s41, 0
        %s727 = scalar_select %p726, %s41, 0
        %s728 = smul.addr %s725, 4
        %s729 = sadd.s32 %s727, %s728
        %s730 = smul.addr %s729, 8
        %s731 = scalar_lea.vmem %s1, %s730
        %p732 = pneg %p99
        %p733 = pneg %p96
        %p734 = scmp.lt.s32.totalorder %s40, 1
        %s735 = scalar_select %p734, %s40, 1
        %p736 = scmp.lt.s32.totalorder %s41, 0
        %s737 = scalar_select %p736, %s41, 0
        %s738 = smul.addr %s735, 4
        %s739 = sadd.s32 %s737, %s738
        %s740 = smul.addr %s739, 8
        %s741 = scalar_lea.vmem %s2, %s740
        %p742 = pneg %p127
        %p743 = pneg %p124
        %p744 = scmp.lt.s32.totalorder %s40, 1
        %s745 = scalar_select %p744, %s40, 1
        %p746 = scmp.lt.s32.totalorder %s41, 0
        %s747 = scalar_select %p746, %s41, 0
        %s748 = smul.addr %s745, 4
        %s749 = sadd.s32 %s747, %s748
        %s750 = smul.addr %s749, 8
        %s751 = scalar_lea.vmem %s3, %s750
        %p752 = pneg %p155
        %p753 = pneg %p152
        %p754 = pneg %p176
        %p755 = pneg %p173
        %p756 = pneg %p197
        %p757 = pneg %p194
        %p758 = pneg %p218
        %p759 = pneg %p215
        %p760 = pneg %p239
        %p761 = pneg %p236
        %p762 = pneg %p260
        %p763 = pneg %p257
        %p764 = pneg %p281
        %p765 = pneg %p278
        %p766 = pneg %p302
        %p767 = pneg %p299
        %p768 = pneg %p323
        %p769 = pneg %p320
        %p770 = pneg %p344
        %p771 = pneg %p341
        %p772 = pneg %p365
        %p773 = pneg %p362
        %p774 = pneg %p386
        %p775 = pneg %p383
        %p776 = pneg %p407
        %p777 = pneg %p404
        %p778 = pneg %p435
        %p779 = pneg %p432
        %p780 = scmp.lt.s32.totalorder %s40, 1
        %s781 = scalar_select %p780, %s40, 1
        %p782 = scmp.lt.s32.totalorder %s41, 0
        %s783 = scalar_select %p782, %s41, 0
        %s784 = smul.addr %s781, 4
        %s785 = sadd.s32 %s783, %s784
        %s786 = smul.addr %s785, 8
        %s787 = scalar_lea.vmem %s16, %s786
        %p788 = pneg %p463
        %p789 = pneg %p460
        %p790 = scmp.lt.s32.totalorder %s40, 1
        %s791 = scalar_select %p790, %s40, 1
        %p792 = scmp.lt.s32.totalorder %s41, 0
        %s793 = scalar_select %p792, %s41, 0
        %s794 = smul.addr %s791, 4
        %s795 = sadd.s32 %s793, %s794
        %s796 = smul.addr %s795, 8
        %s797 = scalar_lea.vmem %s17, %s796
        %p798 = scmp.lt.s32.totalorder %s40, 1
        %s799 = scalar_select %p798, %s40, 1
        %p800 = scmp.lt.s32.totalorder %s41, 0
        %s801 = scalar_select %p800, %s41, 0
        %s802 = smul.addr %s799, 4
        %s803 = sadd.s32 %s801, %s802
        %s804 = smul.addr %s803, 8
        %s805 = scalar_lea.vmem %s0, %s804
        %p806 = scmp.lt.s32.totalorder %s40, 1
        %s807 = scalar_select %p806, %s40, 1
        %p808 = scmp.lt.s32.totalorder %s41, 0
        %s809 = scalar_select %p808, %s41, 0
        %s810 = smul.addr %s807, 4
        %s811 = sadd.s32 %s809, %s810
        %s812 = smul.addr %s811, 8
        %s813 = scalar_lea.vmem %s1, %s812
        %p814 = scmp.lt.s32.totalorder %s40, 1
        %s815 = scalar_select %p814, %s40, 1
        %p816 = scmp.lt.s32.totalorder %s41, 0
        %s817 = scalar_select %p816, %s41, 0
        %s818 = smul.addr %s815, 4
        %s819 = sadd.s32 %s817, %s818
        %s820 = smul.addr %s819, 8
        %s821 = scalar_lea.vmem %s2, %s820
        %p822 = scmp.lt.s32.totalorder %s40, 1
        %s823 = scalar_select %p822, %s40, 1
        %p824 = scmp.lt.s32.totalorder %s41, 0
        %s825 = scalar_select %p824, %s41, 0
        %s826 = smul.addr %s823, 4
        %s827 = sadd.s32 %s825, %s826
        %s828 = smul.addr %s827, 8
        %s829 = scalar_lea.vmem %s3, %s828
        %p830 = scmp.lt.s32.totalorder %s40, 1
        %s831 = scalar_select %p830, %s40, 1
        %p832 = scmp.lt.s32.totalorder %s41, 0
        %s833 = scalar_select %p832, %s41, 0
        %s834 = smul.addr %s831, 4
        %s835 = sadd.s32 %s833, %s834
        %s836 = smul.addr %s835, 8
        %s837 = scalar_lea.vmem %s16, %s836
        %p838 = scmp.lt.s32.totalorder %s40, 1
        %s839 = scalar_select %p838, %s40, 1
        %p840 = scmp.lt.s32.totalorder %s41, 0
        %s841 = scalar_select %p840, %s41, 0
        %s842 = smul.addr %s839, 4
        %s843 = sadd.s32 %s841, %s842
        %s844 = smul.addr %s843, 8
        %s845 = scalar_lea.vmem %s17, %s844
        %v846 = vld [vmem:[%s805] sm:$0xff]
        %s847 = scalar_lea.vmem %s805, 8
        %v848 = vld [vmem:[%s847] sm:$0xff]
        %s849 = scalar_lea.vmem %s805, 16
        %v850 = vld [vmem:[%s849] sm:$0xff]
        %s851 = scalar_lea.vmem %s805, 24
        %v852 = vld [vmem:[%s851] sm:$0xff]
        %v853 = vld [vmem:[%s813] sm:$0xff]
        %s854 = scalar_lea.vmem %s813, 8
        %v855 = vld [vmem:[%s854] sm:$0xff]
        %s856 = scalar_lea.vmem %s813, 16
        %v857 = vld [vmem:[%s856] sm:$0xff]
        %s858 = scalar_lea.vmem %s813, 24
        %v859 = vld [vmem:[%s858] sm:$0xff]
        %v860 = vld [vmem:[%s821] sm:$0xff]
        %s861 = scalar_lea.vmem %s821, 8
        %v862 = vld [vmem:[%s861] sm:$0xff]
        %s863 = scalar_lea.vmem %s821, 16
        %v864 = vld [vmem:[%s863] sm:$0xff]
        %s865 = scalar_lea.vmem %s821, 24
        %v866 = vld [vmem:[%s865] sm:$0xff]
        %v867 = vld [vmem:[%s829] sm:$0xff]
        %s868 = scalar_lea.vmem %s829, 8
        %v869 = vld [vmem:[%s868] sm:$0xff]
        %s870 = scalar_lea.vmem %s829, 16
        %v871 = vld [vmem:[%s870] sm:$0xff]
        %s872 = scalar_lea.vmem %s829, 24
        %v873 = vld [vmem:[%s872] sm:$0xff]
        %s874 = sld [smem:[#allocation2]]
        %v875 = vstv %s874
        %v876 = vmul.f32 %v846, %v875
        %s877 = sld [smem:[#allocation2 + $0x1]]
        %v878 = vstv %s877
        %v879 = vmul.f32 %v848, %v878
        %v880 = vadd.f32 %v876, %v879
        %s881 = sld [smem:[#allocation2 + $0x2]]
        %v882 = vstv %s881
        %v883 = vmul.f32 %v850, %v882
        %v884 = vadd.f32 %v880, %v883
        %s885 = sld [smem:[#allocation2 + $0x3]]
        %v886 = vstv %s885
        %v887 = vmul.f32 %v852, %v886
        %v888 = vadd.f32 %v884, %v887
        %s889 = sld [smem:[#allocation2 + $0x4]]
        %v890 = vstv %s889
        %v891 = vmul.f32 %v846, %v890
        %s892 = sld [smem:[#allocation2 + $0x5]]
        %v893 = vstv %s892
        %v894 = vmul.f32 %v848, %v893
        %v895 = vadd.f32 %v891, %v894
        %s896 = sld [smem:[#allocation2 + $0x6]]
        %v897 = vstv %s896
        %v898 = vmul.f32 %v850, %v897
        %v899 = vadd.f32 %v895, %v898
        %s900 = sld [smem:[#allocation2 + $0x7]]
        %v901 = vstv %s900
        %v902 = vmul.f32 %v852, %v901
        %v903 = vadd.f32 %v899, %v902
        %s904 = sld [smem:[#allocation2 + $0x8]]
        %v905 = vstv %s904
        %v906 = vmul.f32 %v846, %v905
        %s907 = sld [smem:[#allocation2 + $0x9]]
        %v908 = vstv %s907
        %v909 = vmul.f32 %v848, %v908
        %v910 = vadd.f32 %v906, %v909
        %s911 = sld [smem:[#allocation2 + $0xa]]
        %v912 = vstv %s911
        %v913 = vmul.f32 %v850, %v912
        %v914 = vadd.f32 %v910, %v913
        %s915 = sld [smem:[#allocation2 + $0xb]]
        %v916 = vstv %s915
        %v917 = vmul.f32 %v852, %v916
        %v918 = vadd.f32 %v914, %v917
        %s919 = sld [smem:[#allocation2 + $0xc]]
        %v920 = vstv %s919
        %v921 = vmul.f32 %v846, %v920
        %s922 = sld [smem:[#allocation2 + $0xd]]
        %v923 = vstv %s922
        %v924 = vmul.f32 %v848, %v923
        %v925 = vadd.f32 %v921, %v924
        %s926 = sld [smem:[#allocation2 + $0xe]]
        %v927 = vstv %s926
        %v928 = vmul.f32 %v850, %v927
        %v929 = vadd.f32 %v925, %v928
        %s930 = sld [smem:[#allocation2 + $0xf]]
        %v931 = vstv %s930
        %v932 = vmul.f32 %v852, %v931
        %v933 = vadd.f32 %v929, %v932
        %v934 = vmul.f32 %v853, %v875
        %v935 = vmul.f32 %v855, %v878
        %v936 = vadd.f32 %v934, %v935
        %v937 = vmul.f32 %v857, %v882
        %v938 = vadd.f32 %v936, %v937
        %v939 = vmul.f32 %v859, %v886
        %v940 = vadd.f32 %v938, %v939
        %v941 = vmul.f32 %v853, %v890
        %v942 = vmul.f32 %v855, %v893
        %v943 = vadd.f32 %v941, %v942
        %v944 = vmul.f32 %v857, %v897
        %v945 = vadd.f32 %v943, %v944
        %v946 = vmul.f32 %v859, %v901
        %v947 = vadd.f32 %v945, %v946
        %v948 = vmul.f32 %v853, %v905
        %v949 = vmul.f32 %v855, %v908
        %v950 = vadd.f32 %v948, %v949
        %v951 = vmul.f32 %v857, %v912
        %v952 = vadd.f32 %v950, %v951
        %v953 = vmul.f32 %v859, %v916
        %v954 = vadd.f32 %v952, %v953
        %v955 = vmul.f32 %v853, %v920
        %v956 = vmul.f32 %v855, %v923
        %v957 = vadd.f32 %v955, %v956
        %v958 = vmul.f32 %v857, %v927
        %v959 = vadd.f32 %v957, %v958
        %v960 = vmul.f32 %v859, %v931
        %v961 = vadd.f32 %v959, %v960
        %s962 = sld [smem:[#allocation6]]
        %v963 = vstv %s962
        %v964 = vmul.f32 %v860, %v963
        %s965 = sld [smem:[#allocation6 + $0x1]]
        %v966 = vstv %s965
        %v967 = vmul.f32 %v862, %v966
        %v968 = vadd.f32 %v964, %v967
        %s969 = sld [smem:[#allocation6 + $0x2]]
        %v970 = vstv %s969
        %v971 = vmul.f32 %v864, %v970
        %v972 = vadd.f32 %v968, %v971
        %s973 = sld [smem:[#allocation6 + $0x3]]
        %v974 = vstv %s973
        %v975 = vmul.f32 %v866, %v974
        %v976 = vadd.f32 %v972, %v975
        %s977 = sld [smem:[#allocation6 + $0x4]]
        %v978 = vstv %s977
        %v979 = vmul.f32 %v860, %v978
        %s980 = sld [smem:[#allocation6 + $0x5]]
        %v981 = vstv %s980
        %v982 = vmul.f32 %v862, %v981
        %v983 = vadd.f32 %v979, %v982
        %s984 = sld [smem:[#allocation6 + $0x6]]
        %v985 = vstv %s984
        %v986 = vmul.f32 %v864, %v985
        %v987 = vadd.f32 %v983, %v986
        %s988 = sld [smem:[#allocation6 + $0x7]]
        %v989 = vstv %s988
        %v990 = vmul.f32 %v866, %v989
        %v991 = vadd.f32 %v987, %v990
        %s992 = sld [smem:[#allocation6 + $0x8]]
        %v993 = vstv %s992
        %v994 = vmul.f32 %v860, %v993
        %s995 = sld [smem:[#allocation6 + $0x9]]
        %v996 = vstv %s995
        %v997 = vmul.f32 %v862, %v996
        %v998 = vadd.f32 %v994, %v997
        %s999 = sld [smem:[#allocation6 + $0xa]]
        %v1000 = vstv %s999
        %v1001 = vmul.f32 %v864, %v1000
        %v1002 = vadd.f32 %v998, %v1001
        %s1003 = sld [smem:[#allocation6 + $0xb]]
        %v1004 = vstv %s1003
        %v1005 = vmul.f32 %v866, %v1004
        %v1006 = vadd.f32 %v1002, %v1005
        %s1007 = sld [smem:[#allocation6 + $0xc]]
        %v1008 = vstv %s1007
        %v1009 = vmul.f32 %v860, %v1008
        %s1010 = sld [smem:[#allocation6 + $0xd]]
        %v1011 = vstv %s1010
        %v1012 = vmul.f32 %v862, %v1011
        %v1013 = vadd.f32 %v1009, %v1012
        %s1014 = sld [smem:[#allocation6 + $0xe]]
        %v1015 = vstv %s1014
        %v1016 = vmul.f32 %v864, %v1015
        %v1017 = vadd.f32 %v1013, %v1016
        %s1018 = sld [smem:[#allocation6 + $0xf]]
        %v1019 = vstv %s1018
        %v1020 = vmul.f32 %v866, %v1019
        %v1021 = vadd.f32 %v1017, %v1020
        %v1022 = vmul.f32 %v867, %v963
        %v1023 = vmul.f32 %v869, %v966
        %v1024 = vadd.f32 %v1022, %v1023
        %v1025 = vmul.f32 %v871, %v970
        %v1026 = vadd.f32 %v1024, %v1025
        %v1027 = vmul.f32 %v873, %v974
        %v1028 = vadd.f32 %v1026, %v1027
        %v1029 = vmul.f32 %v867, %v978
        %v1030 = vmul.f32 %v869, %v981
        %v1031 = vadd.f32 %v1029, %v1030
        %v1032 = vmul.f32 %v871, %v985
        %v1033 = vadd.f32 %v1031, %v1032
        %v1034 = vmul.f32 %v873, %v989
        %v1035 = vadd.f32 %v1033, %v1034
        %v1036 = vmul.f32 %v867, %v993
        %v1037 = vmul.f32 %v869, %v996
        %v1038 = vadd.f32 %v1036, %v1037
        %v1039 = vmul.f32 %v871, %v1000
        %v1040 = vadd.f32 %v1038, %v1039
        %v1041 = vmul.f32 %v873, %v1004
        %v1042 = vadd.f32 %v1040, %v1041
        %v1043 = vmul.f32 %v867, %v1008
        %v1044 = vmul.f32 %v869, %v1011
        %v1045 = vadd.f32 %v1043, %v1044
        %v1046 = vmul.f32 %v871, %v1015
        %v1047 = vadd.f32 %v1045, %v1046
        %v1048 = vmul.f32 %v873, %v1019
        %v1049 = vadd.f32 %v1047, %v1048
        %v1050 = vlaneseq
        %v1051 = vshrl.u32 %v1050, 7
        %v1052 = vlaneseq
        %v1053 = vand.u32 %v1052, 127
        %vm1054 = vcmp.eq.s32.totalorder %v1051, 0
        %vm1055 = vcmp.eq.s32.totalorder %v1053, 0
        %vm1056 = vmand %vm1054, %vm1055
        %v1057 = vsel %vm1056, 1.0, 0.0
        %p1058 = scmp.eq.s32.totalorder %s41, 0
        %s1059 = scalar_select %p1058, 1.0, 0.0
        %v1060 = vstv %s1059
        %v1061 = vmul.f32 %v1057, %v1060
        %s1062 = sld [smem:[#allocation4]]
        %v1063 = vstv %s1062
        %v1064 = vmul.f32 %v1061, %v1063
        %v1065 = vadd.f32 %v888, %v1064
        %s1066 = sld [smem:[#allocation4 + $0x1]]
        %v1067 = vstv %s1066
        %v1068 = vmul.f32 %v1061, %v1067
        %v1069 = vadd.f32 %v903, %v1068
        %s1070 = sld [smem:[#allocation4 + $0x2]]
        %v1071 = vstv %s1070
        %v1072 = vmul.f32 %v1061, %v1071
        %v1073 = vadd.f32 %v918, %v1072
        %s1074 = sld [smem:[#allocation4 + $0x3]]
        %v1075 = vstv %s1074
        %v1076 = vmul.f32 %v1061, %v1075
        %v1077 = vadd.f32 %v933, %v1076
        %s1078 = sld [smem:[#allocation7]]
        %v1079 = vstv %s1078
        %v1080 = vmul.f32 %v1061, %v1079
        %v1081 = vadd.f32 %v976, %v1080
        %s1082 = sld [smem:[#allocation7 + $0x1]]
        %v1083 = vstv %s1082
        %v1084 = vmul.f32 %v1061, %v1083
        %v1085 = vadd.f32 %v991, %v1084
        %s1086 = sld [smem:[#allocation7 + $0x2]]
        %v1087 = vstv %s1086
        %v1088 = vmul.f32 %v1061, %v1087
        %v1089 = vadd.f32 %v1006, %v1088
        %s1090 = sld [smem:[#allocation7 + $0x3]]
        %v1091 = vstv %s1090
        %v1092 = vmul.f32 %v1061, %v1091
        %v1093 = vadd.f32 %v1021, %v1092
        %v1094 = vmul.f32 %v1065, %v1065
        %v1095 = vmul.f32 %v940, %v940
        %v1096 = vadd.f32 %v1094, %v1095
        %v1097 = vrsqrt.pop %v1096
        %v1098 = vmul.f32 %v1097, %v1096
        %v1099 = vmul.f32 %v1098, %v1097
        %v1100 = vmul.f32 0.5, %v1099
        %v1101 = vsub.f32 1.5, %v1100
        %v1102 = vmul.f32 %v1097, %v1101
        %v1103 = vmul.f32 %v1096, %v1102
        %vm1104 = vcmp.eq.f32.partialorder %v1096, inf
        %v1105 = vsel %vm1104, %v1096, %v1103
        %vm1106 = vcmp.eq.f32.partialorder %v1096, 0.0
        %v1107 = vand.u32 %v1096, 2147483648
        %v1108 = vsel %vm1106, %v1107, %v1105
        %v1109 = vmul.f32 %v1069, %v1069
        %v1110 = vmul.f32 %v947, %v947
        %v1111 = vadd.f32 %v1109, %v1110
        %v1112 = vrsqrt.pop %v1111
        %v1113 = vmul.f32 %v1112, %v1111
        %v1114 = vmul.f32 %v1113, %v1112
        %v1115 = vmul.f32 0.5, %v1114
        %v1116 = vsub.f32 1.5, %v1115
        %v1117 = vmul.f32 %v1112, %v1116
        %v1118 = vmul.f32 %v1111, %v1117
        %vm1119 = vcmp.eq.f32.partialorder %v1111, inf
        %v1120 = vsel %vm1119, %v1111, %v1118
        %vm1121 = vcmp.eq.f32.partialorder %v1111, 0.0
        %v1122 = vand.u32 %v1111, 2147483648
        %v1123 = vsel %vm1121, %v1122, %v1120
        %v1124 = vmul.f32 %v1073, %v1073
        %v1125 = vmul.f32 %v954, %v954
        %v1126 = vadd.f32 %v1124, %v1125
        %v1127 = vrsqrt.pop %v1126
        %v1128 = vmul.f32 %v1127, %v1126
        %v1129 = vmul.f32 %v1128, %v1127
        %v1130 = vmul.f32 0.5, %v1129
        %v1131 = vsub.f32 1.5, %v1130
        %v1132 = vmul.f32 %v1127, %v1131
        %v1133 = vmul.f32 %v1126, %v1132
        %vm1134 = vcmp.eq.f32.partialorder %v1126, inf
        %v1135 = vsel %vm1134, %v1126, %v1133
        %vm1136 = vcmp.eq.f32.partialorder %v1126, 0.0
        %v1137 = vand.u32 %v1126, 2147483648
        %v1138 = vsel %vm1136, %v1137, %v1135
        %v1139 = vmul.f32 %v1077, %v1077
        %v1140 = vmul.f32 %v961, %v961
        %v1141 = vadd.f32 %v1139, %v1140
        %v1142 = vrsqrt.pop %v1141
        %v1143 = vmul.f32 %v1142, %v1141
        %v1144 = vmul.f32 %v1143, %v1142
        %v1145 = vmul.f32 0.5, %v1144
        %v1146 = vsub.f32 1.5, %v1145
        %v1147 = vmul.f32 %v1142, %v1146
        %v1148 = vmul.f32 %v1141, %v1147
        %vm1149 = vcmp.eq.f32.partialorder %v1141, inf
        %v1150 = vsel %vm1149, %v1141, %v1148
        %vm1151 = vcmp.eq.f32.partialorder %v1141, 0.0
        %v1152 = vand.u32 %v1141, 2147483648
        %v1153 = vsel %vm1151, %v1152, %v1150
        %v1154 = vmul.f32 %v1081, %v1081
        %v1155 = vmul.f32 %v1028, %v1028
        %v1156 = vadd.f32 %v1154, %v1155
        %v1157 = vrsqrt.pop %v1156
        %v1158 = vmul.f32 %v1157, %v1156
        %v1159 = vmul.f32 %v1158, %v1157
        %v1160 = vmul.f32 0.5, %v1159
        %v1161 = vsub.f32 1.5, %v1160
        %v1162 = vmul.f32 %v1157, %v1161
        %v1163 = vmul.f32 %v1156, %v1162
        %vm1164 = vcmp.eq.f32.partialorder %v1156, inf
        %v1165 = vsel %vm1164, %v1156, %v1163
        %vm1166 = vcmp.eq.f32.partialorder %v1156, 0.0
        %v1167 = vand.u32 %v1156, 2147483648
        %v1168 = vsel %vm1166, %v1167, %v1165
        %v1169 = vmul.f32 %v1085, %v1085
        %v1170 = vmul.f32 %v1035, %v1035
        %v1171 = vadd.f32 %v1169, %v1170
        %v1172 = vrsqrt.pop %v1171
        %v1173 = vmul.f32 %v1172, %v1171
        %v1174 = vmul.f32 %v1173, %v1172
        %v1175 = vmul.f32 0.5, %v1174
        %v1176 = vsub.f32 1.5, %v1175
        %v1177 = vmul.f32 %v1172, %v1176
        %v1178 = vmul.f32 %v1171, %v1177
        %vm1179 = vcmp.eq.f32.partialorder %v1171, inf
        %v1180 = vsel %vm1179, %v1171, %v1178
        %vm1181 = vcmp.eq.f32.partialorder %v1171, 0.0
        %v1182 = vand.u32 %v1171, 2147483648
        %v1183 = vsel %vm1181, %v1182, %v1180
        %v1184 = vmul.f32 %v1089, %v1089
        %v1185 = vmul.f32 %v1042, %v1042
        %v1186 = vadd.f32 %v1184, %v1185
        %v1187 = vrsqrt.pop %v1186
        %v1188 = vmul.f32 %v1187, %v1186
        %v1189 = vmul.f32 %v1188, %v1187
        %v1190 = vmul.f32 0.5, %v1189
        %v1191 = vsub.f32 1.5, %v1190
        %v1192 = vmul.f32 %v1187, %v1191
        %v1193 = vmul.f32 %v1186, %v1192
        %vm1194 = vcmp.eq.f32.partialorder %v1186, inf
        %v1195 = vsel %vm1194, %v1186, %v1193
        %vm1196 = vcmp.eq.f32.partialorder %v1186, 0.0
        %v1197 = vand.u32 %v1186, 2147483648
        %v1198 = vsel %vm1196, %v1197, %v1195
        %v1199 = vmul.f32 %v1093, %v1093
        %v1200 = vmul.f32 %v1049, %v1049
        %v1201 = vadd.f32 %v1199, %v1200
        %v1202 = vrsqrt.pop %v1201
        %v1203 = vmul.f32 %v1202, %v1201
        %v1204 = vmul.f32 %v1203, %v1202
        %v1205 = vmul.f32 0.5, %v1204
        %v1206 = vsub.f32 1.5, %v1205
        %v1207 = vmul.f32 %v1202, %v1206
        %v1208 = vmul.f32 %v1201, %v1207
        %vm1209 = vcmp.eq.f32.partialorder %v1201, inf
        %v1210 = vsel %vm1209, %v1201, %v1208
        %vm1211 = vcmp.eq.f32.partialorder %v1201, 0.0
        %v1212 = vand.u32 %v1201, 2147483648
        %v1213 = vsel %vm1211, %v1212, %v1210
        %v1214 = vand.u32 2147483647, %v1065
        %v1215 = vand.u32 2147483647, %v940
        %v1216 = vmax.f32 %v1214, %v1215
        %v1217 = vmin.f32 %v1214, %v1215
        %vm1218 = vcmp.eq.f32.partialorder %v1216, 0.0
        %v1219 = vsel %vm1218, 1.0, %v1216
        %v1220 = vrcp.pop %v1219
        %v1221 = vmul.f32 %v1219, %v1220
        %v1222 = vsub.f32 1.0, %v1221
        %v1223 = vmul.f32 %v1220, %v1222
        %v1224 = vadd.f32 %v1220, %v1223
        %vm1225 = vweird.f32 %v1219
        %vm1226 = vweird.f32 %v1220
        %vm1227 = vmor %vm1225, %vm1226
        %v1228 = vsel %vm1227, %v1220, %v1224
        %v1229 = vand.u32 2147483647, %v1219
        %vm1230 = vcmp.eq.f32.partialorder %v1229, 8.507059e+37
        %v1231 = vand.u32 %v1219, 2147483648
        %v1232 = vor.u32 1.1754944e-38, %v1231
        %v1233 = vsel %vm1230, %v1232, %v1228
        %v1234 = vmul.f32 %v1217, %v1233
        %vm1235 = vcmp.gt.f32.partialorder %v1234, 0.41421357
        %v1236 = vsub.f32 %v1234, 1.0
        %v1237 = vadd.f32 %v1234, 1.0
        %v1238 = vrcp.pop %v1237
        %v1239 = vmul.f32 %v1237, %v1238
        %v1240 = vsub.f32 1.0, %v1239
        %v1241 = vmul.f32 %v1238, %v1240
        %v1242 = vadd.f32 %v1238, %v1241
        %vm1243 = vweird.f32 %v1237
        %vm1244 = vweird.f32 %v1238
        %vm1245 = vmor %vm1243, %vm1244
        %v1246 = vsel %vm1245, %v1238, %v1242
        %v1247 = vand.u32 2147483647, %v1237
        %vm1248 = vcmp.eq.f32.partialorder %v1247, 8.507059e+37
        %v1249 = vand.u32 %v1237, 2147483648
        %v1250 = vor.u32 1.1754944e-38, %v1249
        %v1251 = vsel %vm1248, %v1250, %v1246
        %v1252 = vmul.f32 %v1236, %v1251
        %v1253 = vsel %vm1235, %v1252, %v1234
        %v1254 = vmul.f32 %v1253, %v1253
        %v1255 = vmul.f32 %v1254, 0.080537446
        %v1256 = vsub.f32 %v1255, 0.13877685
        %v1257 = vmul.f32 %v1256, %v1254
        %v1258 = vadd.f32 %v1257, 0.19977711
        %v1259 = vmul.f32 %v1258, %v1254
        %v1260 = vsub.f32 %v1259, 0.3333295
        %v1261 = vmul.f32 %v1260, %v1254
        %v1262 = vmul.f32 %v1261, %v1253
        %v1263 = vadd.f32 %v1262, %v1253
        %v1264 = vadd.f32 %v1263, 0.7853982
        %v1265 = vsel %vm1235, %v1264, %v1263
        %vm1266 = vcmp.gt.f32.partialorder %v1215, %v1214
        %v1267 = vsub.f32 1.5707964, %v1265
        %v1268 = vsel %vm1266, %v1267, %v1265
        %vm1270 = vcmp.lt.s32.totalorder %v1065, 0
        %v1271 = vsub.f32 3.1415927, %v1268
        %v1272 = vsel %vm1270, %v1271, %v1268
        %vm1274 = vcmp.lt.s32.totalorder %v940, 0
        %v1275 = vsub.f32 0.0, %v1272
        %v1276 = vsel %vm1274, %v1275, %v1272
        %v1277 = vand.u32 2147483647, %v1069
        %v1278 = vand.u32 2147483647, %v947
        %v1279 = vmax.f32 %v1277, %v1278
        %v1280 = vmin.f32 %v1277, %v1278
        %vm1281 = vcmp.eq.f32.partialorder %v1279, 0.0
        %v1282 = vsel %vm1281, 1.0, %v1279
        %v1283 = vrcp.pop %v1282
        %v1284 = vmul.f32 %v1282, %v1283
        %v1285 = vsub.f32 1.0, %v1284
        %v1286 = vmul.f32 %v1283, %v1285
        %v1287 = vadd.f32 %v1283, %v1286
        %vm1288 = vweird.f32 %v1282
        %vm1289 = vweird.f32 %v1283
        %vm1290 = vmor %vm1288, %vm1289
        %v1291 = vsel %vm1290, %v1283, %v1287
        %v1292 = vand.u32 2147483647, %v1282
        %vm1293 = vcmp.eq.f32.partialorder %v1292, 8.507059e+37
        %v1294 = vand.u32 %v1282, 2147483648
        %v1295 = vor.u32 1.1754944e-38, %v1294
        %v1296 = vsel %vm1293, %v1295, %v1291
        %v1297 = vmul.f32 %v1280, %v1296
        %vm1298 = vcmp.gt.f32.partialorder %v1297, 0.41421357
        %v1299 = vsub.f32 %v1297, 1.0
        %v1300 = vadd.f32 %v1297, 1.0
        %v1301 = vrcp.pop %v1300
        %v1302 = vmul.f32 %v1300, %v1301
        %v1303 = vsub.f32 1.0, %v1302
        %v1304 = vmul.f32 %v1301, %v1303
        %v1305 = vadd.f32 %v1301, %v1304
        %vm1306 = vweird.f32 %v1300
        %vm1307 = vweird.f32 %v1301
        %vm1308 = vmor %vm1306, %vm1307
        %v1309 = vsel %vm1308, %v1301, %v1305
        %v1310 = vand.u32 2147483647, %v1300
        %vm1311 = vcmp.eq.f32.partialorder %v1310, 8.507059e+37
        %v1312 = vand.u32 %v1300, 2147483648
        %v1313 = vor.u32 1.1754944e-38, %v1312
        %v1314 = vsel %vm1311, %v1313, %v1309
        %v1315 = vmul.f32 %v1299, %v1314
        %v1316 = vsel %vm1298, %v1315, %v1297
        %v1317 = vmul.f32 %v1316, %v1316
        %v1318 = vmul.f32 %v1317, 0.080537446
        %v1319 = vsub.f32 %v1318, 0.13877685
        %v1320 = vmul.f32 %v1319, %v1317
        %v1321 = vadd.f32 %v1320, 0.19977711
        %v1322 = vmul.f32 %v1321, %v1317
        %v1323 = vsub.f32 %v1322, 0.3333295
        %v1324 = vmul.f32 %v1323, %v1317
        %v1325 = vmul.f32 %v1324, %v1316
        %v1326 = vadd.f32 %v1325, %v1316
        %v1327 = vadd.f32 %v1326, 0.7853982
        %v1328 = vsel %vm1298, %v1327, %v1326
        %vm1329 = vcmp.gt.f32.partialorder %v1278, %v1277
        %v1330 = vsub.f32 1.5707964, %v1328
        %v1331 = vsel %vm1329, %v1330, %v1328
        %vm1333 = vcmp.lt.s32.totalorder %v1069, 0
        %v1334 = vsub.f32 3.1415927, %v1331
        %v1335 = vsel %vm1333, %v1334, %v1331
        %vm1337 = vcmp.lt.s32.totalorder %v947, 0
        %v1338 = vsub.f32 0.0, %v1335
        %v1339 = vsel %vm1337, %v1338, %v1335
        %v1340 = vand.u32 2147483647, %v1073
        %v1341 = vand.u32 2147483647, %v954
        %v1342 = vmax.f32 %v1340, %v1341
        %v1343 = vmin.f32 %v1340, %v1341
        %vm1344 = vcmp.eq.f32.partialorder %v1342, 0.0
        %v1345 = vsel %vm1344, 1.0, %v1342
        %v1346 = vrcp.pop %v1345
        %v1347 = vmul.f32 %v1345, %v1346
        %v1348 = vsub.f32 1.0, %v1347
        %v1349 = vmul.f32 %v1346, %v1348
        %v1350 = vadd.f32 %v1346, %v1349
        %vm1351 = vweird.f32 %v1345
        %vm1352 = vweird.f32 %v1346
        %vm1353 = vmor %vm1351, %vm1352
        %v1354 = vsel %vm1353, %v1346, %v1350
        %v1355 = vand.u32 2147483647, %v1345
        %vm1356 = vcmp.eq.f32.partialorder %v1355, 8.507059e+37
        %v1357 = vand.u32 %v1345, 2147483648
        %v1358 = vor.u32 1.1754944e-38, %v1357
        %v1359 = vsel %vm1356, %v1358, %v1354
        %v1360 = vmul.f32 %v1343, %v1359
        %vm1361 = vcmp.gt.f32.partialorder %v1360, 0.41421357
        %v1362 = vsub.f32 %v1360, 1.0
        %v1363 = vadd.f32 %v1360, 1.0
        %v1364 = vrcp.pop %v1363
        %v1365 = vmul.f32 %v1363, %v1364
        %v1366 = vsub.f32 1.0, %v1365
        %v1367 = vmul.f32 %v1364, %v1366
        %v1368 = vadd.f32 %v1364, %v1367
        %vm1369 = vweird.f32 %v1363
        %vm1370 = vweird.f32 %v1364
        %vm1371 = vmor %vm1369, %vm1370
        %v1372 = vsel %vm1371, %v1364, %v1368
        %v1373 = vand.u32 2147483647, %v1363
        %vm1374 = vcmp.eq.f32.partialorder %v1373, 8.507059e+37
        %v1375 = vand.u32 %v1363, 2147483648
        %v1376 = vor.u32 1.1754944e-38, %v1375
        %v1377 = vsel %vm1374, %v1376, %v1372
        %v1378 = vmul.f32 %v1362, %v1377
        %v1379 = vsel %vm1361, %v1378, %v1360
        %v1380 = vmul.f32 %v1379, %v1379
        %v1381 = vmul.f32 %v1380, 0.080537446
        %v1382 = vsub.f32 %v1381, 0.13877685
        %v1383 = vmul.f32 %v1382, %v1380
        %v1384 = vadd.f32 %v1383, 0.19977711
        %v1385 = vmul.f32 %v1384, %v1380
        %v1386 = vsub.f32 %v1385, 0.3333295
        %v1387 = vmul.f32 %v1386, %v1380
        %v1388 = vmul.f32 %v1387, %v1379
        %v1389 = vadd.f32 %v1388, %v1379
        %v1390 = vadd.f32 %v1389, 0.7853982
        %v1391 = vsel %vm1361, %v1390, %v1389
        %vm1392 = vcmp.gt.f32.partialorder %v1341, %v1340
        %v1393 = vsub.f32 1.5707964, %v1391
        %v1394 = vsel %vm1392, %v1393, %v1391
        %vm1396 = vcmp.lt.s32.totalorder %v1073, 0
        %v1397 = vsub.f32 3.1415927, %v1394
        %v1398 = vsel %vm1396, %v1397, %v1394
        %vm1400 = vcmp.lt.s32.totalorder %v954, 0
        %v1401 = vsub.f32 0.0, %v1398
        %v1402 = vsel %vm1400, %v1401, %v1398
        %v1403 = vand.u32 2147483647, %v1077
        %v1404 = vand.u32 2147483647, %v961
        %v1405 = vmax.f32 %v1403, %v1404
        %v1406 = vmin.f32 %v1403, %v1404
        %vm1407 = vcmp.eq.f32.partialorder %v1405, 0.0
        %v1408 = vsel %vm1407, 1.0, %v1405
        %v1409 = vrcp.pop %v1408
        %v1410 = vmul.f32 %v1408, %v1409
        %v1411 = vsub.f32 1.0, %v1410
        %v1412 = vmul.f32 %v1409, %v1411
        %v1413 = vadd.f32 %v1409, %v1412
        %vm1414 = vweird.f32 %v1408
        %vm1415 = vweird.f32 %v1409
        %vm1416 = vmor %vm1414, %vm1415
        %v1417 = vsel %vm1416, %v1409, %v1413
        %v1418 = vand.u32 2147483647, %v1408
        %vm1419 = vcmp.eq.f32.partialorder %v1418, 8.507059e+37
        %v1420 = vand.u32 %v1408, 2147483648
        %v1421 = vor.u32 1.1754944e-38, %v1420
        %v1422 = vsel %vm1419, %v1421, %v1417
        %v1423 = vmul.f32 %v1406, %v1422
        %vm1424 = vcmp.gt.f32.partialorder %v1423, 0.41421357
        %v1425 = vsub.f32 %v1423, 1.0
        %v1426 = vadd.f32 %v1423, 1.0
        %v1427 = vrcp.pop %v1426
        %v1428 = vmul.f32 %v1426, %v1427
        %v1429 = vsub.f32 1.0, %v1428
        %v1430 = vmul.f32 %v1427, %v1429
        %v1431 = vadd.f32 %v1427, %v1430
        %vm1432 = vweird.f32 %v1426
        %vm1433 = vweird.f32 %v1427
        %vm1434 = vmor %vm1432, %vm1433
        %v1435 = vsel %vm1434, %v1427, %v1431
        %v1436 = vand.u32 2147483647, %v1426
        %vm1437 = vcmp.eq.f32.partialorder %v1436, 8.507059e+37
        %v1438 = vand.u32 %v1426, 2147483648
        %v1439 = vor.u32 1.1754944e-38, %v1438
        %v1440 = vsel %vm1437, %v1439, %v1435
        %v1441 = vmul.f32 %v1425, %v1440
        %v1442 = vsel %vm1424, %v1441, %v1423
        %v1443 = vmul.f32 %v1442, %v1442
        %v1444 = vmul.f32 %v1443, 0.080537446
        %v1445 = vsub.f32 %v1444, 0.13877685
        %v1446 = vmul.f32 %v1445, %v1443
        %v1447 = vadd.f32 %v1446, 0.19977711
        %v1448 = vmul.f32 %v1447, %v1443
        %v1449 = vsub.f32 %v1448, 0.3333295
        %v1450 = vmul.f32 %v1449, %v1443
        %v1451 = vmul.f32 %v1450, %v1442
        %v1452 = vadd.f32 %v1451, %v1442
        %v1453 = vadd.f32 %v1452, 0.7853982
        %v1454 = vsel %vm1424, %v1453, %v1452
        %vm1455 = vcmp.gt.f32.partialorder %v1404, %v1403
        %v1456 = vsub.f32 1.5707964, %v1454
        %v1457 = vsel %vm1455, %v1456, %v1454
        %vm1459 = vcmp.lt.s32.totalorder %v1077, 0
        %v1460 = vsub.f32 3.1415927, %v1457
        %v1461 = vsel %vm1459, %v1460, %v1457
        %vm1463 = vcmp.lt.s32.totalorder %v961, 0
        %v1464 = vsub.f32 0.0, %v1461
        %v1465 = vsel %vm1463, %v1464, %v1461
        %v1466 = vand.u32 2147483647, %v1081
        %v1467 = vand.u32 2147483647, %v1028
        %v1468 = vmax.f32 %v1466, %v1467
        %v1469 = vmin.f32 %v1466, %v1467
        %vm1470 = vcmp.eq.f32.partialorder %v1468, 0.0
        %v1471 = vsel %vm1470, 1.0, %v1468
        %v1472 = vrcp.pop %v1471
        %v1473 = vmul.f32 %v1471, %v1472
        %v1474 = vsub.f32 1.0, %v1473
        %v1475 = vmul.f32 %v1472, %v1474
        %v1476 = vadd.f32 %v1472, %v1475
        %vm1477 = vweird.f32 %v1471
        %vm1478 = vweird.f32 %v1472
        %vm1479 = vmor %vm1477, %vm1478
        %v1480 = vsel %vm1479, %v1472, %v1476
        %v1481 = vand.u32 2147483647, %v1471
        %vm1482 = vcmp.eq.f32.partialorder %v1481, 8.507059e+37
        %v1483 = vand.u32 %v1471, 2147483648
        %v1484 = vor.u32 1.1754944e-38, %v1483
        %v1485 = vsel %vm1482, %v1484, %v1480
        %v1486 = vmul.f32 %v1469, %v1485
        %vm1487 = vcmp.gt.f32.partialorder %v1486, 0.41421357
        %v1488 = vsub.f32 %v1486, 1.0
        %v1489 = vadd.f32 %v1486, 1.0
        %v1490 = vrcp.pop %v1489
        %v1491 = vmul.f32 %v1489, %v1490
        %v1492 = vsub.f32 1.0, %v1491
        %v1493 = vmul.f32 %v1490, %v1492
        %v1494 = vadd.f32 %v1490, %v1493
        %vm1495 = vweird.f32 %v1489
        %vm1496 = vweird.f32 %v1490
        %vm1497 = vmor %vm1495, %vm1496
        %v1498 = vsel %vm1497, %v1490, %v1494
        %v1499 = vand.u32 2147483647, %v1489
        %vm1500 = vcmp.eq.f32.partialorder %v1499, 8.507059e+37
        %v1501 = vand.u32 %v1489, 2147483648
        %v1502 = vor.u32 1.1754944e-38, %v1501
        %v1503 = vsel %vm1500, %v1502, %v1498
        %v1504 = vmul.f32 %v1488, %v1503
        %v1505 = vsel %vm1487, %v1504, %v1486
        %v1506 = vmul.f32 %v1505, %v1505
        %v1507 = vmul.f32 %v1506, 0.080537446
        %v1508 = vsub.f32 %v1507, 0.13877685
        %v1509 = vmul.f32 %v1508, %v1506
        %v1510 = vadd.f32 %v1509, 0.19977711
        %v1511 = vmul.f32 %v1510, %v1506
        %v1512 = vsub.f32 %v1511, 0.3333295
        %v1513 = vmul.f32 %v1512, %v1506
        %v1514 = vmul.f32 %v1513, %v1505
        %v1515 = vadd.f32 %v1514, %v1505
        %v1516 = vadd.f32 %v1515, 0.7853982
        %v1517 = vsel %vm1487, %v1516, %v1515
        %vm1518 = vcmp.gt.f32.partialorder %v1467, %v1466
        %v1519 = vsub.f32 1.5707964, %v1517
        %v1520 = vsel %vm1518, %v1519, %v1517
        %vm1522 = vcmp.lt.s32.totalorder %v1081, 0
        %v1523 = vsub.f32 3.1415927, %v1520
        %v1524 = vsel %vm1522, %v1523, %v1520
        %vm1526 = vcmp.lt.s32.totalorder %v1028, 0
        %v1527 = vsub.f32 0.0, %v1524
        %v1528 = vsel %vm1526, %v1527, %v1524
        %v1529 = vand.u32 2147483647, %v1085
        %v1530 = vand.u32 2147483647, %v1035
        %v1531 = vmax.f32 %v1529, %v1530
        %v1532 = vmin.f32 %v1529, %v1530
        %vm1533 = vcmp.eq.f32.partialorder %v1531, 0.0
        %v1534 = vsel %vm1533, 1.0, %v1531
        %v1535 = vrcp.pop %v1534
        %v1536 = vmul.f32 %v1534, %v1535
        %v1537 = vsub.f32 1.0, %v1536
        %v1538 = vmul.f32 %v1535, %v1537
        %v1539 = vadd.f32 %v1535, %v1538
        %vm1540 = vweird.f32 %v1534
        %vm1541 = vweird.f32 %v1535
        %vm1542 = vmor %vm1540, %vm1541
        %v1543 = vsel %vm1542, %v1535, %v1539
        %v1544 = vand.u32 2147483647, %v1534
        %vm1545 = vcmp.eq.f32.partialorder %v1544, 8.507059e+37
        %v1546 = vand.u32 %v1534, 2147483648
        %v1547 = vor.u32 1.1754944e-38, %v1546
        %v1548 = vsel %vm1545, %v1547, %v1543
        %v1549 = vmul.f32 %v1532, %v1548
        %vm1550 = vcmp.gt.f32.partialorder %v1549, 0.41421357
        %v1551 = vsub.f32 %v1549, 1.0
        %v1552 = vadd.f32 %v1549, 1.0
        %v1553 = vrcp.pop %v1552
        %v1554 = vmul.f32 %v1552, %v1553
        %v1555 = vsub.f32 1.0, %v1554
        %v1556 = vmul.f32 %v1553, %v1555
        %v1557 = vadd.f32 %v1553, %v1556
        %vm1558 = vweird.f32 %v1552
        %vm1559 = vweird.f32 %v1553
        %vm1560 = vmor %vm1558, %vm1559
        %v1561 = vsel %vm1560, %v1553, %v1557
        %v1562 = vand.u32 2147483647, %v1552
        %vm1563 = vcmp.eq.f32.partialorder %v1562, 8.507059e+37
        %v1564 = vand.u32 %v1552, 2147483648
        %v1565 = vor.u32 1.1754944e-38, %v1564
        %v1566 = vsel %vm1563, %v1565, %v1561
        %v1567 = vmul.f32 %v1551, %v1566
        %v1568 = vsel %vm1550, %v1567, %v1549
        %v1569 = vmul.f32 %v1568, %v1568
        %v1570 = vmul.f32 %v1569, 0.080537446
        %v1571 = vsub.f32 %v1570, 0.13877685
        %v1572 = vmul.f32 %v1571, %v1569
        %v1573 = vadd.f32 %v1572, 0.19977711
        %v1574 = vmul.f32 %v1573, %v1569
        %v1575 = vsub.f32 %v1574, 0.3333295
        %v1576 = vmul.f32 %v1575, %v1569
        %v1577 = vmul.f32 %v1576, %v1568
        %v1578 = vadd.f32 %v1577, %v1568
        %v1579 = vadd.f32 %v1578, 0.7853982
        %v1580 = vsel %vm1550, %v1579, %v1578
        %vm1581 = vcmp.gt.f32.partialorder %v1530, %v1529
        %v1582 = vsub.f32 1.5707964, %v1580
        %v1583 = vsel %vm1581, %v1582, %v1580
        %vm1585 = vcmp.lt.s32.totalorder %v1085, 0
        %v1586 = vsub.f32 3.1415927, %v1583
        %v1587 = vsel %vm1585, %v1586, %v1583
        %vm1589 = vcmp.lt.s32.totalorder %v1035, 0
        %v1590 = vsub.f32 0.0, %v1587
        %v1591 = vsel %vm1589, %v1590, %v1587
        %v1592 = vand.u32 2147483647, %v1089
        %v1593 = vand.u32 2147483647, %v1042
        %v1594 = vmax.f32 %v1592, %v1593
        %v1595 = vmin.f32 %v1592, %v1593
        %vm1596 = vcmp.eq.f32.partialorder %v1594, 0.0
        %v1597 = vsel %vm1596, 1.0, %v1594
        %v1598 = vrcp.pop %v1597
        %v1599 = vmul.f32 %v1597, %v1598
        %v1600 = vsub.f32 1.0, %v1599
        %v1601 = vmul.f32 %v1598, %v1600
        %v1602 = vadd.f32 %v1598, %v1601
        %vm1603 = vweird.f32 %v1597
        %vm1604 = vweird.f32 %v1598
        %vm1605 = vmor %vm1603, %vm1604
        %v1606 = vsel %vm1605, %v1598, %v1602
        %v1607 = vand.u32 2147483647, %v1597
        %vm1608 = vcmp.eq.f32.partialorder %v1607, 8.507059e+37
        %v1609 = vand.u32 %v1597, 2147483648
        %v1610 = vor.u32 1.1754944e-38, %v1609
        %v1611 = vsel %vm1608, %v1610, %v1606
        %v1612 = vmul.f32 %v1595, %v1611
        %vm1613 = vcmp.gt.f32.partialorder %v1612, 0.41421357
        %v1614 = vsub.f32 %v1612, 1.0
        %v1615 = vadd.f32 %v1612, 1.0
        %v1616 = vrcp.pop %v1615
        %v1617 = vmul.f32 %v1615, %v1616
        %v1618 = vsub.f32 1.0, %v1617
        %v1619 = vmul.f32 %v1616, %v1618
        %v1620 = vadd.f32 %v1616, %v1619
        %vm1621 = vweird.f32 %v1615
        %vm1622 = vweird.f32 %v1616
        %vm1623 = vmor %vm1621, %vm1622
        %v1624 = vsel %vm1623, %v1616, %v1620
        %v1625 = vand.u32 2147483647, %v1615
        %vm1626 = vcmp.eq.f32.partialorder %v1625, 8.507059e+37
        %v1627 = vand.u32 %v1615, 2147483648
        %v1628 = vor.u32 1.1754944e-38, %v1627
        %v1629 = vsel %vm1626, %v1628, %v1624
        %v1630 = vmul.f32 %v1614, %v1629
        %v1631 = vsel %vm1613, %v1630, %v1612
        %v1632 = vmul.f32 %v1631, %v1631
        %v1633 = vmul.f32 %v1632, 0.080537446
        %v1634 = vsub.f32 %v1633, 0.13877685
        %v1635 = vmul.f32 %v1634, %v1632
        %v1636 = vadd.f32 %v1635, 0.19977711
        %v1637 = vmul.f32 %v1636, %v1632
        %v1638 = vsub.f32 %v1637, 0.3333295
        %v1639 = vmul.f32 %v1638, %v1632
        %v1640 = vmul.f32 %v1639, %v1631
        %v1641 = vadd.f32 %v1640, %v1631
        %v1642 = vadd.f32 %v1641, 0.7853982
        %v1643 = vsel %vm1613, %v1642, %v1641
        %vm1644 = vcmp.gt.f32.partialorder %v1593, %v1592
        %v1645 = vsub.f32 1.5707964, %v1643
        %v1646 = vsel %vm1644, %v1645, %v1643
        %vm1648 = vcmp.lt.s32.totalorder %v1089, 0
        %v1649 = vsub.f32 3.1415927, %v1646
        %v1650 = vsel %vm1648, %v1649, %v1646
        %vm1652 = vcmp.lt.s32.totalorder %v1042, 0
        %v1653 = vsub.f32 0.0, %v1650
        %v1654 = vsel %vm1652, %v1653, %v1650
        %v1655 = vand.u32 2147483647, %v1093
        %v1656 = vand.u32 2147483647, %v1049
        %v1657 = vmax.f32 %v1655, %v1656
        %v1658 = vmin.f32 %v1655, %v1656
        %vm1659 = vcmp.eq.f32.partialorder %v1657, 0.0
        %v1660 = vsel %vm1659, 1.0, %v1657
        %v1661 = vrcp.pop %v1660
        %v1662 = vmul.f32 %v1660, %v1661
        %v1663 = vsub.f32 1.0, %v1662
        %v1664 = vmul.f32 %v1661, %v1663
        %v1665 = vadd.f32 %v1661, %v1664
        %vm1666 = vweird.f32 %v1660
        %vm1667 = vweird.f32 %v1661
        %vm1668 = vmor %vm1666, %vm1667
        %v1669 = vsel %vm1668, %v1661, %v1665
        %v1670 = vand.u32 2147483647, %v1660
        %vm1671 = vcmp.eq.f32.partialorder %v1670, 8.507059e+37
        %v1672 = vand.u32 %v1660, 2147483648
        %v1673 = vor.u32 1.1754944e-38, %v1672
        %v1674 = vsel %vm1671, %v1673, %v1669
        %v1675 = vmul.f32 %v1658, %v1674
        %vm1676 = vcmp.gt.f32.partialorder %v1675, 0.41421357
        %v1677 = vsub.f32 %v1675, 1.0
        %v1678 = vadd.f32 %v1675, 1.0
        %v1679 = vrcp.pop %v1678
        %v1680 = vmul.f32 %v1678, %v1679
        %v1681 = vsub.f32 1.0, %v1680
        %v1682 = vmul.f32 %v1679, %v1681
        %v1683 = vadd.f32 %v1679, %v1682
        %vm1684 = vweird.f32 %v1678
        %vm1685 = vweird.f32 %v1679
        %vm1686 = vmor %vm1684, %vm1685
        %v1687 = vsel %vm1686, %v1679, %v1683
        %v1688 = vand.u32 2147483647, %v1678
        %vm1689 = vcmp.eq.f32.partialorder %v1688, 8.507059e+37
        %v1690 = vand.u32 %v1678, 2147483648
        %v1691 = vor.u32 1.1754944e-38, %v1690
        %v1692 = vsel %vm1689, %v1691, %v1687
        %v1693 = vmul.f32 %v1677, %v1692
        %v1694 = vsel %vm1676, %v1693, %v1675
        %v1695 = vmul.f32 %v1694, %v1694
        %v1696 = vmul.f32 %v1695, 0.080537446
        %v1697 = vsub.f32 %v1696, 0.13877685
        %v1698 = vmul.f32 %v1697, %v1695
        %v1699 = vadd.f32 %v1698, 0.19977711
        %v1700 = vmul.f32 %v1699, %v1695
        %v1701 = vsub.f32 %v1700, 0.3333295
        %v1702 = vmul.f32 %v1701, %v1695
        %v1703 = vmul.f32 %v1702, %v1694
        %v1704 = vadd.f32 %v1703, %v1694
        %v1705 = vadd.f32 %v1704, 0.7853982
        %v1706 = vsel %vm1676, %v1705, %v1704
        %vm1707 = vcmp.gt.f32.partialorder %v1656, %v1655
        %v1708 = vsub.f32 1.5707964, %v1706
        %v1709 = vsel %vm1707, %v1708, %v1706
        %vm1711 = vcmp.lt.s32.totalorder %v1093, 0
        %v1712 = vsub.f32 3.1415927, %v1709
        %v1713 = vsel %vm1711, %v1712, %v1709
        %vm1715 = vcmp.lt.s32.totalorder %v1049, 0
        %v1716 = vsub.f32 0.0, %v1713
        %v1717 = vsel %vm1715, %v1716, %v1713
        %s1718 = sld [smem:[#allocation9]]
        %v1719 = vstv %s1718
        %v1720 = vmul.f32 %v1108, %v1719
        %s1721 = sld [smem:[#allocation9 + $0x1]]
        %v1722 = vstv %s1721
        %v1723 = vmul.f32 %v1123, %v1722
        %v1724 = vadd.f32 %v1720, %v1723
        %s1725 = sld [smem:[#allocation9 + $0x2]]
        %v1726 = vstv %s1725
        %v1727 = vmul.f32 %v1138, %v1726
        %v1728 = vadd.f32 %v1724, %v1727
        %s1729 = sld [smem:[#allocation9 + $0x3]]
        %v1730 = vstv %s1729
        %v1731 = vmul.f32 %v1153, %v1730
        %v1732 = vadd.f32 %v1728, %v1731
        %s1733 = sld [smem:[#allocation9 + $0x4]]
        %v1734 = vstv %s1733
        %v1735 = vmul.f32 %v1168, %v1734
        %v1736 = vadd.f32 %v1732, %v1735
        %s1737 = sld [smem:[#allocation9 + $0x5]]
        %v1738 = vstv %s1737
        %v1739 = vmul.f32 %v1183, %v1738
        %v1740 = vadd.f32 %v1736, %v1739
        %s1741 = sld [smem:[#allocation9 + $0x6]]
        %v1742 = vstv %s1741
        %v1743 = vmul.f32 %v1198, %v1742
        %v1744 = vadd.f32 %v1740, %v1743
        %s1745 = sld [smem:[#allocation9 + $0x7]]
        %v1746 = vstv %s1745
        %v1747 = vmul.f32 %v1213, %v1746
        %v1748 = vadd.f32 %v1744, %v1747
        %s1749 = sld [smem:[#allocation10]]
        %v1750 = vstv %s1749
        %v1751 = vadd.f32 %v1748, %v1750
        %s1752 = sld [smem:[#allocation9 + $0x8]]
        %v1753 = vstv %s1752
        %v1754 = vmul.f32 %v1108, %v1753
        %s1755 = sld [smem:[#allocation9 + $0x9]]
        %v1756 = vstv %s1755
        %v1757 = vmul.f32 %v1123, %v1756
        %v1758 = vadd.f32 %v1754, %v1757
        %s1759 = sld [smem:[#allocation9 + $0xa]]
        %v1760 = vstv %s1759
        %v1761 = vmul.f32 %v1138, %v1760
        %v1762 = vadd.f32 %v1758, %v1761
        %s1763 = sld [smem:[#allocation9 + $0xb]]
        %v1764 = vstv %s1763
        %v1765 = vmul.f32 %v1153, %v1764
        %v1766 = vadd.f32 %v1762, %v1765
        %s1767 = sld [smem:[#allocation9 + $0xc]]
        %v1768 = vstv %s1767
        %v1769 = vmul.f32 %v1168, %v1768
        %v1770 = vadd.f32 %v1766, %v1769
        %s1771 = sld [smem:[#allocation9 + $0xd]]
        %v1772 = vstv %s1771
        %v1773 = vmul.f32 %v1183, %v1772
        %v1774 = vadd.f32 %v1770, %v1773
        %s1775 = sld [smem:[#allocation9 + $0xe]]
        %v1776 = vstv %s1775
        %v1777 = vmul.f32 %v1198, %v1776
        %v1778 = vadd.f32 %v1774, %v1777
        %s1779 = sld [smem:[#allocation9 + $0xf]]
        %v1780 = vstv %s1779
        %v1781 = vmul.f32 %v1213, %v1780
        %v1782 = vadd.f32 %v1778, %v1781
        %s1783 = sld [smem:[#allocation10 + $0x1]]
        %v1784 = vstv %s1783
        %v1785 = vadd.f32 %v1782, %v1784
        %s1786 = sld [smem:[#allocation9 + $0x10]]
        %v1787 = vstv %s1786
        %v1788 = vmul.f32 %v1108, %v1787
        %s1789 = sld [smem:[#allocation9 + $0x11]]
        %v1790 = vstv %s1789
        %v1791 = vmul.f32 %v1123, %v1790
        %v1792 = vadd.f32 %v1788, %v1791
        %s1793 = sld [smem:[#allocation9 + $0x12]]
        %v1794 = vstv %s1793
        %v1795 = vmul.f32 %v1138, %v1794
        %v1796 = vadd.f32 %v1792, %v1795
        %s1797 = sld [smem:[#allocation9 + $0x13]]
        %v1798 = vstv %s1797
        %v1799 = vmul.f32 %v1153, %v1798
        %v1800 = vadd.f32 %v1796, %v1799
        %s1801 = sld [smem:[#allocation9 + $0x14]]
        %v1802 = vstv %s1801
        %v1803 = vmul.f32 %v1168, %v1802
        %v1804 = vadd.f32 %v1800, %v1803
        %s1805 = sld [smem:[#allocation9 + $0x15]]
        %v1806 = vstv %s1805
        %v1807 = vmul.f32 %v1183, %v1806
        %v1808 = vadd.f32 %v1804, %v1807
        %s1809 = sld [smem:[#allocation9 + $0x16]]
        %v1810 = vstv %s1809
        %v1811 = vmul.f32 %v1198, %v1810
        %v1812 = vadd.f32 %v1808, %v1811
        %s1813 = sld [smem:[#allocation9 + $0x17]]
        %v1814 = vstv %s1813
        %v1815 = vmul.f32 %v1213, %v1814
        %v1816 = vadd.f32 %v1812, %v1815
        %s1817 = sld [smem:[#allocation10 + $0x2]]
        %v1818 = vstv %s1817
        %v1819 = vadd.f32 %v1816, %v1818
        %s1820 = sld [smem:[#allocation9 + $0x18]]
        %v1821 = vstv %s1820
        %v1822 = vmul.f32 %v1108, %v1821
        %s1823 = sld [smem:[#allocation9 + $0x19]]
        %v1824 = vstv %s1823
        %v1825 = vmul.f32 %v1123, %v1824
        %v1826 = vadd.f32 %v1822, %v1825
        %s1827 = sld [smem:[#allocation9 + $0x1a]]
        %v1828 = vstv %s1827
        %v1829 = vmul.f32 %v1138, %v1828
        %v1830 = vadd.f32 %v1826, %v1829
        %s1831 = sld [smem:[#allocation9 + $0x1b]]
        %v1832 = vstv %s1831
        %v1833 = vmul.f32 %v1153, %v1832
        %v1834 = vadd.f32 %v1830, %v1833
        %s1835 = sld [smem:[#allocation9 + $0x1c]]
        %v1836 = vstv %s1835
        %v1837 = vmul.f32 %v1168, %v1836
        %v1838 = vadd.f32 %v1834, %v1837
        %s1839 = sld [smem:[#allocation9 + $0x1d]]
        %v1840 = vstv %s1839
        %v1841 = vmul.f32 %v1183, %v1840
        %v1842 = vadd.f32 %v1838, %v1841
        %s1843 = sld [smem:[#allocation9 + $0x1e]]
        %v1844 = vstv %s1843
        %v1845 = vmul.f32 %v1198, %v1844
        %v1846 = vadd.f32 %v1842, %v1845
        %s1847 = sld [smem:[#allocation9 + $0x1f]]
        %v1848 = vstv %s1847
        %v1849 = vmul.f32 %v1213, %v1848
        %v1850 = vadd.f32 %v1846, %v1849
        %s1851 = sld [smem:[#allocation10 + $0x3]]
        %v1852 = vstv %s1851
        %v1853 = vadd.f32 %v1850, %v1852
        %vm1854 = vcmp.ge.f32.partialorder %v1751, 0.0
        %v1855 = vmul.f32 %v1751, 0.1
        %v1856 = vsel %vm1854, %v1751, %v1855
        %vm1857 = vcmp.ge.f32.partialorder %v1785, 0.0
        %v1858 = vmul.f32 %v1785, 0.1
        %v1859 = vsel %vm1857, %v1785, %v1858
        %vm1860 = vcmp.ge.f32.partialorder %v1819, 0.0
        %v1861 = vmul.f32 %v1819, 0.1
        %v1862 = vsel %vm1860, %v1819, %v1861
        %vm1863 = vcmp.ge.f32.partialorder %v1853, 0.0
        %v1864 = vmul.f32 %v1853, 0.1
        %v1865 = vsel %vm1863, %v1853, %v1864
        %s1866 = sld [smem:[#allocation12]]
        %v1867 = vstv %s1866
        %v1868 = vmul.f32 %v1856, %v1867
        %s1869 = sld [smem:[#allocation12 + $0x1]]
        %v1870 = vstv %s1869
        %v1871 = vmul.f32 %v1859, %v1870
        %v1872 = vadd.f32 %v1868, %v1871
        %s1873 = sld [smem:[#allocation12 + $0x2]]
        %v1874 = vstv %s1873
        %v1875 = vmul.f32 %v1862, %v1874
        %v1876 = vadd.f32 %v1872, %v1875
        %s1877 = sld [smem:[#allocation12 + $0x3]]
        %v1878 = vstv %s1877
        %v1879 = vmul.f32 %v1865, %v1878
        %v1880 = vadd.f32 %v1876, %v1879
        %s1881 = sld [smem:[#allocation13]]
        %v1882 = vstv %s1881
        %v1883 = vadd.f32 %v1880, %v1882
        %s1884 = sld [smem:[#allocation12 + $0x4]]
        %v1885 = vstv %s1884
        %v1886 = vmul.f32 %v1856, %v1885
        %s1887 = sld [smem:[#allocation12 + $0x5]]
        %v1888 = vstv %s1887
        %v1889 = vmul.f32 %v1859, %v1888
        %v1890 = vadd.f32 %v1886, %v1889
        %s1891 = sld [smem:[#allocation12 + $0x6]]
        %v1892 = vstv %s1891
        %v1893 = vmul.f32 %v1862, %v1892
        %v1894 = vadd.f32 %v1890, %v1893
        %s1895 = sld [smem:[#allocation12 + $0x7]]
        %v1896 = vstv %s1895
        %v1897 = vmul.f32 %v1865, %v1896
        %v1898 = vadd.f32 %v1894, %v1897
        %s1899 = sld [smem:[#allocation13 + $0x1]]
        %v1900 = vstv %s1899
        %v1901 = vadd.f32 %v1898, %v1900
        %s1902 = sld [smem:[#allocation12 + $0x8]]
        %v1903 = vstv %s1902
        %v1904 = vmul.f32 %v1856, %v1903
        %s1905 = sld [smem:[#allocation12 + $0x9]]
        %v1906 = vstv %s1905
        %v1907 = vmul.f32 %v1859, %v1906
        %v1908 = vadd.f32 %v1904, %v1907
        %s1909 = sld [smem:[#allocation12 + $0xa]]
        %v1910 = vstv %s1909
        %v1911 = vmul.f32 %v1862, %v1910
        %v1912 = vadd.f32 %v1908, %v1911
        %s1913 = sld [smem:[#allocation12 + $0xb]]
        %v1914 = vstv %s1913
        %v1915 = vmul.f32 %v1865, %v1914
        %v1916 = vadd.f32 %v1912, %v1915
        %s1917 = sld [smem:[#allocation13 + $0x2]]
        %v1918 = vstv %s1917
        %v1919 = vadd.f32 %v1916, %v1918
        %s1920 = sld [smem:[#allocation12 + $0xc]]
        %v1921 = vstv %s1920
        %v1922 = vmul.f32 %v1856, %v1921
        %s1923 = sld [smem:[#allocation12 + $0xd]]
        %v1924 = vstv %s1923
        %v1925 = vmul.f32 %v1859, %v1924
        %v1926 = vadd.f32 %v1922, %v1925
        %s1927 = sld [smem:[#allocation12 + $0xe]]
        %v1928 = vstv %s1927
        %v1929 = vmul.f32 %v1862, %v1928
        %v1930 = vadd.f32 %v1926, %v1929
        %s1931 = sld [smem:[#allocation12 + $0xf]]
        %v1932 = vstv %s1931
        %v1933 = vmul.f32 %v1865, %v1932
        %v1934 = vadd.f32 %v1930, %v1933
        %s1935 = sld [smem:[#allocation13 + $0x3]]
        %v1936 = vstv %s1935
        %v1937 = vadd.f32 %v1934, %v1936
        %s1938 = sld [smem:[#allocation15]]
        %v1939 = vstv %s1938
        %v1940 = vmul.f32 %v1276, %v1939
        %s1941 = sld [smem:[#allocation15 + $0x1]]
        %v1942 = vstv %s1941
        %v1943 = vmul.f32 %v1339, %v1942
        %v1944 = vadd.f32 %v1940, %v1943
        %s1945 = sld [smem:[#allocation15 + $0x2]]
        %v1946 = vstv %s1945
        %v1947 = vmul.f32 %v1402, %v1946
        %v1948 = vadd.f32 %v1944, %v1947
        %s1949 = sld [smem:[#allocation15 + $0x3]]
        %v1950 = vstv %s1949
        %v1951 = vmul.f32 %v1465, %v1950
        %v1952 = vadd.f32 %v1948, %v1951
        %s1953 = sld [smem:[#allocation15 + $0x4]]
        %v1954 = vstv %s1953
        %v1955 = vmul.f32 %v1528, %v1954
        %v1956 = vadd.f32 %v1952, %v1955
        %s1957 = sld [smem:[#allocation15 + $0x5]]
        %v1958 = vstv %s1957
        %v1959 = vmul.f32 %v1591, %v1958
        %v1960 = vadd.f32 %v1956, %v1959
        %s1961 = sld [smem:[#allocation15 + $0x6]]
        %v1962 = vstv %s1961
        %v1963 = vmul.f32 %v1654, %v1962
        %v1964 = vadd.f32 %v1960, %v1963
        %s1965 = sld [smem:[#allocation15 + $0x7]]
        %v1966 = vstv %s1965
        %v1967 = vmul.f32 %v1717, %v1966
        %v1968 = vadd.f32 %v1964, %v1967
        %s1969 = sld [smem:[#allocation16]]
        %v1970 = vstv %s1969
        %v1971 = vadd.f32 %v1968, %v1970
        %s1972 = sld [smem:[#allocation15 + $0x8]]
        %v1973 = vstv %s1972
        %v1974 = vmul.f32 %v1276, %v1973
        %s1975 = sld [smem:[#allocation15 + $0x9]]
        %v1976 = vstv %s1975
        %v1977 = vmul.f32 %v1339, %v1976
        %v1978 = vadd.f32 %v1974, %v1977
        %s1979 = sld [smem:[#allocation15 + $0xa]]
        %v1980 = vstv %s1979
        %v1981 = vmul.f32 %v1402, %v1980
        %v1982 = vadd.f32 %v1978, %v1981
        %s1983 = sld [smem:[#allocation15 + $0xb]]
        %v1984 = vstv %s1983
        %v1985 = vmul.f32 %v1465, %v1984
        %v1986 = vadd.f32 %v1982, %v1985
        %s1987 = sld [smem:[#allocation15 + $0xc]]
        %v1988 = vstv %s1987
        %v1989 = vmul.f32 %v1528, %v1988
        %v1990 = vadd.f32 %v1986, %v1989
        %s1991 = sld [smem:[#allocation15 + $0xd]]
        %v1992 = vstv %s1991
        %v1993 = vmul.f32 %v1591, %v1992
        %v1994 = vadd.f32 %v1990, %v1993
        %s1995 = sld [smem:[#allocation15 + $0xe]]
        %v1996 = vstv %s1995
        %v1997 = vmul.f32 %v1654, %v1996
        %v1998 = vadd.f32 %v1994, %v1997
        %s1999 = sld [smem:[#allocation15 + $0xf]]
        %v2000 = vstv %s1999
        %v2001 = vmul.f32 %v1717, %v2000
        %v2002 = vadd.f32 %v1998, %v2001
        %s2003 = sld [smem:[#allocation16 + $0x1]]
        %v2004 = vstv %s2003
        %v2005 = vadd.f32 %v2002, %v2004
        %s2006 = sld [smem:[#allocation15 + $0x10]]
        %v2007 = vstv %s2006
        %v2008 = vmul.f32 %v1276, %v2007
        %s2009 = sld [smem:[#allocation15 + $0x11]]
        %v2010 = vstv %s2009
        %v2011 = vmul.f32 %v1339, %v2010
        %v2012 = vadd.f32 %v2008, %v2011
        %s2013 = sld [smem:[#allocation15 + $0x12]]
        %v2014 = vstv %s2013
        %v2015 = vmul.f32 %v1402, %v2014
        %v2016 = vadd.f32 %v2012, %v2015
        %s2017 = sld [smem:[#allocation15 + $0x13]]
        %v2018 = vstv %s2017
        %v2019 = vmul.f32 %v1465, %v2018
        %v2020 = vadd.f32 %v2016, %v2019
        %s2021 = sld [smem:[#allocation15 + $0x14]]
        %v2022 = vstv %s2021
        %v2023 = vmul.f32 %v1528, %v2022
        %v2024 = vadd.f32 %v2020, %v2023
        %s2025 = sld [smem:[#allocation15 + $0x15]]
        %v2026 = vstv %s2025
        %v2027 = vmul.f32 %v1591, %v2026
        %v2028 = vadd.f32 %v2024, %v2027
        %s2029 = sld [smem:[#allocation15 + $0x16]]
        %v2030 = vstv %s2029
        %v2031 = vmul.f32 %v1654, %v2030
        %v2032 = vadd.f32 %v2028, %v2031
        %s2033 = sld [smem:[#allocation15 + $0x17]]
        %v2034 = vstv %s2033
        %v2035 = vmul.f32 %v1717, %v2034
        %v2036 = vadd.f32 %v2032, %v2035
        %s2037 = sld [smem:[#allocation16 + $0x2]]
        %v2038 = vstv %s2037
        %v2039 = vadd.f32 %v2036, %v2038
        %s2040 = sld [smem:[#allocation15 + $0x18]]
        %v2041 = vstv %s2040
        %v2042 = vmul.f32 %v1276, %v2041
        %s2043 = sld [smem:[#allocation15 + $0x19]]
        %v2044 = vstv %s2043
        %v2045 = vmul.f32 %v1339, %v2044
        %v2046 = vadd.f32 %v2042, %v2045
        %s2047 = sld [smem:[#allocation15 + $0x1a]]
        %v2048 = vstv %s2047
        %v2049 = vmul.f32 %v1402, %v2048
        %v2050 = vadd.f32 %v2046, %v2049
        %s2051 = sld [smem:[#allocation15 + $0x1b]]
        %v2052 = vstv %s2051
        %v2053 = vmul.f32 %v1465, %v2052
        %v2054 = vadd.f32 %v2050, %v2053
        %s2055 = sld [smem:[#allocation15 + $0x1c]]
        %v2056 = vstv %s2055
        %v2057 = vmul.f32 %v1528, %v2056
        %v2058 = vadd.f32 %v2054, %v2057
        %s2059 = sld [smem:[#allocation15 + $0x1d]]
        %v2060 = vstv %s2059
        %v2061 = vmul.f32 %v1591, %v2060
        %v2062 = vadd.f32 %v2058, %v2061
        %s2063 = sld [smem:[#allocation15 + $0x1e]]
        %v2064 = vstv %s2063
        %v2065 = vmul.f32 %v1654, %v2064
        %v2066 = vadd.f32 %v2062, %v2065
        %s2067 = sld [smem:[#allocation15 + $0x1f]]
        %v2068 = vstv %s2067
        %v2069 = vmul.f32 %v1717, %v2068
        %v2070 = vadd.f32 %v2066, %v2069
        %s2071 = sld [smem:[#allocation16 + $0x3]]
        %v2072 = vstv %s2071
        %v2073 = vadd.f32 %v2070, %v2072
        %vm2074 = vcmp.ge.f32.partialorder %v1971, 0.0
        %v2075 = vmul.f32 %v1971, 0.1
        %v2076 = vsel %vm2074, %v1971, %v2075
        %vm2077 = vcmp.ge.f32.partialorder %v2005, 0.0
        %v2078 = vmul.f32 %v2005, 0.1
        %v2079 = vsel %vm2077, %v2005, %v2078
        %vm2080 = vcmp.ge.f32.partialorder %v2039, 0.0
        %v2081 = vmul.f32 %v2039, 0.1
        %v2082 = vsel %vm2080, %v2039, %v2081
        %vm2083 = vcmp.ge.f32.partialorder %v2073, 0.0
        %v2084 = vmul.f32 %v2073, 0.1
        %v2085 = vsel %vm2083, %v2073, %v2084
        %s2086 = sld [smem:[#allocation18]]
        %v2087 = vstv %s2086
        %v2088 = vmul.f32 %v2076, %v2087
        %s2089 = sld [smem:[#allocation18 + $0x1]]
        %v2090 = vstv %s2089
        %v2091 = vmul.f32 %v2079, %v2090
        %v2092 = vadd.f32 %v2088, %v2091
        %s2093 = sld [smem:[#allocation18 + $0x2]]
        %v2094 = vstv %s2093
        %v2095 = vmul.f32 %v2082, %v2094
        %v2096 = vadd.f32 %v2092, %v2095
        %s2097 = sld [smem:[#allocation18 + $0x3]]
        %v2098 = vstv %s2097
        %v2099 = vmul.f32 %v2085, %v2098
        %v2100 = vadd.f32 %v2096, %v2099
        %s2101 = sld [smem:[#allocation19]]
        %v2102 = vstv %s2101
        %v2103 = vadd.f32 %v2100, %v2102
        %s2104 = sld [smem:[#allocation18 + $0x4]]
        %v2105 = vstv %s2104
        %v2106 = vmul.f32 %v2076, %v2105
        %s2107 = sld [smem:[#allocation18 + $0x5]]
        %v2108 = vstv %s2107
        %v2109 = vmul.f32 %v2079, %v2108
        %v2110 = vadd.f32 %v2106, %v2109
        %s2111 = sld [smem:[#allocation18 + $0x6]]
        %v2112 = vstv %s2111
        %v2113 = vmul.f32 %v2082, %v2112
        %v2114 = vadd.f32 %v2110, %v2113
        %s2115 = sld [smem:[#allocation18 + $0x7]]
        %v2116 = vstv %s2115
        %v2117 = vmul.f32 %v2085, %v2116
        %v2118 = vadd.f32 %v2114, %v2117
        %s2119 = sld [smem:[#allocation19 + $0x1]]
        %v2120 = vstv %s2119
        %v2121 = vadd.f32 %v2118, %v2120
        %s2122 = sld [smem:[#allocation18 + $0x8]]
        %v2123 = vstv %s2122
        %v2124 = vmul.f32 %v2076, %v2123
        %s2125 = sld [smem:[#allocation18 + $0x9]]
        %v2126 = vstv %s2125
        %v2127 = vmul.f32 %v2079, %v2126
        %v2128 = vadd.f32 %v2124, %v2127
        %s2129 = sld [smem:[#allocation18 + $0xa]]
        %v2130 = vstv %s2129
        %v2131 = vmul.f32 %v2082, %v2130
        %v2132 = vadd.f32 %v2128, %v2131
        %s2133 = sld [smem:[#allocation18 + $0xb]]
        %v2134 = vstv %s2133
        %v2135 = vmul.f32 %v2085, %v2134
        %v2136 = vadd.f32 %v2132, %v2135
        %s2137 = sld [smem:[#allocation19 + $0x2]]
        %v2138 = vstv %s2137
        %v2139 = vadd.f32 %v2136, %v2138
        %s2140 = sld [smem:[#allocation18 + $0xc]]
        %v2141 = vstv %s2140
        %v2142 = vmul.f32 %v2076, %v2141
        %s2143 = sld [smem:[#allocation18 + $0xd]]
        %v2144 = vstv %s2143
        %v2145 = vmul.f32 %v2079, %v2144
        %v2146 = vadd.f32 %v2142, %v2145
        %s2147 = sld [smem:[#allocation18 + $0xe]]
        %v2148 = vstv %s2147
        %v2149 = vmul.f32 %v2082, %v2148
        %v2150 = vadd.f32 %v2146, %v2149
        %s2151 = sld [smem:[#allocation18 + $0xf]]
        %v2152 = vstv %s2151
        %v2153 = vmul.f32 %v2085, %v2152
        %v2154 = vadd.f32 %v2150, %v2153
        %s2155 = sld [smem:[#allocation19 + $0x3]]
        %v2156 = vstv %s2155
        %v2157 = vadd.f32 %v2154, %v2156
        %v2158 = vmul.f32 %v2103, 0.63661975
        %vm2159 = vcmp.ge.f32.partialorder %v2158, 0.0
        %v2160 = vadd.f32 %v2158, 0.5
        %v2161 = vsub.f32 %v2158, 0.5
        %v2162 = vsel %vm2159, %v2160, %v2161
        %v2163 = vcvt.f32.s32.to.zero.pseudo %v2162
        %v2164 = vcvt.s32.f32 %v2163
        %v2165 = vmul.f32 %v2164, 1.570796
        %v2166 = vsub.f32 %v2103, %v2165
        %v2167 = vmul.f32 %v2164, 3.1391647e-07
        %v2168 = vsub.f32 %v2166, %v2167
        %v2169 = vmul.f32 %v2164, 5.3903025e-15
        %v2170 = vsub.f32 %v2168, %v2169
        %v2171 = vmul.f32 %v2170, %v2170
        %v2172 = vmul.f32 %v2171, -0.00019515296
        %v2173 = vadd.f32 %v2172, 0.008332161
        %v2174 = vmul.f32 %v2173, %v2171
        %v2175 = vsub.f32 %v2174, 0.16666655
        %v2176 = vmul.f32 %v2175, %v2171
        %v2177 = vmul.f32 %v2176, %v2170
        %v2178 = vadd.f32 %v2177, %v2170
        %v2179 = vmul.f32 %v2171, 2.4433157e-05
        %v2180 = vsub.f32 %v2179, 0.0013887316
        %v2181 = vmul.f32 %v2180, %v2171
        %v2182 = vadd.f32 %v2181, 0.041666646
        %v2183 = vmul.f32 %v2182, %v2171
        %v2184 = vmul.f32 %v2183, %v2171
        %v2185 = vmul.f32 %v2171, 0.5
        %v2186 = vsub.f32 %v2184, %v2185
        %v2187 = vadd.f32 %v2186, 1.0
        %v2188 = vand.u32 %v2163, 1
        %vm2189 = vcmp.eq.s32.totalorder %v2188, 1
        %v2190 = vsel %vm2189, %v2187, %v2178
        %v2191 = vsel %vm2189, %v2178, %v2187
        %v2192 = vand.u32 %v2163, 2
        %vm2193 = vcmp.eq.s32.totalorder %v2192, 2
        %v2194 = vsub.f32 0.0, %v2190
        %v2195 = vsel %vm2193, %v2194, %v2190
        %v2196 = vadd.s32 %v2163, 1
        %v2197 = vand.u32 %v2196, 2
        %vm2198 = vcmp.eq.s32.totalorder %v2197, 2
        %v2199 = vsub.f32 0.0, %v2191
        %v2200 = vsel %vm2198, %v2199, %v2191
        %v2201 = vmul.f32 %v1883, %v2200
        %v2202 = vadd.f32 %v2201, 2e-08
        %2203 = vst [vmem:[%s837] sm:$0xff] %v2202
        %v2204 = vmul.f32 %v1883, %v2195
        %v2205 = vadd.f32 %v2204, 1e-08
        %2206 = vst [vmem:[%s845] sm:$0xff] %v2205
        %v2207 = vmul.f32 %v2121, 0.63661975
        %vm2208 = vcmp.ge.f32.partialorder %v2207, 0.0
        %v2209 = vadd.f32 %v2207, 0.5
        %v2210 = vsub.f32 %v2207, 0.5
        %v2211 = vsel %vm2208, %v2209, %v2210
        %v2212 = vcvt.f32.s32.to.zero.pseudo %v2211
        %v2213 = vcvt.s32.f32 %v2212
        %v2214 = vmul.f32 %v2213, 1.570796
        %v2215 = vsub.f32 %v2121, %v2214
        %v2216 = vmul.f32 %v2213, 3.1391647e-07
        %v2217 = vsub.f32 %v2215, %v2216
        %v2218 = vmul.f32 %v2213, 5.3903025e-15
        %v2219 = vsub.f32 %v2217, %v2218
        %v2220 = vmul.f32 %v2219, %v2219
        %v2221 = vmul.f32 %v2220, -0.00019515296
        %v2222 = vadd.f32 %v2221, 0.008332161
        %v2223 = vmul.f32 %v2222, %v2220
        %v2224 = vsub.f32 %v2223, 0.16666655
        %v2225 = vmul.f32 %v2224, %v2220
        %v2226 = vmul.f32 %v2225, %v2219
        %v2227 = vadd.f32 %v2226, %v2219
        %v2228 = vmul.f32 %v2220, 2.4433157e-05
        %v2229 = vsub.f32 %v2228, 0.0013887316
        %v2230 = vmul.f32 %v2229, %v2220
        %v2231 = vadd.f32 %v2230, 0.041666646
        %v2232 = vmul.f32 %v2231, %v2220
        %v2233 = vmul.f32 %v2232, %v2220
        %v2234 = vmul.f32 %v2220, 0.5
        %v2235 = vsub.f32 %v2233, %v2234
        %v2236 = vadd.f32 %v2235, 1.0
        %v2237 = vand.u32 %v2212, 1
        %vm2238 = vcmp.eq.s32.totalorder %v2237, 1
        %v2239 = vsel %vm2238, %v2236, %v2227
        %v2240 = vsel %vm2238, %v2227, %v2236
        %v2241 = vand.u32 %v2212, 2
        %vm2242 = vcmp.eq.s32.totalorder %v2241, 2
        %v2243 = vsub.f32 0.0, %v2239
        %v2244 = vsel %vm2242, %v2243, %v2239
        %v2245 = vadd.s32 %v2212, 1
        %v2246 = vand.u32 %v2245, 2
        %vm2247 = vcmp.eq.s32.totalorder %v2246, 2
        %v2248 = vsub.f32 0.0, %v2240
        %v2249 = vsel %vm2247, %v2248, %v2240
        %v2250 = vmul.f32 %v1901, %v2249
        %v2251 = vadd.f32 %v2250, 2e-08
        %s2252 = scalar_lea.vmem %s837, 8
        %2253 = vst [vmem:[%s2252] sm:$0xff] %v2251
        %v2254 = vmul.f32 %v1901, %v2244
        %v2255 = vadd.f32 %v2254, 1e-08
        %s2256 = scalar_lea.vmem %s845, 8
        %2257 = vst [vmem:[%s2256] sm:$0xff] %v2255
        %v2258 = vmul.f32 %v2139, 0.63661975
        %vm2259 = vcmp.ge.f32.partialorder %v2258, 0.0
        %v2260 = vadd.f32 %v2258, 0.5
        %v2261 = vsub.f32 %v2258, 0.5
        %v2262 = vsel %vm2259, %v2260, %v2261
        %v2263 = vcvt.f32.s32.to.zero.pseudo %v2262
        %v2264 = vcvt.s32.f32 %v2263
        %v2265 = vmul.f32 %v2264, 1.570796
        %v2266 = vsub.f32 %v2139, %v2265
        %v2267 = vmul.f32 %v2264, 3.1391647e-07
        %v2268 = vsub.f32 %v2266, %v2267
        %v2269 = vmul.f32 %v2264, 5.3903025e-15
        %v2270 = vsub.f32 %v2268, %v2269
        %v2271 = vmul.f32 %v2270, %v2270
        %v2272 = vmul.f32 %v2271, -0.00019515296
        %v2273 = vadd.f32 %v2272, 0.008332161
        %v2274 = vmul.f32 %v2273, %v2271
        %v2275 = vsub.f32 %v2274, 0.16666655
        %v2276 = vmul.f32 %v2275, %v2271
        %v2277 = vmul.f32 %v2276, %v2270
        %v2278 = vadd.f32 %v2277, %v2270
        %v2279 = vmul.f32 %v2271, 2.4433157e-05
        %v2280 = vsub.f32 %v2279, 0.0013887316
        %v2281 = vmul.f32 %v2280, %v2271
        %v2282 = vadd.f32 %v2281, 0.041666646
        %v2283 = vmul.f32 %v2282, %v2271
        %v2284 = vmul.f32 %v2283, %v2271
        %v2285 = vmul.f32 %v2271, 0.5
        %v2286 = vsub.f32 %v2284, %v2285
        %v2287 = vadd.f32 %v2286, 1.0
        %v2288 = vand.u32 %v2263, 1
        %vm2289 = vcmp.eq.s32.totalorder %v2288, 1
        %v2290 = vsel %vm2289, %v2287, %v2278
        %v2291 = vsel %vm2289, %v2278, %v2287
        %v2292 = vand.u32 %v2263, 2
        %vm2293 = vcmp.eq.s32.totalorder %v2292, 2
        %v2294 = vsub.f32 0.0, %v2290
        %v2295 = vsel %vm2293, %v2294, %v2290
        %v2296 = vadd.s32 %v2263, 1
        %v2297 = vand.u32 %v2296, 2
        %vm2298 = vcmp.eq.s32.totalorder %v2297, 2
        %v2299 = vsub.f32 0.0, %v2291
        %v2300 = vsel %vm2298, %v2299, %v2291
        %v2301 = vmul.f32 %v1919, %v2300
        %v2302 = vadd.f32 %v2301, 2e-08
        %s2303 = scalar_lea.vmem %s837, 16
        %2304 = vst [vmem:[%s2303] sm:$0xff] %v2302
        %v2305 = vmul.f32 %v1919, %v2295
        %v2306 = vadd.f32 %v2305, 1e-08
        %s2307 = scalar_lea.vmem %s845, 16
        %2308 = vst [vmem:[%s2307] sm:$0xff] %v2306
        %v2309 = vmul.f32 %v2157, 0.63661975
        %vm2310 = vcmp.ge.f32.partialorder %v2309, 0.0
        %v2311 = vadd.f32 %v2309, 0.5
        %v2312 = vsub.f32 %v2309, 0.5
        %v2313 = vsel %vm2310, %v2311, %v2312
        %v2314 = vcvt.f32.s32.to.zero.pseudo %v2313
        %v2315 = vcvt.s32.f32 %v2314
        %v2316 = vmul.f32 %v2315, 1.570796
        %v2317 = vsub.f32 %v2157, %v2316
        %v2318 = vmul.f32 %v2315, 3.1391647e-07
        %v2319 = vsub.f32 %v2317, %v2318
        %v2320 = vmul.f32 %v2315, 5.3903025e-15
        %v2321 = vsub.f32 %v2319, %v2320
        %v2322 = vmul.f32 %v2321, %v2321
        %v2323 = vmul.f32 %v2322, -0.00019515296
        %v2324 = vadd.f32 %v2323, 0.008332161
        %v2325 = vmul.f32 %v2324, %v2322
        %v2326 = vsub.f32 %v2325, 0.16666655
        %v2327 = vmul.f32 %v2326, %v2322
        %v2328 = vmul.f32 %v2327, %v2321
        %v2329 = vadd.f32 %v2328, %v2321
        %v2330 = vmul.f32 %v2322, 2.4433157e-05
        %v2331 = vsub.f32 %v2330, 0.0013887316
        %v2332 = vmul.f32 %v2331, %v2322
        %v2333 = vadd.f32 %v2332, 0.041666646
        %v2334 = vmul.f32 %v2333, %v2322
        %v2335 = vmul.f32 %v2334, %v2322
        %v2336 = vmul.f32 %v2322, 0.5
        %v2337 = vsub.f32 %v2335, %v2336
        %v2338 = vadd.f32 %v2337, 1.0
        %v2339 = vand.u32 %v2314, 1
        %vm2340 = vcmp.eq.s32.totalorder %v2339, 1
        %v2341 = vsel %vm2340, %v2338, %v2329
        %v2342 = vsel %vm2340, %v2329, %v2338
        %v2343 = vand.u32 %v2314, 2
        %vm2344 = vcmp.eq.s32.totalorder %v2343, 2
        %v2345 = vsub.f32 0.0, %v2341
        %v2346 = vsel %vm2344, %v2345, %v2341
        %v2347 = vadd.s32 %v2314, 1
        %v2348 = vand.u32 %v2347, 2
        %vm2349 = vcmp.eq.s32.totalorder %v2348, 2
        %v2350 = vsub.f32 0.0, %v2342
        %v2351 = vsel %vm2349, %v2350, %v2342
        %v2352 = vmul.f32 %v1937, %v2351
        %v2353 = vadd.f32 %v2352, 2e-08
        %s2354 = scalar_lea.vmem %s837, 24
        %2355 = vst [vmem:[%s2354] sm:$0xff] %v2353
        %v2356 = vmul.f32 %v1937, %v2346
        %v2357 = vadd.f32 %v2356, 1e-08
        %s2358 = scalar_lea.vmem %s845, 24
        %2359 = vst [vmem:[%s2358] sm:$0xff] %v2357
        %p2360 = scmp.lt.s32.totalorder %s40, 1
        %s2361 = scalar_select %p2360, %s40, 1
        %p2362 = scmp.lt.s32.totalorder %s41, 0
        %s2363 = scalar_select %p2362, %s41, 0
        %s2364 = smul.addr %s2361, 4
        %s2365 = sadd.s32 %s2363, %s2364
        %s2366 = smul.addr %s2365, 8
        %s2367 = scalar_lea.vmem %s16, %s2366
        %p2368 = scmp.lt.s32.totalorder %s40, 1
        %s2369 = scalar_select %p2368, %s40, 1
        %p2370 = scmp.lt.s32.totalorder %s41, 0
        %s2371 = scalar_select %p2370, %s41, 0
        %s2372 = smul.addr %s2369, 4
        %s2373 = sadd.s32 %s2371, %s2372
        %s2374 = smul.addr %s2373, 8
        %s2375 = scalar_lea.vmem %s17, %s2374
        // Predicated region
        $region133: #{fdb_forward.2} parent=83 // pred_check
          %p2376 = pneg %p432
        $region134: #{fdb_forward.2} parent=83 // pred_check_branch
          %2378 = sbr.rel (%p2376) target = $region136
        $region135: #{fdb_forward.2} parent=83 // pred_region
          _
        $region136: #{fdb_forward.2} parent=83 // pred_fallthru
          _
        // Predicated region
        $region137: #{fdb_forward.2} parent=83 // pred_check
          %p2379 = pneg %p460
        $region138: #{fdb_forward.2} parent=83 // pred_check_branch
          %2381 = sbr.rel (%p2379) target = $region140
        $region139: #{fdb_forward.2} parent=83 // pred_region
          _
        $region140: #{fdb_forward.2} parent=83 // pred_fallthru
          _
      $region84: #{fdb_forward.2} parent=5 // pred_fallthru
        _
      %p2382 = scmp.le.s32.totalorder 2, %s31
      // Predicated region
      $region141: #{fdb_forward.2} parent=5 // pred_check
        %p2383 = pneg %p2382
      $region142: #{fdb_forward.2} parent=5 // pred_check_branch
        %2385 = sbr.rel (%p2383) target = $region144
      $region143: #{fdb_forward.2} parent=5 // pred_region
        %s2386 = ssub.s32 %s31, 2
        // Predicated region
        $region145: #{fdb_forward.2} parent=143 // pred_check
          %p2387 = pneg %p438
        $region146: #{fdb_forward.2} parent=143 // pred_check_branch
          %2389 = sbr.rel (%p2387) target = $region148
        $region147: #{fdb_forward.2} parent=143 // pred_region
          %p2390 = scmp.lt.s32.totalorder %s42, 1
          %s2391 = scalar_select %p2390, %s42, 1
          %p2392 = scmp.lt.s32.totalorder %s43, 0
          %s2393 = scalar_select %p2392, %s43, 0
          %s2394 = smul.addr %s2391, 4
          %s2395 = sadd.s32 %s2393, %s2394
          %s2396 = smul.addr %s2395, 8
          %s2397 = scalar_lea.vmem %s16, %s2396
        $region148: #{fdb_forward.2} parent=143 // pred_fallthru
          _
        // Predicated region
        $region149: #{fdb_forward.2} parent=143 // pred_check
          %p2398 = pneg %p466
        $region150: #{fdb_forward.2} parent=143 // pred_check_branch
          %2400 = sbr.rel (%p2398) target = $region152
        $region151: #{fdb_forward.2} parent=143 // pred_region
          %p2401 = scmp.lt.s32.totalorder %s42, 1
          %s2402 = scalar_select %p2401, %s42, 1
          %p2403 = scmp.lt.s32.totalorder %s43, 0
          %s2404 = scalar_select %p2403, %s43, 0
          %s2405 = smul.addr %s2402, 4
          %s2406 = sadd.s32 %s2404, %s2405
          %s2407 = smul.addr %s2406, 8
          %s2408 = scalar_lea.vmem %s17, %s2407
        $region152: #{fdb_forward.2} parent=143 // pred_fallthru
          _
      $region144: #{fdb_forward.2} parent=5 // pred_fallthru
        _
    $region6: #{fdb_forward.2} parent=1 // loop_footer
      %s35 = sadd.s32 1, %s31
    $region7: #{fdb_forward.2} parent=1 // loop_footer_branch
      %30 = sbr.rel target = $region3
    $region8: #{fdb_forward.2} parent=1 // loop_exit
      _
    %2409 = vsyncpa [#allocation3], 1
    %s2410 = scalar_lea.sflag [#allocation3], 1
    %2411 = vsyncpa %s2410, 1
    %2412 = vsyncpa [#allocation5], 1
    %2413 = vsyncpa [#allocation8], 1
    %2414 = vsyncpa [#allocation11], 1
    %2415 = vsyncpa [#allocation14], 1
    %2416 = vsyncpa [#allocation17], 1
    %2417 = vsyncpa [#allocation20], 1

</llo_original>
